<compile_context>
chip_gen: v6e
topology: v6e:2x2x1
jax: 0.10.0
libtpu: 0.0.40
codegen_flags: <defaults>
</compile_context>

<pallas_src>
import functools

import numpy as np

import jax
import jax.numpy as jnp
from jax import lax
from jax.experimental import pallas as pl
from jax.experimental.pallas import tpu as pltpu


# ---------------------------------------------------------------------------
# Hardware-aware defaults (safe fallbacks if the query is unavailable)
# ---------------------------------------------------------------------------
@functools.lru_cache(maxsize=None)
def _vmem_capacity_bytes():
    try:
        return int(pltpu.get_tpu_info().vmem_capacity_bytes)
    except Exception:
        return 64 << 20            # assume the smallest (v7x) per-core VMEM


def _default_tm_max():
    # v5e/v6e (128 MiB VMEM): 1024-row tiles; v7x (64 MiB): 512-row tiles.
    return 1024 if _vmem_capacity_bytes() >= (100 << 20) else 512


def _vmem_limit(est_bytes):
    cap = min(56 << 20, (_vmem_capacity_bytes() * 3) // 4)   # 48 MiB on v7x
    return int(max(32 << 20, min(int(est_bytes), cap)))


def _choose_tm(m, tm_max):
    """Row tile: a divisor of m, multiple of 16 (8 as fallback), preferring an
    even number of grid steps (v7x has 2 TensorCores)."""
    tm_max = max(16, (tm_max // 16) * 16)
    if m <= tm_max:
        if m >= 32 and (m % 2 == 0) and ((m // 2) % 8 == 0):
            return m // 2                       # 2 grid steps
        return m
    for mult in (16, 8):
        divs = [d for d in range(tm_max - tm_max % mult, mult - 1, -mult)
                if m % d == 0]
        if not divs:
            continue
        even = [d for d in divs if (m // d) % 2 == 0]
        return even[0] if even else divs[0]
    # No aligned divisor <= tm_max: tile at tm_max and let Pallas mask the
    # ragged tail block (no jnp.pad / slice round trips through HBM).
    return tm_max


# ---------------------------------------------------------------------------
# Fused 1x1-conv kernels: bf16 MXU matmul (f32 acc) + folded-BN bias
# (+ residual add) (+ ReLU).  Inputs are read at their native dtype and cast
# to bf16 inside the kernel (no wrapper-side cast pass through HBM).
# ---------------------------------------------------------------------------
def _mm_bias_kernel(x_ref, w_ref, b_ref, o_ref, *, relu):
    x = x_ref[...]
    if x.dtype != jnp.bfloat16:
        x = x.astype(jnp.bfloat16)
    y = jnp.dot(x, w_ref[...], preferred_element_type=jnp.float32) + b_ref[...]
    if relu:
        y = jnp.maximum(y, 0.0)
    o_ref[...] = y.astype(o_ref.dtype)


def _mm_bias_add_kernel(x_ref, w_ref, b_ref, add_ref, o_ref, *, relu):
    x = x_ref[...]
    if x.dtype != jnp.bfloat16:
        x = x.astype(jnp.bfloat16)
    y = jnp.dot(x, w_ref[...], preferred_element_type=jnp.float32)
    y = y + b_ref[...] + add_ref[...].astype(jnp.float32)    # f32 epilogue
    if relu:
        y = jnp.maximum(y, 0.0)
    o_ref[...] = y.astype(o_ref.dtype)


def fused_matmul(x2d, w, b, add=None, relu=True, out_dtype=jnp.bfloat16):
    """y = act(x @ w + b [+ add]); MXU in bf16, f32 accumulation/epilogue.

    x2d: (M, K) activations (any float dtype), w: (K, Cout) bf16 with BN scale
    pre-folded, b: (1, Cout) f32, add: optional (M, Cout) residual.
    """
    m, k = x2d.shape
    cout = w.shape[1]
    tm = _choose_tm(m, _default_tm_max())
    grid = (pl.cdiv(m, tm),)

    in_specs = [
        pl.BlockSpec((tm, k), lambda i: (i, 0)),
        pl.BlockSpec((k, cout), lambda i: (0, 0)),
        pl.BlockSpec((1, cout), lambda i: (0, 0)),
    ]
    args = [x2d, w, b]
    add_bytes = 0
    if add is not None:
        in_specs.append(pl.BlockSpec((tm, cout), lambda i: (i, 0)))
        args.append(add)
        add_bytes = add.dtype.itemsize
        kernel = functools.partial(_mm_bias_add_kernel, relu=relu)
    else:
        kernel = functools.partial(_mm_bias_kernel, relu=relu)

    xb = x2d.dtype.itemsize
    ob = np.dtype(out_dtype).itemsize
    est = (2 * tm * k * xb + 2 * k * cout * 2 + 2 * cout * 4
           + 2 * tm * cout * ob + 2 * tm * cout * add_bytes
           + 3 * tm * cout * 4)                      # f32 epilogue temps
    est = int(est * 1.25) + (2 << 20)
    cost = pl.CostEstimate(
        flops=2 * m * k * cout,
        transcendentals=0,
        bytes_accessed=(m * k * xb + k * cout * 2 + cout * 4
                        + m * cout * ob + m * cout * add_bytes))

    return pl.pallas_call(
        kernel,
        out_shape=jax.ShapeDtypeStruct((m, cout), out_dtype),
        grid=grid,
        in_specs=in_specs,
        out_specs=pl.BlockSpec((tm, cout), lambda i: (i, 0)),
        compiler_params=pltpu.CompilerParams(
            dimension_semantics=("parallel",),
            vmem_limit_bytes=_vmem_limit(est)),
        cost_estimate=cost,
    )(*args)


# ---------------------------------------------------------------------------
# conv2: 3x3 / pad=1 / stride conv + BN + ReLU, one image per grid step.
# The zero-padded halo block is built in a VMEM scratch (no HBM im2col and no
# HBM pad pass); the nine taps are in-kernel slices contracted on the MXU.
# ---------------------------------------------------------------------------
def _conv3x3_kernel(x_ref, w_ref, b_ref, o_ref, xp_ref, *, stride, ho, wo):
    h, w, cin = x_ref.shape
    cmid = o_ref.shape[-1]
    # Build the zero-padded halo block in VMEM.
    xp_ref[...] = jnp.zeros(xp_ref.shape, xp_ref.dtype)
    xp_ref[pl.ds(1, h), pl.ds(1, w), :] = x_ref[...].astype(xp_ref.dtype)

    acc = jnp.zeros((ho * wo, cmid), jnp.float32)
    for kh in range(3):
        for kw in range(3):
            if stride == 1:
                tap = xp_ref[pl.ds(kh, ho), pl.ds(kw, wo), :]
            else:
                tap = xp_ref[pl.ds(kh, ho, stride=stride),
                             pl.ds(kw, wo, stride=stride), :]
            tap = tap.reshape(ho * wo, cin).astype(jnp.bfloat16)
            acc = acc + jnp.dot(tap, w_ref[kh * 3 + kw],
                                preferred_element_type=jnp.float32)
    y = jnp.maximum(acc + b_ref[...], 0.0)
    o_ref[...] = y.reshape(ho, wo, cmid).astype(o_ref.dtype)


def conv3x3_bn_relu(y1, w2, b2, stride):
    """y1: (N, H, W, Cin) bf16 -> (N, Ho, Wo, Cmid) bf16."""
    n, h, w, cin = y1.shape
    cmid = w2.shape[-1]
    ho = (h + 2 - 3) // stride + 1
    wo = (w + 2 - 3) // stride + 1

    est = (2 * h * w * cin * 2                     # input blocks (bf16)
           + (h + 2) * (w + 2) * cin * 4           # halo scratch (f32)
           + 2 * 9 * cin * cmid * 2                # weights
           + 2 * ho * wo * cmid * 2                # output blocks
           + 4 * ho * wo * cmid * 4)               # f32 accumulator + temps
    est = int(est * 1.25) + (2 << 20)
    cost = pl.CostEstimate(
        flops=2 * n * ho * wo * 9 * cin * cmid,
        transcendentals=0,
        bytes_accessed=(n * h * w * cin * 2 + 9 * cin * cmid * 2 + cmid * 4
                        + n * ho * wo * cmid * 2))

    out = pl.pallas_call(
        functools.partial(_conv3x3_kernel, stride=stride, ho=ho, wo=wo),
        out_shape=jax.ShapeDtypeStruct((n, ho, wo, cmid), jnp.bfloat16),
        grid=(n,),
        in_specs=[
            pl.BlockSpec((None, h, w, cin), lambda i: (i, 0, 0, 0)),
            pl.BlockSpec((9, cin, cmid), lambda i: (0, 0, 0)),
            pl.BlockSpec((1, cmid), lambda i: (0, 0)),
        ],
        out_specs=pl.BlockSpec((None, ho, wo, cmid), lambda i: (i, 0, 0, 0)),
        scratch_shapes=[pltpu.VMEM((h + 2, w + 2, cin), jnp.float32)],
        compiler_params=pltpu.CompilerParams(
            dimension_semantics=("parallel",),
            vmem_limit_bytes=_vmem_limit(est)),
        cost_estimate=cost,
    )(y1, w2, b2)
    return out, ho, wo


# ---------------------------------------------------------------------------
# Strided projection shortcut (1x1 conv, stride>1): spatial subsample done
# in-kernel with strided pl.ds reads (no XLA gather pass over x).
# ---------------------------------------------------------------------------
def _proj_shortcut_kernel(x_ref, w_ref, b_ref, o_ref, *, stride, ho, wo):
    cin = x_ref.shape[-1]
    cout = o_ref.shape[-1]
    xs = x_ref[pl.ds(0, ho, stride=stride), pl.ds(0, wo, stride=stride), :]
    xs = xs.reshape(ho * wo, cin).astype(jnp.bfloat16)
    y = jnp.dot(xs, w_ref[...], preferred_element_type=jnp.float32) + b_ref[...]
    o_ref[...] = y.reshape(ho, wo, cout).astype(o_ref.dtype)


def proj_shortcut_strided(x, ws, bs, stride, ho, wo):
    n, h, w, cin = x.shape
    cout = ws.shape[-1]
    est = (2 * h * w * cin * 4 + 2 * cin * cout * 2
           + 2 * ho * wo * cout * 2 + 3 * ho * wo * cout * 4)
    est = int(est * 1.25) + (2 << 20)
    cost = pl.CostEstimate(
        flops=2 * n * ho * wo * cin * cout,
        transcendentals=0,
        bytes_accessed=(n * h * w * cin * 4 + cin * cout * 2
                        + n * ho * wo * cout * 2))
    return pl.pallas_call(
        functools.partial(_proj_shortcut_kernel, stride=stride, ho=ho, wo=wo),
        out_shape=jax.ShapeDtypeStruct((n, ho, wo, cout), jnp.bfloat16),
        grid=(n,),
        in_specs=[
            pl.BlockSpec((None, h, w, cin), lambda i: (i, 0, 0, 0)),
            pl.BlockSpec((cin, cout), lambda i: (0, 0)),
            pl.BlockSpec((1, cout), lambda i: (0, 0)),
        ],
        out_specs=pl.BlockSpec((None, ho, wo, cout), lambda i: (i, 0, 0, 0)),
        compiler_params=pltpu.CompilerParams(
            dimension_semantics=("parallel",),
            vmem_limit_bytes=_vmem_limit(est)),
        cost_estimate=cost,
    )(x, ws, bs)


# ---------------------------------------------------------------------------
# Parameters: raw init + one-time BN folding + channel lane-padding (to 128)
# ---------------------------------------------------------------------------
def fold_bn(gamma, beta, mean, var, eps=1e-5):
    scale = gamma / jnp.sqrt(var + eps)
    bias = beta - mean * scale
    return scale, bias


def init_params(key, in_channels, out_channels):
    cmid = out_channels
    cout = out_channels * 4
    ks = jax.random.split(key, 8)
    p = {}
    p["w1"] = jax.random.normal(ks[0], (in_channels, cmid), jnp.float32) * 0.1
    p["w2"] = jax.random.normal(ks[1], (3, 3, cmid, cmid), jnp.float32) * 0.1
    p["w3"] = jax.random.normal(ks[2], (cmid, cout), jnp.float32) * 0.1
    p["ws"] = jax.random.normal(ks[3], (in_channels, cout), jnp.float32) * 0.1

    def bn(k, c):
        k1, k2, k3, k4 = jax.random.split(k, 4)
        gamma = jax.random.uniform(k1, (c,), jnp.float32, 0.5, 1.5)
        beta = jax.random.normal(k2, (c,), jnp.float32) * 0.1
        mean = jax.random.normal(k3, (c,), jnp.float32) * 0.1
        var = jax.random.uniform(k4, (c,), jnp.float32, 0.5, 1.5)
        return fold_bn(gamma, beta, mean, var)

    p["s1"], p["b1"] = bn(ks[4], cmid)
    p["s2"], p["b2"] = bn(ks[5], cmid)
    p["s3"], p["b3"] = bn(ks[6], cout)
    p["ss"], p["bs"] = bn(ks[7], cout)
    return p


def _lane_pad(c):
    return ((c + 127) // 128) * 128


def _pad_axis(a, axis, target):
    if a.shape[axis] == target:
        return a
    widths = [(0, 0)] * a.ndim
    widths[axis] = (0, target - a.shape[axis])
    return jnp.pad(a, widths)


def prepare_block_params(p, in_channels, out_channels):
    """Fold BN scale into weight columns and lane-pad channels (done once)."""
    cmid, cout = out_channels, out_channels * 4
    cin_p, cmid_p, cout_p = _lane_pad(in_channels), _lane_pad(cmid), _lane_pad(cout)

    def fold_1x1(wgt, scale, kp, npad):
        wgt = _pad_axis(_pad_axis(wgt * scale[None, :], 0, kp), 1, npad)
        return wgt.astype(jnp.bfloat16)

    def fold_bias(b, npad):
        return _pad_axis(b, 0, npad).reshape(1, npad).astype(jnp.float32)

    w2 = p["w2"] * p["s2"]                              # (3, 3, cmid, cmid)
    w2 = _pad_axis(_pad_axis(w2, 2, cmid_p), 3, cmid_p)
    return {
        "w1f": fold_1x1(p["w1"], p["s1"], cin_p, cmid_p),
        "b1": fold_bias(p["b1"], cmid_p),
        "w2f": w2.reshape(9, cmid_p, cmid_p).astype(jnp.bfloat16),
        "b2": fold_bias(p["b2"], cmid_p),
        "w3f": fold_1x1(p["w3"], p["s3"], cmid_p, cout_p),
        "b3": fold_bias(p["b3"], cout_p),
        "wsf": fold_1x1(p["ws"], p["ss"], cin_p, cout_p),
        "bs": fold_bias(p["bs"], cout_p),
    }


# ---------------------------------------------------------------------------
# Residual block
# ---------------------------------------------------------------------------
def residual_block_nhwc(x, fp, in_channels, out_channels, stride=1):
    """NHWC f32 in, NHWC f32 out. Intermediates bf16, channels lane-padded."""
    n, h, w, c = x.shape
    assert c == in_channels
    cmid, cout = out_channels, out_channels * 4
    cin_p, cmid_p = fp["w1f"].shape
    cout_p = fp["w3f"].shape[1]

    # Pad input channels to lane width once per block (no-op when already 128k).
    x = _pad_axis(x, 3, cin_p)
    m = n * h * w

    # conv1 (1x1) + bn1 + relu — f32 input is cast to bf16 inside the kernel.
    y1 = fused_matmul(x.reshape(m, cin_p), fp["w1f"], fp["b1"], relu=True,
                      out_dtype=jnp.bfloat16)

    # conv2 (3x3, stride, pad=1) + bn2 + relu — halo'd per-image kernel.
    y2, ho, wo = conv3x3_bn_relu(y1.reshape(n, h, w, cmid_p), fp["w2f"],
                                 fp["b2"], stride)
    m2 = n * ho * wo

    # Shortcut: projection when the shape changes, identity otherwise.
    if stride != 1 or in_channels != cout:
        if stride == 1:
            sc = fused_matmul(x.reshape(m, cin_p), fp["wsf"], fp["bs"],
                              relu=False, out_dtype=jnp.bfloat16)
        else:
            sc = proj_shortcut_strided(x, fp["wsf"], fp["bs"], stride, ho, wo)
        sc = sc.reshape(m2, cout_p)
    else:
        sc = x.reshape(m2, cout_p)          # identity skip stays f32

    # conv3 (1x1) + bn3 + residual add + relu, fused; f32 block output.
    y3 = fused_matmul(y2.reshape(m2, cmid_p), fp["w3f"], fp["b3"], add=sc,
                      relu=True, out_dtype=jnp.float32)
    y3 = y3.reshape(n, ho, wo, cout_p)
    if cout_p != cout:
        y3 = y3[..., :cout]
    return y3


@functools.partial(jax.jit,
                   static_argnames=("in_channels", "out_channels", "stride"))
def residual_block(x_nchw, fp, in_channels, out_channels, stride=1):
    # NOTE: for a stack of blocks, call residual_block_nhwc directly and
    # transpose once at the model boundary instead of per block.
    x = jnp.transpose(x_nchw, (0, 2, 3, 1))
    y = residual_block_nhwc(x, fp, in_channels, out_channels, stride)
    return jnp.transpose(y, (0, 3, 1, 2))


# ---------------------------------------------------------------------------
# Pure-JAX reference (uses the raw, un-folded parameters)
# ---------------------------------------------------------------------------
def _conv2d(a, w, stride, pad):
    return lax.conv_general_dilated(
        a, w, (stride, stride), ((pad, pad), (pad, pad)),
        dimension_numbers=("NHWC", "HWIO", "NHWC"))


@functools.partial(jax.jit,
                   static_argnames=("in_channels", "out_channels", "stride"))
def reference_block(x_nchw, p, in_channels, out_channels, stride=1):
    cmid = out_channels
    cout = out_channels * 4
    x = jnp.transpose(x_nchw, (0, 2, 3, 1))
    y = _conv2d(x, p["w1"].reshape(1, 1, in_channels, cmid), 1, 0)
    y = jnp.maximum(y * p["s1"] + p["b1"], 0.0)
    y = _conv2d(y, p["w2"], stride, 1)
    y = jnp.maximum(y * p["s2"] + p["b2"], 0.0)
    y = _conv2d(y, p["w3"].reshape(1, 1, cmid, cout), 1, 0)
    y = y * p["s3"] + p["b3"]
    if stride != 1 or in_channels != cout:
        sc = _conv2d(x, p["ws"].reshape(1, 1, in_channels, cout), stride, 0)
        sc = sc * p["ss"] + p["bs"]
    else:
        sc = x
    y = jnp.maximum(y + sc, 0.0)
    return jnp.transpose(y, (0, 3, 1, 2))


if __name__ == "__main__":
    key = jax.random.PRNGKey(0)

    # (N, Cin, H, W, out_channels, stride):
    #   stride-2 projection shortcut, identity shortcut, stride-1 projection.
    cases = [
        (2, 4, 16, 16, 4, 2),
        (2, 16, 16, 16, 4, 1),
        (2, 8, 16, 16, 4, 1),
    ]
    for idx, (n, cin, h, w, oc, stride) in enumerate(cases):
        kx, kp = jax.random.split(jax.random.fold_in(key, idx))
        x = jax.random.normal(kx, (n, cin, h, w), jnp.float32)
        params = init_params(kp, cin, oc)
        fparams = prepare_block_params(params, cin, oc)

        out = jax.block_until_ready(
            residual_block(x, fparams, in_channels=cin, out_channels=oc,
                           stride=stride))
        ref = jax.block_until_ready(
            reference_block(x, params, in_channels=cin, out_channels=oc,
                            stride=stride))

        ho = (h + 2 - 3) // stride + 1
        assert out.shape == (n, oc * 4, ho, ho), out.shape
        err = float(jnp.max(jnp.abs(out - ref)))
        # bf16 matmuls + bf16 intermediates -> loosened tolerance vs f32 ref.
        assert bool(jnp.allclose(out, ref, atol=5e-2, rtol=5e-2)), (idx, err)

    print("KERNEL_OK")
</pallas_src>

<mosaic_0001>
module attributes {stable_mosaic.version = 11 : i64} {
  func.func @_mm_bias_kernel(%arg0: i32, %arg1: memref<256x128xf32, #tpu.memory_space<vmem>>, %arg2: memref<128x128xbf16, #tpu.memory_space<vmem>>, %arg3: memref<1x128xf32, #tpu.memory_space<vmem>>, %arg4: memref<256x128xbf16, #tpu.memory_space<vmem>>) attributes {dimension_semantics = [#tpu.dimension_semantics<parallel>], iteration_bounds = array<i64: 2>, scalar_prefetch = 0 : i64, scratch_operands = 0 : i64, tpu.core_type = #tpu.core_type<tc>, window_params = [{transform_indices = @transform_0, window_bounds = array<i64: 256, 128>}, {pipeline_mode = #tpu.pipeline_mode<synchronous>, transform_indices = @transform_1, window_bounds = array<i64: 128, 128>}, {pipeline_mode = #tpu.pipeline_mode<synchronous>, transform_indices = @transform_2, window_bounds = array<i64: 1, 128>}, {transform_indices = @transform_3, window_bounds = array<i64: 256, 128>}]} {
    %c0 = arith.constant 0 : index
    %c0_0 = arith.constant 0 : index
    %0 = vector.load %arg1[%c0, %c0_0] : memref<256x128xf32, #tpu.memory_space<vmem>>, vector<256x128xf32>
    %1 = arith.truncf %0 : vector<256x128xf32> to vector<256x128xbf16>
    %c0_1 = arith.constant 0 : index
    %c0_2 = arith.constant 0 : index
    %2 = vector.load %arg2[%c0_1, %c0_2] : memref<128x128xbf16, #tpu.memory_space<vmem>>, vector<128x128xbf16>
    %cst = arith.constant dense<0.000000e+00> : vector<256x128xf32>
    %3 = tpu.matmul %1, %2, %cst {dimension_numbers = #tpu.dot_dimension_numbers<[1], [0], [0], [1], [0, 0, 1, 1], [], []>} : vector<256x128xbf16>, vector<128x128xbf16>, vector<256x128xf32> -> vector<256x128xf32>
    %c0_3 = arith.constant 0 : index
    %c0_4 = arith.constant 0 : index
    %4 = vector.load %arg3[%c0_3, %c0_4] : memref<1x128xf32, #tpu.memory_space<vmem>>, vector<1x128xf32>
    %5 = vector.broadcast %4 : vector<1x128xf32> to vector<256x128xf32>
    %6 = arith.addf %3, %5 : vector<256x128xf32>
    %cst_5 = arith.constant 0.000000e+00 : f32
    %7 = vector.broadcast %cst_5 : f32 to vector<256x128xf32>
    %8 = arith.maximumf %6, %7 : vector<256x128xf32>
    %9 = arith.truncf %8 : vector<256x128xf32> to vector<256x128xbf16>
    %c0_6 = arith.constant 0 : index
    %c0_7 = arith.constant 0 : index
    %10 = vector.load %arg4[%c0_6, %c0_7] : memref<256x128xbf16, #tpu.memory_space<vmem>>, vector<256x128xbf16>
    tpu.vector_store %arg4[%c0_6, %c0_7], %9 {strides = array<i32>} : memref<256x128xbf16, #tpu.memory_space<vmem>>, vector<256x128xbf16>,
    return
  }
  func.func @transform_0(%arg0: i32) -> (i32, i32) {
    %c0_i32 = arith.constant 0 : i32
    %c0_i32_0 = arith.constant 0 : i32
    return %arg0, %c0_i32 : i32, i32
  }
  func.func @transform_1(%arg0: i32) -> (i32, i32) {
    %c0_i32 = arith.constant 0 : i32
    %c0_i32_0 = arith.constant 0 : i32
    %c0_i32_1 = arith.constant 0 : i32
    return %c0_i32, %c0_i32_0 : i32, i32
  }
  func.func @transform_2(%arg0: i32) -> (i32, i32) {
    %c0_i32 = arith.constant 0 : i32
    %c0_i32_0 = arith.constant 0 : i32
    %c0_i32_1 = arith.constant 0 : i32
    return %c0_i32, %c0_i32_0 : i32, i32
  }
  func.func @transform_3(%arg0: i32) -> (i32, i32) {
    %c0_i32 = arith.constant 0 : i32
    %c0_i32_0 = arith.constant 0 : i32
    return %arg0, %c0_i32 : i32, i32
  }
}

module attributes {stable_mosaic.version = 11 : i64} {
  func.func @_proj_shortcut_kernel(%arg0: i32, %arg1: memref<1x16x16x128xf32, #tpu.memory_space<vmem>>, %arg2: memref<128x128xbf16, #tpu.memory_space<vmem>>, %arg3: memref<1x128xf32, #tpu.memory_space<vmem>>, %arg4: memref<1x8x8x128xbf16, #tpu.memory_space<vmem>>) attributes {dimension_semantics = [#tpu.dimension_semantics<parallel>], iteration_bounds = array<i64: 2>, scalar_prefetch = 0 : i64, scratch_operands = 0 : i64, tpu.core_type = #tpu.core_type<tc>, window_params = [{transform_indices = @transform_0, window_bounds = array<i64: 1, 16, 16, 128>}, {pipeline_mode = #tpu.pipeline_mode<synchronous>, transform_indices = @transform_1, window_bounds = array<i64: 128, 128>}, {pipeline_mode = #tpu.pipeline_mode<synchronous>, transform_indices = @transform_2, window_bounds = array<i64: 1, 128>}, {transform_indices = @transform_3, window_bounds = array<i64: 1, 8, 8, 128>}]} {
    %c0 = arith.constant 0 : index
    %c0_0 = arith.constant 0 : index
    %c0_1 = arith.constant 0 : index
    %c0_2 = arith.constant 0 : index
    %0 = tpu.strided_load %arg1[%c0, %c0_0, %c0_1, %c0_2] {strides = array<i32: 1, 2, 2, 1>} : memref<1x16x16x128xf32, #tpu.memory_space<vmem>>, vector<1x8x8x128xf32>
    %1 = vector.shape_cast %0 : vector<1x8x8x128xf32> to vector<8x8x128xf32>
    %2 = vector.shape_cast %1 : vector<8x8x128xf32> to vector<64x128xf32>
    %3 = arith.truncf %2 : vector<64x128xf32> to vector<64x128xbf16>
    %c0_3 = arith.constant 0 : index
    %c0_4 = arith.constant 0 : index
    %4 = vector.load %arg2[%c0_3, %c0_4] : memref<128x128xbf16, #tpu.memory_space<vmem>>, vector<128x128xbf16>
    %cst = arith.constant dense<0.000000e+00> : vector<64x128xf32>
    %5 = tpu.matmul %3, %4, %cst {dimension_numbers = #tpu.dot_dimension_numbers<[1], [0], [0], [1], [0, 0, 1, 1], [], []>} : vector<64x128xbf16>, vector<128x128xbf16>, vector<64x128xf32> -> vector<64x128xf32>
    %c0_5 = arith.constant 0 : index
    %c0_6 = arith.constant 0 : index
    %6 = vector.load %arg3[%c0_5, %c0_6] : memref<1x128xf32, #tpu.memory_space<vmem>>, vector<1x128xf32>
    %7 = vector.broadcast %6 : vector<1x128xf32> to vector<64x128xf32>
    %8 = arith.addf %5, %7 : vector<64x128xf32>
    %9 = vector.shape_cast %8 : vector<64x128xf32> to vector<8x8x128xf32>
    %10 = arith.truncf %9 : vector<8x8x128xf32> to vector<8x8x128xbf16>
    %c0_7 = arith.constant 0 : index
    %c0_8 = arith.constant 0 : index
    %c0_9 = arith.constant 0 : index
    %c0_10 = arith.constant 0 : index
    %11 = vector.load %arg4[%c0_7, %c0_8, %c0_9, %c0_10] : memref<1x8x8x128xbf16, #tpu.memory_space<vmem>>, vector<1x8x8x128xbf16>
    %12 = vector.shape_cast %11 : vector<1x8x8x128xbf16> to vector<8x8x128xbf16>
    %13 = vector.shape_cast %10 : vector<8x8x128xbf16> to vector<1x8x8x128xbf16>
    tpu.vector_store %arg4[%c0_7, %c0_8, %c0_9, %c0_10], %13 {strides = array<i32>} : memref<1x8x8x128xbf16, #tpu.memory_space<vmem>>, vector<1x8x8x128xbf16>,
    return
  }
  func.func @transform_0(%arg0: i32) -> (i32, i32, i32, i32) {
    %c0_i32 = arith.constant 0 : i32
    %c0_i32_0 = arith.constant 0 : i32
    %c0_i32_1 = arith.constant 0 : i32
    %c0_i32_2 = arith.constant 0 : i32
    return %arg0, %c0_i32, %c0_i32_0, %c0_i32_1 : i32, i32, i32, i32
  }
  func.func @transform_1(%arg0: i32) -> (i32, i32) {
    %c0_i32 = arith.constant 0 : i32
    %c0_i32_0 = arith.constant 0 : i32
    %c0_i32_1 = arith.constant 0 : i32
    return %c0_i32, %c0_i32_0 : i32, i32
  }
  func.func @transform_2(%arg0: i32) -> (i32, i32) {
    %c0_i32 = arith.constant 0 : i32
    %c0_i32_0 = arith.constant 0 : i32
    %c0_i32_1 = arith.constant 0 : i32
    return %c0_i32, %c0_i32_0 : i32, i32
  }
  func.func @transform_3(%arg0: i32) -> (i32, i32, i32, i32) {
    %c0_i32 = arith.constant 0 : i32
    %c0_i32_0 = arith.constant 0 : i32
    %c0_i32_1 = arith.constant 0 : i32
    %c0_i32_2 = arith.constant 0 : i32
    return %arg0, %c0_i32, %c0_i32_0, %c0_i32_1 : i32, i32, i32, i32
  }
}

module attributes {stable_mosaic.version = 11 : i64} {
  func.func @_mm_bias_add_kernel(%arg0: i32, %arg1: memref<64x128xbf16, #tpu.memory_space<vmem>>, %arg2: memref<128x128xbf16, #tpu.memory_space<vmem>>, %arg3: memref<1x128xf32, #tpu.memory_space<vmem>>, %arg4: memref<64x128xbf16, #tpu.memory_space<vmem>>, %arg5: memref<64x128xf32, #tpu.memory_space<vmem>>) attributes {dimension_semantics = [#tpu.dimension_semantics<parallel>], iteration_bounds = array<i64: 2>, scalar_prefetch = 0 : i64, scratch_operands = 0 : i64, tpu.core_type = #tpu.core_type<tc>, window_params = [{transform_indices = @transform_0, window_bounds = array<i64: 64, 128>}, {pipeline_mode = #tpu.pipeline_mode<synchronous>, transform_indices = @transform_1, window_bounds = array<i64: 128, 128>}, {pipeline_mode = #tpu.pipeline_mode<synchronous>, transform_indices = @transform_2, window_bounds = array<i64: 1, 128>}, {transform_indices = @transform_3, window_bounds = array<i64: 64, 128>}, {transform_indices = @transform_4, window_bounds = array<i64: 64, 128>}]} {
    %c0 = arith.constant 0 : index
    %c0_0 = arith.constant 0 : index
    %0 = vector.load %arg1[%c0, %c0_0] : memref<64x128xbf16, #tpu.memory_space<vmem>>, vector<64x128xbf16>
    %c0_1 = arith.constant 0 : index
    %c0_2 = arith.constant 0 : index
    %1 = vector.load %arg2[%c0_1, %c0_2] : memref<128x128xbf16, #tpu.memory_space<vmem>>, vector<128x128xbf16>
    %cst = arith.constant dense<0.000000e+00> : vector<64x128xf32>
    %2 = tpu.matmul %0, %1, %cst {dimension_numbers = #tpu.dot_dimension_numbers<[1], [0], [0], [1], [0, 0, 1, 1], [], []>} : vector<64x128xbf16>, vector<128x128xbf16>, vector<64x128xf32> -> vector<64x128xf32>
    %c0_3 = arith.constant 0 : index
    %c0_4 = arith.constant 0 : index
    %3 = vector.load %arg3[%c0_3, %c0_4] : memref<1x128xf32, #tpu.memory_space<vmem>>, vector<1x128xf32>
    %4 = vector.broadcast %3 : vector<1x128xf32> to vector<64x128xf32>
    %5 = arith.addf %2, %4 : vector<64x128xf32>
    %c0_5 = arith.constant 0 : index
    %c0_6 = arith.constant 0 : index
    %6 = vector.load %arg4[%c0_5, %c0_6] : memref<64x128xbf16, #tpu.memory_space<vmem>>, vector<64x128xbf16>
    %7 = arith.extf %6 : vector<64x128xbf16> to vector<64x128xf32>
    %8 = arith.addf %5, %7 : vector<64x128xf32>
    %cst_7 = arith.constant 0.000000e+00 : f32
    %9 = vector.broadcast %cst_7 : f32 to vector<64x128xf32>
    %10 = arith.maximumf %8, %9 : vector<64x128xf32>
    %c0_8 = arith.constant 0 : index
    %c0_9 = arith.constant 0 : index
    %11 = vector.load %arg5[%c0_8, %c0_9] : memref<64x128xf32, #tpu.memory_space<vmem>>, vector<64x128xf32>
    tpu.vector_store %arg5[%c0_8, %c0_9], %10 {strides = array<i32>} : memref<64x128xf32, #tpu.memory_space<vmem>>, vector<64x128xf32>,
    return
  }
  func.func @transform_0(%arg0: i32) -> (i32, i32) {
    %c0_i32 = arith.constant 0 : i32
    %c0_i32_0 = arith.constant 0 : i32
    return %arg0, %c0_i32 : i32, i32
  }
  func.func @transform_1(%arg0: i32) -> (i32, i32) {
    %c0_i32 = arith.constant 0 : i32
    %c0_i32_0 = arith.constant 0 : i32
    %c0_i32_1 = arith.constant 0 : i32
    return %c0_i32, %c0_i32_0 : i32, i32
  }
  func.func @transform_2(%arg0: i32) -> (i32, i32) {
    %c0_i32 = arith.constant 0 : i32
    %c0_i32_0 = arith.constant 0 : i32
    %c0_i32_1 = arith.constant 0 : i32
    return %c0_i32, %c0_i32_0 : i32, i32
  }
  func.func @transform_3(%arg0: i32) -> (i32, i32) {
    %c0_i32 = arith.constant 0 : i32
    %c0_i32_0 = arith.constant 0 : i32
    return %arg0, %c0_i32 : i32, i32
  }
  func.func @transform_4(%arg0: i32) -> (i32, i32) {
    %c0_i32 = arith.constant 0 : i32
    %c0_i32_0 = arith.constant 0 : i32
    return %arg0, %c0_i32 : i32, i32
  }
}

module attributes {stable_mosaic.version = 11 : i64} {
  func.func @_conv3x3_kernel(%arg0: i32, %arg1: memref<1x16x16x128xbf16, #tpu.memory_space<vmem>>, %arg2: memref<9x128x128xbf16, #tpu.memory_space<vmem>>, %arg3: memref<1x128xf32, #tpu.memory_space<vmem>>, %arg4: memref<1x8x8x128xbf16, #tpu.memory_space<vmem>>, %arg5: memref<18x18x128xf32, #tpu.memory_space<vmem>>) attributes {dimension_semantics = [#tpu.dimension_semantics<parallel>], iteration_bounds = array<i64: 2>, scalar_prefetch = 0 : i64, scratch_operands = 1 : i64, tpu.core_type = #tpu.core_type<tc>, window_params = [{transform_indices = @transform_0, window_bounds = array<i64: 1, 16, 16, 128>}, {pipeline_mode = #tpu.pipeline_mode<synchronous>, transform_indices = @transform_1, window_bounds = array<i64: 9, 128, 128>}, {pipeline_mode = #tpu.pipeline_mode<synchronous>, transform_indices = @transform_2, window_bounds = array<i64: 1, 128>}, {transform_indices = @transform_3, window_bounds = array<i64: 1, 8, 8, 128>}]} {
    %cst = arith.constant 0.000000e+00 : f32
    %0 = vector.broadcast %cst : f32 to vector<18x18x128xf32>
    %c0 = arith.constant 0 : index
    %c0_0 = arith.constant 0 : index
    %c0_1 = arith.constant 0 : index
    %1 = vector.load %arg5[%c0, %c0_0, %c0_1] : memref<18x18x128xf32, #tpu.memory_space<vmem>>, vector<18x18x128xf32>
    tpu.vector_store %arg5[%c0, %c0_0, %c0_1], %0 {strides = array<i32>} : memref<18x18x128xf32, #tpu.memory_space<vmem>>, vector<18x18x128xf32>,
    %c0_2 = arith.constant 0 : index
    %c0_3 = arith.constant 0 : index
    %c0_4 = arith.constant 0 : index
    %c0_5 = arith.constant 0 : index
    %2 = vector.load %arg1[%c0_2, %c0_3, %c0_4, %c0_5] : memref<1x16x16x128xbf16, #tpu.memory_space<vmem>>, vector<1x16x16x128xbf16>
    %3 = vector.shape_cast %2 : vector<1x16x16x128xbf16> to vector<16x16x128xbf16>
    %4 = arith.extf %3 : vector<16x16x128xbf16> to vector<16x16x128xf32>
    %c1 = arith.constant 1 : index
    %c1_6 = arith.constant 1 : index
    %c0_7 = arith.constant 0 : index
    %5 = vector.load %arg5[%c1, %c1_6, %c0_7] : memref<18x18x128xf32, #tpu.memory_space<vmem>>, vector<16x16x128xf32>
    tpu.vector_store %arg5[%c1, %c1_6, %c0_7], %4 {strides = array<i32>} : memref<18x18x128xf32, #tpu.memory_space<vmem>>, vector<16x16x128xf32>,
    %cst_8 = arith.constant 0.000000e+00 : f32
    %6 = vector.broadcast %cst_8 : f32 to vector<64x128xf32>
    %c0_9 = arith.constant 0 : index
    %c0_10 = arith.constant 0 : index
    %c0_11 = arith.constant 0 : index
    %7 = tpu.strided_load %arg5[%c0_9, %c0_10, %c0_11] {strides = array<i32: 2, 2, 1>} : memref<18x18x128xf32, #tpu.memory_space<vmem>>, vector<8x8x128xf32>
    %8 = vector.shape_cast %7 : vector<8x8x128xf32> to vector<64x128xf32>
    %9 = arith.truncf %8 : vector<64x128xf32> to vector<64x128xbf16>
    %c0_12 = arith.constant 0 : index
    %c0_13 = arith.constant 0 : index
    %c0_14 = arith.constant 0 : index
    %10 = vector.load %arg2[%c0_12, %c0_13, %c0_14] : memref<9x128x128xbf16, #tpu.memory_space<vmem>>, vector<1x128x128xbf16>
    %11 = vector.shape_cast %10 : vector<1x128x128xbf16> to vector<128x128xbf16>
    %cst_15 = arith.constant dense<0.000000e+00> : vector<64x128xf32>
    %12 = tpu.matmul %9, %11, %cst_15 {dimension_numbers = #tpu.dot_dimension_numbers<[1], [0], [0], [1], [0, 0, 1, 1], [], []>} : vector<64x128xbf16>, vector<128x128xbf16>, vector<64x128xf32> -> vector<64x128xf32>
    %13 = arith.addf %6, %12 : vector<64x128xf32>
    %c0_16 = arith.constant 0 : index
    %c1_17 = arith.constant 1 : index
    %c0_18 = arith.constant 0 : index
    %14 = tpu.strided_load %arg5[%c0_16, %c1_17, %c0_18] {strides = array<i32: 2, 2, 1>} : memref<18x18x128xf32, #tpu.memory_space<vmem>>, vector<8x8x128xf32>
    %15 = vector.shape_cast %14 : vector<8x8x128xf32> to vector<64x128xf32>
    %16 = arith.truncf %15 : vector<64x128xf32> to vector<64x128xbf16>
    %c1_19 = arith.constant 1 : index
    %c0_20 = arith.constant 0 : index
    %c0_21 = arith.constant 0 : index
    %17 = vector.load %arg2[%c1_19, %c0_20, %c0_21] : memref<9x128x128xbf16, #tpu.memory_space<vmem>>, vector<1x128x128xbf16>
    %18 = vector.shape_cast %17 : vector<1x128x128xbf16> to vector<128x128xbf16>
    %cst_22 = arith.constant dense<0.000000e+00> : vector<64x128xf32>
    %19 = tpu.matmul %16, %18, %cst_22 {dimension_numbers = #tpu.dot_dimension_numbers<[1], [0], [0], [1], [0, 0, 1, 1], [], []>} : vector<64x128xbf16>, vector<128x128xbf16>, vector<64x128xf32> -> vector<64x128xf32>
    %20 = arith.addf %13, %19 : vector<64x128xf32>
    %c0_23 = arith.constant 0 : index
    %c2 = arith.constant 2 : index
    %c0_24 = arith.constant 0 : index
    %21 = tpu.strided_load %arg5[%c0_23, %c2, %c0_24] {strides = array<i32: 2, 2, 1>} : memref<18x18x128xf32, #tpu.memory_space<vmem>>, vector<8x8x128xf32>
    %22 = vector.shape_cast %21 : vector<8x8x128xf32> to vector<64x128xf32>
    %23 = arith.truncf %22 : vector<64x128xf32> to vector<64x128xbf16>
    %c2_25 = arith.constant 2 : index
    %c0_26 = arith.constant 0 : index
    %c0_27 = arith.constant 0 : index
    %24 = vector.load %arg2[%c2_25, %c0_26, %c0_27] : memref<9x128x128xbf16, #tpu.memory_space<vmem>>, vector<1x128x128xbf16>
    %25 = vector.shape_cast %24 : vector<1x128x128xbf16> to vector<128x128xbf16>
    %cst_28 = arith.constant dense<0.000000e+00> : vector<64x128xf32>
    %26 = tpu.matmul %23, %25, %cst_28 {dimension_numbers = #tpu.dot_dimension_numbers<[1], [0], [0], [1], [0, 0, 1, 1], [], []>} : vector<64x128xbf16>, vector<128x128xbf16>, vector<64x128xf32> -> vector<64x128xf32>
    %27 = arith.addf %20, %26 : vector<64x128xf32>
    %c1_29 = arith.constant 1 : index
    %c0_30 = arith.constant 0 : index
    %c0_31 = arith.constant 0 : index
    %28 = tpu.strided_load %arg5[%c1_29, %c0_30, %c0_31] {strides = array<i32: 2, 2, 1>} : memref<18x18x128xf32, #tpu.memory_space<vmem>>, vector<8x8x128xf32>
    %29 = vector.shape_cast %28 : vector<8x8x128xf32> to vector<64x128xf32>
    %30 = arith.truncf %29 : vector<64x128xf32> to vector<64x128xbf16>
    %c3 = arith.constant 3 : index
    %c0_32 = arith.constant 0 : index
    %c0_33 = arith.constant 0 : index
    %31 = vector.load %arg2[%c3, %c0_32, %c0_33] : memref<9x128x128xbf16, #tpu.memory_space<vmem>>, vector<1x128x128xbf16>
    %32 = vector.shape_cast %31 : vector<1x128x128xbf16> to vector<128x128xbf16>
    %cst_34 = arith.constant dense<0.000000e+00> : vector<64x128xf32>
    %33 = tpu.matmul %30, %32, %cst_34 {dimension_numbers = #tpu.dot_dimension_numbers<[1], [0], [0], [1], [0, 0, 1, 1], [], []>} : vector<64x128xbf16>, vector<128x128xbf16>, vector<64x128xf32> -> vector<64x128xf32>
    %34 = arith.addf %27, %33 : vector<64x128xf32>
    %c1_35 = arith.constant 1 : index
    %c1_36 = arith.constant 1 : index
    %c0_37 = arith.constant 0 : index
    %35 = tpu.strided_load %arg5[%c1_35, %c1_36, %c0_37] {strides = array<i32: 2, 2, 1>} : memref<18x18x128xf32, #tpu.memory_space<vmem>>, vector<8x8x128xf32>
    %36 = vector.shape_cast %35 : vector<8x8x128xf32> to vector<64x128xf32>
    %37 = arith.truncf %36 : vector<64x128xf32> to vector<64x128xbf16>
    %c4 = arith.constant 4 : index
    %c0_38 = arith.constant 0 : index
    %c0_39 = arith.constant 0 : index
    %38 = vector.load %arg2[%c4, %c0_38, %c0_39] : memref<9x128x128xbf16, #tpu.memory_space<vmem>>, vector<1x128x128xbf16>
    %39 = vector.shape_cast %38 : vector<1x128x128xbf16> to vector<128x128xbf16>
    %cst_40 = arith.constant dense<0.000000e+00> : vector<64x128xf32>
    %40 = tpu.matmul %37, %39, %cst_40 {dimension_numbers = #tpu.dot_dimension_numbers<[1], [0], [0], [1], [0, 0, 1, 1], [], []>} : vector<64x128xbf16>, vector<128x128xbf16>, vector<64x128xf32> -> vector<64x128xf32>
    %41 = arith.addf %34, %40 : vector<64x128xf32>
    %c1_41 = arith.constant 1 : index
    %c2_42 = arith.constant 2 : index
    %c0_43 = arith.constant 0 : index
    %42 = tpu.strided_load %arg5[%c1_41, %c2_42, %c0_43] {strides = array<i32: 2, 2, 1>} : memref<18x18x128xf32, #tpu.memory_space<vmem>>, vector<8x8x128xf32>
    %43 = vector.shape_cast %42 : vector<8x8x128xf32> to vector<64x128xf32>
    %44 = arith.truncf %43 : vector<64x128xf32> to vector<64x128xbf16>
    %c5 = arith.constant 5 : index
    %c0_44 = arith.constant 0 : index
    %c0_45 = arith.constant 0 : index
    %45 = vector.load %arg2[%c5, %c0_44, %c0_45] : memref<9x128x128xbf16, #tpu.memory_space<vmem>>, vector<1x128x128xbf16>
    %46 = vector.shape_cast %45 : vector<1x128x128xbf16> to vector<128x128xbf16>
    %cst_46 = arith.constant dense<0.000000e+00> : vector<64x128xf32>
    %47 = tpu.matmul %44, %46, %cst_46 {dimension_numbers = #tpu.dot_dimension_numbers<[1], [0], [0], [1], [0, 0, 1, 1], [], []>} : vector<64x128xbf16>, vector<128x128xbf16>, vector<64x128xf32> -> vector<64x128xf32>
    %48 = arith.addf %41, %47 : vector<64x128xf32>
    %c2_47 = arith.constant 2 : index
    %c0_48 = arith.constant 0 : index
    %c0_49 = arith.constant 0 : index
    %49 = tpu.strided_load %arg5[%c2_47, %c0_48, %c0_49] {strides = array<i32: 2, 2, 1>} : memref<18x18x128xf32, #tpu.memory_space<vmem>>, vector<8x8x128xf32>
    %50 = vector.shape_cast %49 : vector<8x8x128xf32> to vector<64x128xf32>
    %51 = arith.truncf %50 : vector<64x128xf32> to vector<64x128xbf16>
    %c6 = arith.constant 6 : index
    %c0_50 = arith.constant 0 : index
    %c0_51 = arith.constant 0 : index
    %52 = vector.load %arg2[%c6, %c0_50, %c0_51] : memref<9x128x128xbf16, #tpu.memory_space<vmem>>, vector<1x128x128xbf16>
    %53 = vector.shape_cast %52 : vector<1x128x128xbf16> to vector<128x128xbf16>
    %cst_52 = arith.constant dense<0.000000e+00> : vector<64x128xf32>
    %54 = tpu.matmul %51, %53, %cst_52 {dimension_numbers = #tpu.dot_dimension_numbers<[1], [0], [0], [1], [0, 0, 1, 1], [], []>} : vector<64x128xbf16>, vector<128x128xbf16>, vector<64x128xf32> -> vector<64x128xf32>
    %55 = arith.addf %48, %54 : vector<64x128xf32>
    %c2_53 = arith.constant 2 : index
    %c1_54 = arith.constant 1 : index
    %c0_55 = arith.constant 0 : index
    %56 = tpu.strided_load %arg5[%c2_53, %c1_54, %c0_55] {strides = array<i32: 2, 2, 1>} : memref<18x18x128xf32, #tpu.memory_space<vmem>>, vector<8x8x128xf32>
    %57 = vector.shape_cast %56 : vector<8x8x128xf32> to vector<64x128xf32>
    %58 = arith.truncf %57 : vector<64x128xf32> to vector<64x128xbf16>
    %c7 = arith.constant 7 : index
    %c0_56 = arith.constant 0 : index
    %c0_57 = arith.constant 0 : index
    %59 = vector.load %arg2[%c7, %c0_56, %c0_57] : memref<9x128x128xbf16, #tpu.memory_space<vmem>>, vector<1x128x128xbf16>
    %60 = vector.shape_cast %59 : vector<1x128x128xbf16> to vector<128x128xbf16>
    %cst_58 = arith.constant dense<0.000000e+00> : vector<64x128xf32>
    %61 = tpu.matmul %58, %60, %cst_58 {dimension_numbers = #tpu.dot_dimension_numbers<[1], [0], [0], [1], [0, 0, 1, 1], [], []>} : vector<64x128xbf16>, vector<128x128xbf16>, vector<64x128xf32> -> vector<64x128xf32>
    %62 = arith.addf %55, %61 : vector<64x128xf32>
    %c2_59 = arith.constant 2 : index
    %c2_60 = arith.constant 2 : index
    %c0_61 = arith.constant 0 : index
    %63 = tpu.strided_load %arg5[%c2_59, %c2_60, %c0_61] {strides = array<i32: 2, 2, 1>} : memref<18x18x128xf32, #tpu.memory_space<vmem>>, vector<8x8x128xf32>
    %64 = vector.shape_cast %63 : vector<8x8x128xf32> to vector<64x128xf32>
    %65 = arith.truncf %64 : vector<64x128xf32> to vector<64x128xbf16>
    %c8 = arith.constant 8 : index
    %c0_62 = arith.constant 0 : index
    %c0_63 = arith.constant 0 : index
    %66 = vector.load %arg2[%c8, %c0_62, %c0_63] : memref<9x128x128xbf16, #tpu.memory_space<vmem>>, vector<1x128x128xbf16>
    %67 = vector.shape_cast %66 : vector<1x128x128xbf16> to vector<128x128xbf16>
    %cst_64 = arith.constant dense<0.000000e+00> : vector<64x128xf32>
    %68 = tpu.matmul %65, %67, %cst_64 {dimension_numbers = #tpu.dot_dimension_numbers<[1], [0], [0], [1], [0, 0, 1, 1], [], []>} : vector<64x128xbf16>, vector<128x128xbf16>, vector<64x128xf32> -> vector<64x128xf32>
    %69 = arith.addf %62, %68 : vector<64x128xf32>
    %c0_65 = arith.constant 0 : index
    %c0_66 = arith.constant 0 : index
    %70 = vector.load %arg3[%c0_65, %c0_66] : memref<1x128xf32, #tpu.memory_space<vmem>>, vector<1x128xf32>
    %71 = vector.broadcast %70 : vector<1x128xf32> to vector<64x128xf32>
    %72 = arith.addf %69, %71 : vector<64x128xf32>
    %cst_67 = arith.constant 0.000000e+00 : f32
    %73 = vector.broadcast %cst_67 : f32 to vector<64x128xf32>
    %74 = arith.maximumf %72, %73 : vector<64x128xf32>
    %75 = vector.shape_cast %74 : vector<64x128xf32> to vector<8x8x128xf32>
    %76 = arith.truncf %75 : vector<8x8x128xf32> to vector<8x8x128xbf16>
    %c0_68 = arith.constant 0 : index
    %c0_69 = arith.constant 0 : index
    %c0_70 = arith.constant 0 : index
    %c0_71 = arith.constant 0 : index
    %77 = vector.load %arg4[%c0_68, %c0_69, %c0_70, %c0_71] : memref<1x8x8x128xbf16, #tpu.memory_space<vmem>>, vector<1x8x8x128xbf16>
    %78 = vector.shape_cast %77 : vector<1x8x8x128xbf16> to vector<8x8x128xbf16>
    %79 = vector.shape_cast %76 : vector<8x8x128xbf16> to vector<1x8x8x128xbf16>
    tpu.vector_store %arg4[%c0_68, %c0_69, %c0_70, %c0_71], %79 {strides = array<i32>} : memref<1x8x8x128xbf16, #tpu.memory_space<vmem>>, vector<1x8x8x128xbf16>,
    return
  }
  func.func @transform_0(%arg0: i32) -> (i32, i32, i32, i32) {
    %c0_i32 = arith.constant 0 : i32
    %c0_i32_0 = arith.constant 0 : i32
    %c0_i32_1 = arith.constant 0 : i32
    %c0_i32_2 = arith.constant 0 : i32
    return %arg0, %c0_i32, %c0_i32_0, %c0_i32_1 : i32, i32, i32, i32
  }
  func.func @transform_1(%arg0: i32) -> (i32, i32, i32) {
    %c0_i32 = arith.constant 0 : i32
    %c0_i32_0 = arith.constant 0 : i32
    %c0_i32_1 = arith.constant 0 : i32
    %c0_i32_2 = arith.constant 0 : i32
    return %c0_i32, %c0_i32_0, %c0_i32_1 : i32, i32, i32
  }
  func.func @transform_2(%arg0: i32) -> (i32, i32) {
    %c0_i32 = arith.constant 0 : i32
    %c0_i32_0 = arith.constant 0 : i32
    %c0_i32_1 = arith.constant 0 : i32
    return %c0_i32, %c0_i32_0 : i32, i32
  }
  func.func @transform_3(%arg0: i32) -> (i32, i32, i32, i32) {
    %c0_i32 = arith.constant 0 : i32
    %c0_i32_0 = arith.constant 0 : i32
    %c0_i32_1 = arith.constant 0 : i32
    %c0_i32_2 = arith.constant 0 : i32
    return %arg0, %c0_i32, %c0_i32_0, %c0_i32_1 : i32, i32, i32, i32
  }
}

</mosaic_0001>

<llo_original>
// kernel: residual_block.6
$region0: #{residual_block.6}
  #allocation0 [shape = 'u32[]', space=smem, size = 0x4, offset = 0x4, fixed_abs, tag = 'smem constant byte address 0x4 - core index']
  #allocation1 [shape = 'u32[144,128]{1,0:T(1,128)}', space=vmem, size = 0x12000, scoped, tag = 'internal scratch']
  %s0 = inlined_call_operand.vmem [shape: f32[2,16,16,128], index: 0, kind: input, shape index: {}]
  %s1 = inlined_call_operand.vmem [shape: bf16[128,128], index: 1, kind: input, shape index: {}]
  %s2 = inlined_call_operand.vmem [shape: f32[1,128], index: 2, kind: input, shape index: {}]
  %s3 = inlined_call_operand.vmem [shape: bf16[2,8,8,128], index: 3, kind: output, shape index: {}]
  %s4 = sld [smem:[#allocation0]]
  $region45: #{residual_block.6} parent=0
    _
  %s6 = ssub.s32 1, %s4
  %s7 = scalar_select 0, %s6, %s4
  loop: start=0, step=1, limit=4
  $region2: #{residual_block.6} parent=0 // loop_pre_header
    _
  $region3: #{residual_block.6} parent=0 // loop_header
    %s9 = sphi 0, %s13
    %p10 = scmp.ge.s32.totalorder %s9, 4
    %s19 = sphi 0, %s21
    %s22 = sphi 0, %s19
    %s23 = sphi 0, %s22
    %s39 = sphi 0, %s23
    %s43 = sphi 0, %s43
    %s45 = sphi 0, %s43
    %s46 = sphi 0, %s45
    %s60 = sphi 0, %s46
    %s64 = sphi 0, %s64
    %s66 = sphi 0, %s64
    %s67 = sphi 0, %s66
    %s81 = sphi 0, %s67
    %s87 = sphi 0, %s89
    %s90 = sphi 0, %s87
    %s91 = sphi 0, %s90
    %s107 = sphi 0, %s91
  $region4: #{residual_block.6} parent=0 // loop_header_branch
    %12 = sbr.rel (%p10) target = $region8
  $region5: #{residual_block.6} parent=0 // loop_body
    %s14 = ssub.s32 %s9, 1
    %s15 = ssub.s32 %s9, 2
    %s16 = sadd.s32 %s9, 1
    %s17 = ssub.s32 %s9, %s16
    %p18 = scmp.eq.s32.totalorder %s17, 0
    %s20 = sadd.s32 %s19, 1
    %s21 = scalar_select %p18, %s19, %s20
    %p24 = pneg %p18
    %p25 = scmp.eq.s32.totalorder %s9, 1
    %p26 = por %p24, %p25
    %p27 = scmp.ne.s32.totalorder %s19, %s22
    %p28 = scmp.eq.s32.totalorder %s9, 0
    %p29 = por %p27, %p28
    %p30 = scmp.ne.s32.totalorder %s19, %s22
    %p31 = scmp.eq.s32.totalorder %s14, 1
    %p32 = por %p30, %p31
    %p33 = scmp.ne.s32.totalorder %s22, %s23
    %p34 = scmp.eq.s32.totalorder %s14, 0
    %p35 = por %p33, %p34
    %p36 = scmp.ne.s32.totalorder %s22, %s23
    %p37 = scmp.eq.s32.totalorder %s15, 1
    %p38 = por %p36, %p37
    %p40 = scmp.ne.s32.totalorder %s23, %s39
    %p41 = scmp.eq.s32.totalorder %s15, 0
    %p42 = por %p40, %p41
    %s44 = sadd.s32 %s43, 1
    %p47 = scmp.eq.s32.totalorder %s9, 1
    %p48 = scmp.ne.s32.totalorder %s43, %s45
    %p49 = scmp.eq.s32.totalorder %s9, 0
    %p50 = por %p48, %p49
    %p51 = scmp.ne.s32.totalorder %s43, %s45
    %p52 = scmp.eq.s32.totalorder %s14, 1
    %p53 = por %p51, %p52
    %p54 = scmp.ne.s32.totalorder %s45, %s46
    %p55 = scmp.eq.s32.totalorder %s14, 0
    %p56 = por %p54, %p55
    %p57 = scmp.ne.s32.totalorder %s45, %s46
    %p58 = scmp.eq.s32.totalorder %s15, 1
    %p59 = por %p57, %p58
    %p61 = scmp.ne.s32.totalorder %s46, %s60
    %p62 = scmp.eq.s32.totalorder %s15, 0
    %p63 = por %p61, %p62
    %s65 = sadd.s32 %s64, 1
    %p68 = scmp.eq.s32.totalorder %s9, 1
    %p69 = scmp.ne.s32.totalorder %s64, %s66
    %p70 = scmp.eq.s32.totalorder %s9, 0
    %p71 = por %p69, %p70
    %p72 = scmp.ne.s32.totalorder %s64, %s66
    %p73 = scmp.eq.s32.totalorder %s14, 1
    %p74 = por %p72, %p73
    %p75 = scmp.ne.s32.totalorder %s66, %s67
    %p76 = scmp.eq.s32.totalorder %s14, 0
    %p77 = por %p75, %p76
    %p78 = scmp.ne.s32.totalorder %s66, %s67
    %p79 = scmp.eq.s32.totalorder %s15, 1
    %p80 = por %p78, %p79
    %p82 = scmp.ne.s32.totalorder %s67, %s81
    %p83 = scmp.eq.s32.totalorder %s15, 0
    %p84 = por %p82, %p83
    %s85 = ssub.s32 %s9, %s16
    %p86 = scmp.eq.s32.totalorder %s85, 0
    %s88 = sadd.s32 %s87, 1
    %s89 = scalar_select %p86, %s87, %s88
    %p92 = pneg %p86
    %p93 = scmp.eq.s32.totalorder %s9, 1
    %p94 = por %p92, %p93
    %p95 = scmp.ne.s32.totalorder %s87, %s90
    %p96 = scmp.eq.s32.totalorder %s9, 0
    %p97 = por %p95, %p96
    %p98 = scmp.ne.s32.totalorder %s87, %s90
    %p99 = scmp.eq.s32.totalorder %s14, 1
    %p100 = por %p98, %p99
    %p101 = scmp.ne.s32.totalorder %s90, %s91
    %p102 = scmp.eq.s32.totalorder %s14, 0
    %p103 = por %p101, %p102
    %p104 = scmp.ne.s32.totalorder %s90, %s91
    %p105 = scmp.eq.s32.totalorder %s15, 1
    %p106 = por %p104, %p105
    %p108 = scmp.ne.s32.totalorder %s91, %s107
    %p109 = scmp.eq.s32.totalorder %s15, 0
    %p110 = por %p108, %p109
    %p111 = scmp.le.s32.totalorder 1, %s9
    %p112 = scmp.lt.s32.totalorder %s9, 3
    %p113 = pnand %p111, %p112
    %p114 = pneg %p113
    // Predicated region
    $region9: #{residual_block.6} parent=5 // pred_check
      _
    $region10: #{residual_block.6} parent=5 // pred_check_branch
      %116 = sbr.rel (%p113) target = $region12
    $region11: #{residual_block.6} parent=5 // pred_region
      %s117 = ssub.s32 %s9, 1
      // Predicated region
      $region13: #{residual_block.6} parent=11 // pred_check
        %p118 = pneg %p56
      $region14: #{residual_block.6} parent=11 // pred_check_branch
        %120 = sbr.rel (%p118) target = $region16
      $region15: #{residual_block.6} parent=11 // pred_region
        _
      $region16: #{residual_block.6} parent=11 // pred_fallthru
        _
      // Predicated region
      $region17: #{residual_block.6} parent=11 // pred_check
        %p121 = pneg %p77
      $region18: #{residual_block.6} parent=11 // pred_check_branch
        %123 = sbr.rel (%p121) target = $region20
      $region19: #{residual_block.6} parent=11 // pred_region
        _
      $region20: #{residual_block.6} parent=11 // pred_fallthru
        _
    $region12: #{residual_block.6} parent=5 // pred_fallthru
      _
    %p124 = scmp.lt.s32.totalorder %s9, 2
    // Predicated region
    $region21: #{residual_block.6} parent=5 // pred_check
      %p125 = pneg %p124
    $region22: #{residual_block.6} parent=5 // pred_check_branch
      %127 = sbr.rel (%p125) target = $region24
    $region23: #{residual_block.6} parent=5 // pred_region
      // Predicated region
      $region25: #{residual_block.6} parent=23 // pred_check
        %p128 = pneg %p29
      $region26: #{residual_block.6} parent=23 // pred_check_branch
        %130 = sbr.rel (%p128) target = $region28
      $region27: #{residual_block.6} parent=23 // pred_region
        %p131 = scmp.lt.s32.totalorder %s9, 1
        %s132 = scalar_select %p131, %s9, 1
        %s133 = smul.addr %s132, 32
        %s134 = smul.addr %s133, 8
        %s135 = scalar_lea.vmem %s0, %s134
      $region28: #{residual_block.6} parent=23 // pred_fallthru
        _
    $region24: #{residual_block.6} parent=5 // pred_fallthru
      _
    %p136 = scmp.le.s32.totalorder 1, %s9
    %p137 = scmp.lt.s32.totalorder %s9, 3
    %p138 = pnand %p136, %p137
    %p139 = pneg %p138
    // Predicated region
    $region29: #{residual_block.6} parent=5 // pred_check
      _
    $region30: #{residual_block.6} parent=5 // pred_check_branch
      %141 = sbr.rel (%p138) target = $region32
    $region31: #{residual_block.6} parent=5 // pred_region
      %s142 = ssub.s32 %s9, 1
      %p143 = scmp.lt.s32.totalorder %s14, 1
      %s144 = scalar_select %p143, %s14, 1
      %s145 = smul.addr %s144, 32
      %s146 = smul.addr %s145, 8
      %s147 = scalar_lea.vmem %s0, %s146
      %p148 = pneg %p35
      %p149 = pneg %p32
      %p150 = pneg %p56
      %p151 = pneg %p53
      %p152 = pneg %p77
      %p153 = pneg %p74
      %p154 = pneg %p103
      %p155 = pneg %p100
      %p156 = scmp.lt.s32.totalorder %s14, 1
      %s157 = scalar_select %p156, %s14, 1
      %s158 = smul.addr %s157, 8
      %s159 = smul.addr %s158, 4
      %s160 = scalar_lea.vmem %s3, %s159
      %p161 = scmp.lt.s32.totalorder %s14, 1
      %s162 = scalar_select %p161, %s14, 1
      %s163 = smul.addr %s162, 32
      %s164 = smul.addr %s163, 8
      %s165 = scalar_lea.vmem %s0, %s164
      %p166 = scmp.lt.s32.totalorder %s14, 1
      %s167 = scalar_select %p166, %s14, 1
      %s168 = smul.addr %s167, 8
      %s169 = smul.addr %s168, 4
      %s170 = scalar_lea.vmem %s3, %s169
      %v172 = vld [vmem:[%s165] ss:$2 sm:$0xff]
      %s173 = scalar_lea.vmem %s165, 32
      %v174 = vld [vmem:[%s173] ss:$2 sm:$0xff]
      %s175 = scalar_lea.vmem %s165, 64
      %v176 = vld [vmem:[%s175] ss:$2 sm:$0xff]
      %s177 = scalar_lea.vmem %s165, 96
      %v178 = vld [vmem:[%s177] ss:$2 sm:$0xff]
      %s179 = scalar_lea.vmem %s165, 128
      %v180 = vld [vmem:[%s179] ss:$2 sm:$0xff]
      %s181 = scalar_lea.vmem %s165, 160
      %v182 = vld [vmem:[%s181] ss:$2 sm:$0xff]
      %s183 = scalar_lea.vmem %s165, 192
      %v184 = vld [vmem:[%s183] ss:$2 sm:$0xff]
      %s185 = scalar_lea.vmem %s165, 224
      %v186 = vld [vmem:[%s185] ss:$2 sm:$0xff]
      %v187 = vpack.c.bf16 %v174, %v172
      %v188 = vpack.c.bf16 %v178, %v176
      %v189 = vpack.c.bf16 %v182, %v180
      %v190 = vpack.c.bf16 %v186, %v184
      %v191 = vld [vmem:[%s1] sm:$0xf]
      %v192 = vld [vmem:[%s1 + $0x4] sm:$0xf]
      %v193 = vld [vmem:[%s1 + $0x8] sm:$0xf]
      %v194 = vld [vmem:[%s1 + $0xc] sm:$0xf]
      %v195 = vld [vmem:[%s1 + $0x10] sm:$0xf]
      %v196 = vld [vmem:[%s1 + $0x14] sm:$0xf]
      %v197 = vld [vmem:[%s1 + $0x18] sm:$0xf]
      %v198 = vld [vmem:[%s1 + $0x1c] sm:$0xf]
      %v199 = vld [vmem:[%s1 + $0x20] sm:$0xf]
      %v200 = vld [vmem:[%s1 + $0x24] sm:$0xf]
      %v201 = vld [vmem:[%s1 + $0x28] sm:$0xf]
      %v202 = vld [vmem:[%s1 + $0x2c] sm:$0xf]
      %v203 = vld [vmem:[%s1 + $0x30] sm:$0xf]
      %v204 = vld [vmem:[%s1 + $0x34] sm:$0xf]
      %v205 = vld [vmem:[%s1 + $0x38] sm:$0xf]
      %v206 = vld [vmem:[%s1 + $0x3c] sm:$0xf]
      %v207 = vld [vmem:[%s2] sm:$0x1]
      %v209 = vlaneseq
      %v210 = vshrl.u32 %v209, 7
      %v211 = vsub.s32 0, %v210
      %v212 = vrot.slane %v207, %v211
      %v230 = vunpack.c.l.b16 %v191
      %v231 = vunpack.c.l.b16 %v192
      %v232 = vunpack.c.l.b16 %v193
      %v233 = vunpack.c.l.b16 %v194
      %v234 = vunpack.c.l.b16 %v195
      %v235 = vunpack.c.l.b16 %v196
      %v236 = vunpack.c.l.b16 %v197
      %v237 = vunpack.c.l.b16 %v198
      %v238 = vunpack.c.l.b16 %v199
      %v239 = vunpack.c.l.b16 %v200
      %v240 = vunpack.c.l.b16 %v201
      %v241 = vunpack.c.l.b16 %v202
      %v242 = vunpack.c.l.b16 %v203
      %v243 = vunpack.c.l.b16 %v204
      %v244 = vunpack.c.l.b16 %v205
      %v245 = vunpack.c.l.b16 %v206
      %v246 = vpack.c.b16 %v231, %v230
      %v247 = vpack.c.b16 %v233, %v232
      %v248 = vpack.c.b16 %v235, %v234
      %v249 = vpack.c.b16 %v237, %v236
      %v250 = vpack.c.b16 %v239, %v238
      %v251 = vpack.c.b16 %v241, %v240
      %v252 = vpack.c.b16 %v243, %v242
      %v253 = vpack.c.b16 %v245, %v244
      %262 = vmatprep.subr.bf16.mxu0 0
      %263 = vmatpush1.bf16.msra.mxu0 %v253
      %264 = vmatprep.subr.bf16.mxu0 0
      %265 = vmatpush1.bf16.msra.mxu0 %v252
      %266 = vmatprep.subr.bf16.mxu0 0
      %267 = vmatpush1.bf16.msra.mxu0 %v251
      %268 = vmatprep.subr.bf16.mxu0 0
      %269 = vmatpush1.bf16.msra.mxu0 %v250
      %270 = vmatprep.subr.bf16.mxu0 0
      %271 = vmatpush1.bf16.msra.mxu0 %v249
      %272 = vmatprep.subr.bf16.mxu0 0
      %273 = vmatpush1.bf16.msra.mxu0 %v248
      %274 = vmatprep.subr.bf16.mxu0 0
      %275 = vmatpush1.bf16.msra.mxu0 %v247
      %276 = vmatprep.subr.bf16.mxu0 0
      %277 = vmatpush1.bf16.msra.mxu0 %v246
      %278 = vmatprep.subr.bf16.mxu0 0
      %279 = vmatpush2.bf16.msra.mxu0 0
      %280 = vmatprep.subr.bf16.mxu0 0
      %281 = vmatpush2.bf16.msra.mxu0 0
      %282 = vmatprep.subr.bf16.mxu0 0
      %283 = vmatpush2.bf16.msra.mxu0 0
      %284 = vmatprep.subr.bf16.mxu0 0
      %285 = vmatpush2.bf16.msra.mxu0 0
      %286 = vmatprep.subr.bf16.mxu0 0
      %287 = vmatpush2.bf16.msra.mxu0 0
      %288 = vmatprep.subr.bf16.mxu0 0
      %289 = vmatpush2.bf16.msra.mxu0 0
      %290 = vmatprep.subr.bf16.mxu0 0
      %291 = vmatpush2.bf16.msra.mxu0 0
      %292 = vmatprep.subr.bf16.mxu0 0
      %293 = vmatpush2.bf16.msra.mxu0 0
      %294 = vmatprep.mubr.bf16.mxu0 0
      %295 = vmatmul.mubr.bf16.gmra.mxu0 %v187
      %v296 = vpop.f32.mrf.mxu0
      %v297 = vadd.f32 %v212, %v296
      %v298 = vpop.f32.mrf.mxu0
      %v299 = vpop.f32.mrf.mxu0
      %v300 = vadd.f32 %v212, %v299
      %v301 = vpop.f32.mrf.mxu0
      %302 = vmatprep.mubr.bf16.mxu0 0
      %303 = vmatmul.mubr.bf16.gmra.mxu0 %v188
      %v304 = vpop.f32.mrf.mxu0
      %v305 = vadd.f32 %v212, %v304
      %v306 = vpop.f32.mrf.mxu0
      %v307 = vpop.f32.mrf.mxu0
      %v308 = vadd.f32 %v212, %v307
      %v309 = vpop.f32.mrf.mxu0
      %310 = vmatprep.mubr.bf16.mxu0 0
      %311 = vmatmul.mubr.bf16.gmra.mxu0 %v189
      %v312 = vpop.f32.mrf.mxu0
      %v313 = vadd.f32 %v212, %v312
      %v314 = vpop.f32.mrf.mxu0
      %v315 = vpop.f32.mrf.mxu0
      %v316 = vadd.f32 %v212, %v315
      %v317 = vpop.f32.mrf.mxu0
      %318 = vmatprep.mubr.bf16.mxu0 0
      %319 = vmatmul.mubr.bf16.gmra.mxu0 %v190
      %v320 = vpop.f32.mrf.mxu0
      %v321 = vadd.f32 %v212, %v320
      %v322 = vpop.f32.mrf.mxu0
      %v323 = vpop.f32.mrf.mxu0
      %v324 = vadd.f32 %v212, %v323
      %v325 = vpop.f32.mrf.mxu0
      %326 = vdwg.mxu0
      %v327 = vpack.c.bf16 %v297, %v297
      %v328 = vpack.c.bf16 %v300, %v300
      %v329 = vpack.c.bf16 %v305, %v305
      %v330 = vpack.c.bf16 %v308, %v308
      %v331 = vpack.c.bf16 %v313, %v313
      %v332 = vpack.c.bf16 %v316, %v316
      %v333 = vpack.c.bf16 %v321, %v321
      %v334 = vpack.c.bf16 %v324, %v324
      %335 = vst [vmem:[%s170] sm:$0xf] %v327
      %336 = vst [vmem:[%s170 + $0x4] sm:$0xf] %v328
      %337 = vst [vmem:[%s170 + $0x8] sm:$0xf] %v329
      %338 = vst [vmem:[%s170 + $0xc] sm:$0xf] %v330
      %339 = vst [vmem:[%s170 + $0x10] sm:$0xf] %v331
      %340 = vst [vmem:[%s170 + $0x14] sm:$0xf] %v332
      %341 = vst [vmem:[%s170 + $0x18] sm:$0xf] %v333
      %342 = vst [vmem:[%s170 + $0x1c] sm:$0xf] %v334
      %p343 = scmp.lt.s32.totalorder %s14, 1
      %s344 = scalar_select %p343, %s14, 1
      %s345 = smul.addr %s344, 8
      %s346 = smul.addr %s345, 4
      %s347 = scalar_lea.vmem %s3, %s346
      // Predicated region
      $region33: #{residual_block.6} parent=31 // pred_check
        %p348 = pneg %p100
      $region34: #{residual_block.6} parent=31 // pred_check_branch
        %350 = sbr.rel (%p348) target = $region36
      $region35: #{residual_block.6} parent=31 // pred_region
        _
      $region36: #{residual_block.6} parent=31 // pred_fallthru
        _
    $region32: #{residual_block.6} parent=5 // pred_fallthru
      _
    %p351 = scmp.le.s32.totalorder 2, %s9
    // Predicated region
    $region37: #{residual_block.6} parent=5 // pred_check
      %p352 = pneg %p351
    $region38: #{residual_block.6} parent=5 // pred_check_branch
      %354 = sbr.rel (%p352) target = $region40
    $region39: #{residual_block.6} parent=5 // pred_region
      %s355 = ssub.s32 %s9, 2
      // Predicated region
      $region41: #{residual_block.6} parent=39 // pred_check
        %p356 = pneg %p106
      $region42: #{residual_block.6} parent=39 // pred_check_branch
        %358 = sbr.rel (%p356) target = $region44
      $region43: #{residual_block.6} parent=39 // pred_region
        %p359 = scmp.lt.s32.totalorder %s15, 1
        %s360 = scalar_select %p359, %s15, 1
        %s361 = smul.addr %s360, 8
        %s362 = smul.addr %s361, 4
        %s363 = scalar_lea.vmem %s3, %s362
      $region44: #{residual_block.6} parent=39 // pred_fallthru
        _
    $region40: #{residual_block.6} parent=5 // pred_fallthru
      _
  $region6: #{residual_block.6} parent=0 // loop_footer
    %s13 = sadd.s32 1, %s9
  $region7: #{residual_block.6} parent=0 // loop_footer_branch
    %8 = sbr.rel target = $region3
  $region8: #{residual_block.6} parent=0 // loop_exit
    _

// kernel: residual_block.4
$region0: #{residual_block.4}
  #allocation0 [shape = 'u32[]', space=smem, size = 0x4, offset = 0x4, fixed_abs, tag = 'smem constant byte address 0x4 - core index']
  #allocation1 [shape = 'u32[144,128]{1,0:T(1,128)}', space=vmem, size = 0x12000, scoped, tag = 'internal scratch']
  %s0 = inlined_call_operand.vmem [shape: f32[512,128], index: 0, kind: input, shape index: {}]
  %s1 = inlined_call_operand.vmem [shape: bf16[128,128], index: 1, kind: input, shape index: {}]
  %s2 = inlined_call_operand.vmem [shape: f32[1,128], index: 2, kind: input, shape index: {}]
  %s3 = inlined_call_operand.vmem [shape: bf16[512,128], index: 3, kind: output, shape index: {}]
  %s4 = sld [smem:[#allocation0]]
  $region45: #{residual_block.4} parent=0
    _
  %s6 = ssub.s32 1, %s4
  %s7 = scalar_select 0, %s6, %s4
  loop: start=0, step=1, limit=4
  $region2: #{residual_block.4} parent=0 // loop_pre_header
    _
  $region3: #{residual_block.4} parent=0 // loop_header
    %s9 = sphi 0, %s13
    %p10 = scmp.ge.s32.totalorder %s9, 4
    %s19 = sphi 0, %s21
    %s22 = sphi 0, %s19
    %s23 = sphi 0, %s22
    %s39 = sphi 0, %s23
    %s43 = sphi 0, %s43
    %s45 = sphi 0, %s43
    %s46 = sphi 0, %s45
    %s60 = sphi 0, %s46
    %s64 = sphi 0, %s64
    %s66 = sphi 0, %s64
    %s67 = sphi 0, %s66
    %s81 = sphi 0, %s67
    %s87 = sphi 0, %s89
    %s90 = sphi 0, %s87
    %s91 = sphi 0, %s90
    %s107 = sphi 0, %s91
  $region4: #{residual_block.4} parent=0 // loop_header_branch
    %12 = sbr.rel (%p10) target = $region8
  $region5: #{residual_block.4} parent=0 // loop_body
    %s14 = ssub.s32 %s9, 1
    %s15 = ssub.s32 %s9, 2
    %s16 = sadd.s32 %s9, 1
    %s17 = ssub.s32 %s9, %s16
    %p18 = scmp.eq.s32.totalorder %s17, 0
    %s20 = sadd.s32 %s19, 1
    %s21 = scalar_select %p18, %s19, %s20
    %p24 = pneg %p18
    %p25 = scmp.eq.s32.totalorder %s9, 1
    %p26 = por %p24, %p25
    %p27 = scmp.ne.s32.totalorder %s19, %s22
    %p28 = scmp.eq.s32.totalorder %s9, 0
    %p29 = por %p27, %p28
    %p30 = scmp.ne.s32.totalorder %s19, %s22
    %p31 = scmp.eq.s32.totalorder %s14, 1
    %p32 = por %p30, %p31
    %p33 = scmp.ne.s32.totalorder %s22, %s23
    %p34 = scmp.eq.s32.totalorder %s14, 0
    %p35 = por %p33, %p34
    %p36 = scmp.ne.s32.totalorder %s22, %s23
    %p37 = scmp.eq.s32.totalorder %s15, 1
    %p38 = por %p36, %p37
    %p40 = scmp.ne.s32.totalorder %s23, %s39
    %p41 = scmp.eq.s32.totalorder %s15, 0
    %p42 = por %p40, %p41
    %s44 = sadd.s32 %s43, 1
    %p47 = scmp.eq.s32.totalorder %s9, 1
    %p48 = scmp.ne.s32.totalorder %s43, %s45
    %p49 = scmp.eq.s32.totalorder %s9, 0
    %p50 = por %p48, %p49
    %p51 = scmp.ne.s32.totalorder %s43, %s45
    %p52 = scmp.eq.s32.totalorder %s14, 1
    %p53 = por %p51, %p52
    %p54 = scmp.ne.s32.totalorder %s45, %s46
    %p55 = scmp.eq.s32.totalorder %s14, 0
    %p56 = por %p54, %p55
    %p57 = scmp.ne.s32.totalorder %s45, %s46
    %p58 = scmp.eq.s32.totalorder %s15, 1
    %p59 = por %p57, %p58
    %p61 = scmp.ne.s32.totalorder %s46, %s60
    %p62 = scmp.eq.s32.totalorder %s15, 0
    %p63 = por %p61, %p62
    %s65 = sadd.s32 %s64, 1
    %p68 = scmp.eq.s32.totalorder %s9, 1
    %p69 = scmp.ne.s32.totalorder %s64, %s66
    %p70 = scmp.eq.s32.totalorder %s9, 0
    %p71 = por %p69, %p70
    %p72 = scmp.ne.s32.totalorder %s64, %s66
    %p73 = scmp.eq.s32.totalorder %s14, 1
    %p74 = por %p72, %p73
    %p75 = scmp.ne.s32.totalorder %s66, %s67
    %p76 = scmp.eq.s32.totalorder %s14, 0
    %p77 = por %p75, %p76
    %p78 = scmp.ne.s32.totalorder %s66, %s67
    %p79 = scmp.eq.s32.totalorder %s15, 1
    %p80 = por %p78, %p79
    %p82 = scmp.ne.s32.totalorder %s67, %s81
    %p83 = scmp.eq.s32.totalorder %s15, 0
    %p84 = por %p82, %p83
    %s85 = ssub.s32 %s9, %s16
    %p86 = scmp.eq.s32.totalorder %s85, 0
    %s88 = sadd.s32 %s87, 1
    %s89 = scalar_select %p86, %s87, %s88
    %p92 = pneg %p86
    %p93 = scmp.eq.s32.totalorder %s9, 1
    %p94 = por %p92, %p93
    %p95 = scmp.ne.s32.totalorder %s87, %s90
    %p96 = scmp.eq.s32.totalorder %s9, 0
    %p97 = por %p95, %p96
    %p98 = scmp.ne.s32.totalorder %s87, %s90
    %p99 = scmp.eq.s32.totalorder %s14, 1
    %p100 = por %p98, %p99
    %p101 = scmp.ne.s32.totalorder %s90, %s91
    %p102 = scmp.eq.s32.totalorder %s14, 0
    %p103 = por %p101, %p102
    %p104 = scmp.ne.s32.totalorder %s90, %s91
    %p105 = scmp.eq.s32.totalorder %s15, 1
    %p106 = por %p104, %p105
    %p108 = scmp.ne.s32.totalorder %s91, %s107
    %p109 = scmp.eq.s32.totalorder %s15, 0
    %p110 = por %p108, %p109
    %p111 = scmp.le.s32.totalorder 1, %s9
    %p112 = scmp.lt.s32.totalorder %s9, 3
    %p113 = pnand %p111, %p112
    %p114 = pneg %p113
    // Predicated region
    $region9: #{residual_block.4} parent=5 // pred_check
      _
    $region10: #{residual_block.4} parent=5 // pred_check_branch
      %116 = sbr.rel (%p113) target = $region12
    $region11: #{residual_block.4} parent=5 // pred_region
      %s117 = ssub.s32 %s9, 1
      // Predicated region
      $region13: #{residual_block.4} parent=11 // pred_check
        %p118 = pneg %p56
      $region14: #{residual_block.4} parent=11 // pred_check_branch
        %120 = sbr.rel (%p118) target = $region16
      $region15: #{residual_block.4} parent=11 // pred_region
        _
      $region16: #{residual_block.4} parent=11 // pred_fallthru
        _
      // Predicated region
      $region17: #{residual_block.4} parent=11 // pred_check
        %p121 = pneg %p77
      $region18: #{residual_block.4} parent=11 // pred_check_branch
        %123 = sbr.rel (%p121) target = $region20
      $region19: #{residual_block.4} parent=11 // pred_region
        _
      $region20: #{residual_block.4} parent=11 // pred_fallthru
        _
    $region12: #{residual_block.4} parent=5 // pred_fallthru
      _
    %p124 = scmp.lt.s32.totalorder %s9, 2
    // Predicated region
    $region21: #{residual_block.4} parent=5 // pred_check
      %p125 = pneg %p124
    $region22: #{residual_block.4} parent=5 // pred_check_branch
      %127 = sbr.rel (%p125) target = $region24
    $region23: #{residual_block.4} parent=5 // pred_region
      // Predicated region
      $region25: #{residual_block.4} parent=23 // pred_check
        %p128 = pneg %p29
      $region26: #{residual_block.4} parent=23 // pred_check_branch
        %130 = sbr.rel (%p128) target = $region28
      $region27: #{residual_block.4} parent=23 // pred_region
        %s131 = smul.u32 32, %s9
        %p132 = scmp.lt.s32.totalorder %s131, 63
        %s133 = scalar_select %p132, %s131, 63
        %s134 = smul.addr %s133, 8
        %s135 = scalar_lea.vmem %s0, %s134
        %s136 = smul.u32 32, %s9
      $region28: #{residual_block.4} parent=23 // pred_fallthru
        _
    $region24: #{residual_block.4} parent=5 // pred_fallthru
      _
    %p137 = scmp.le.s32.totalorder 1, %s9
    %p138 = scmp.lt.s32.totalorder %s9, 3
    %p139 = pnand %p137, %p138
    %p140 = pneg %p139
    // Predicated region
    $region29: #{residual_block.4} parent=5 // pred_check
      _
    $region30: #{residual_block.4} parent=5 // pred_check_branch
      %142 = sbr.rel (%p139) target = $region32
    $region31: #{residual_block.4} parent=5 // pred_region
      %s143 = ssub.s32 %s9, 1
      %s144 = smul.u32 32, %s14
      %p145 = scmp.lt.s32.totalorder %s144, 63
      %s146 = scalar_select %p145, %s144, 63
      %s147 = smul.addr %s146, 8
      %s148 = scalar_lea.vmem %s0, %s147
      %p149 = pneg %p35
      %p150 = pneg %p32
      %p151 = pneg %p56
      %p152 = pneg %p53
      %p153 = pneg %p77
      %p154 = pneg %p74
      %p155 = pneg %p103
      %p156 = pneg %p100
      %s157 = smul.u32 32, %s14
      %p158 = scmp.lt.s32.totalorder %s157, 63
      %s159 = scalar_select %p158, %s157, 63
      %s160 = smul.addr %s159, 4
      %s161 = scalar_lea.vmem %s3, %s160
      %s162 = smul.u32 32, %s14
      %p163 = scmp.lt.s32.totalorder %s162, 63
      %s164 = scalar_select %p163, %s162, 63
      %s165 = smul.addr %s164, 8
      %s166 = scalar_lea.vmem %s0, %s165
      %s167 = smul.u32 32, %s14
      %s168 = smul.u32 32, %s14
      %p169 = scmp.lt.s32.totalorder %s168, 63
      %s170 = scalar_select %p169, %s168, 63
      %s171 = smul.addr %s170, 4
      %s172 = scalar_lea.vmem %s3, %s171
      %s173 = smul.u32 32, %s14
      %v175 = vld [vmem:[%s166] sm:$0xff]
      %v176 = vld [vmem:[%s166 + $0x8] sm:$0xff]
      %v177 = vld [vmem:[%s166 + $0x10] sm:$0xff]
      %v178 = vld [vmem:[%s166 + $0x18] sm:$0xff]
      %v179 = vld [vmem:[%s166 + $0x20] sm:$0xff]
      %v180 = vld [vmem:[%s166 + $0x28] sm:$0xff]
      %v181 = vld [vmem:[%s166 + $0x30] sm:$0xff]
      %v182 = vld [vmem:[%s166 + $0x38] sm:$0xff]
      %v183 = vld [vmem:[%s166 + $0x40] sm:$0xff]
      %v184 = vld [vmem:[%s166 + $0x48] sm:$0xff]
      %v185 = vld [vmem:[%s166 + $0x50] sm:$0xff]
      %v186 = vld [vmem:[%s166 + $0x58] sm:$0xff]
      %v187 = vld [vmem:[%s166 + $0x60] sm:$0xff]
      %v188 = vld [vmem:[%s166 + $0x68] sm:$0xff]
      %v189 = vld [vmem:[%s166 + $0x70] sm:$0xff]
      %v190 = vld [vmem:[%s166 + $0x78] sm:$0xff]
      %v191 = vld [vmem:[%s166 + $0x80] sm:$0xff]
      %v192 = vld [vmem:[%s166 + $0x88] sm:$0xff]
      %v193 = vld [vmem:[%s166 + $0x90] sm:$0xff]
      %v194 = vld [vmem:[%s166 + $0x98] sm:$0xff]
      %v195 = vld [vmem:[%s166 + $0xa0] sm:$0xff]
      %v196 = vld [vmem:[%s166 + $0xa8] sm:$0xff]
      %v197 = vld [vmem:[%s166 + $0xb0] sm:$0xff]
      %v198 = vld [vmem:[%s166 + $0xb8] sm:$0xff]
      %v199 = vld [vmem:[%s166 + $0xc0] sm:$0xff]
      %v200 = vld [vmem:[%s166 + $0xc8] sm:$0xff]
      %v201 = vld [vmem:[%s166 + $0xd0] sm:$0xff]
      %v202 = vld [vmem:[%s166 + $0xd8] sm:$0xff]
      %v203 = vld [vmem:[%s166 + $0xe0] sm:$0xff]
      %v204 = vld [vmem:[%s166 + $0xe8] sm:$0xff]
      %v205 = vld [vmem:[%s166 + $0xf0] sm:$0xff]
      %v206 = vld [vmem:[%s166 + $0xf8] sm:$0xff]
      %v207 = vpack.c.bf16 %v176, %v175
      %v208 = vpack.c.bf16 %v178, %v177
      %v209 = vpack.c.bf16 %v180, %v179
      %v210 = vpack.c.bf16 %v182, %v181
      %v211 = vpack.c.bf16 %v184, %v183
      %v212 = vpack.c.bf16 %v186, %v185
      %v213 = vpack.c.bf16 %v188, %v187
      %v214 = vpack.c.bf16 %v190, %v189
      %v215 = vpack.c.bf16 %v192, %v191
      %v216 = vpack.c.bf16 %v194, %v193
      %v217 = vpack.c.bf16 %v196, %v195
      %v218 = vpack.c.bf16 %v198, %v197
      %v219 = vpack.c.bf16 %v200, %v199
      %v220 = vpack.c.bf16 %v202, %v201
      %v221 = vpack.c.bf16 %v204, %v203
      %v222 = vpack.c.bf16 %v206, %v205
      %v223 = vld [vmem:[%s1] sm:$0xf]
      %v224 = vld [vmem:[%s1 + $0x4] sm:$0xf]
      %v225 = vld [vmem:[%s1 + $0x8] sm:$0xf]
      %v226 = vld [vmem:[%s1 + $0xc] sm:$0xf]
      %v227 = vld [vmem:[%s1 + $0x10] sm:$0xf]
      %v228 = vld [vmem:[%s1 + $0x14] sm:$0xf]
      %v229 = vld [vmem:[%s1 + $0x18] sm:$0xf]
      %v230 = vld [vmem:[%s1 + $0x1c] sm:$0xf]
      %v231 = vld [vmem:[%s1 + $0x20] sm:$0xf]
      %v232 = vld [vmem:[%s1 + $0x24] sm:$0xf]
      %v233 = vld [vmem:[%s1 + $0x28] sm:$0xf]
      %v234 = vld [vmem:[%s1 + $0x2c] sm:$0xf]
      %v235 = vld [vmem:[%s1 + $0x30] sm:$0xf]
      %v236 = vld [vmem:[%s1 + $0x34] sm:$0xf]
      %v237 = vld [vmem:[%s1 + $0x38] sm:$0xf]
      %v238 = vld [vmem:[%s1 + $0x3c] sm:$0xf]
      %v239 = vld [vmem:[%s2] sm:$0x1]
      %v241 = vlaneseq
      %v242 = vshrl.u32 %v241, 7
      %v243 = vsub.s32 0, %v242
      %v244 = vrot.slane %v239, %v243
      %v262 = vunpack.c.l.b16 %v223
      %v263 = vunpack.c.l.b16 %v224
      %v264 = vunpack.c.l.b16 %v225
      %v265 = vunpack.c.l.b16 %v226
      %v266 = vunpack.c.l.b16 %v227
      %v267 = vunpack.c.l.b16 %v228
      %v268 = vunpack.c.l.b16 %v229
      %v269 = vunpack.c.l.b16 %v230
      %v270 = vunpack.c.l.b16 %v231
      %v271 = vunpack.c.l.b16 %v232
      %v272 = vunpack.c.l.b16 %v233
      %v273 = vunpack.c.l.b16 %v234
      %v274 = vunpack.c.l.b16 %v235
      %v275 = vunpack.c.l.b16 %v236
      %v276 = vunpack.c.l.b16 %v237
      %v277 = vunpack.c.l.b16 %v238
      %v278 = vpack.c.b16 %v263, %v262
      %v279 = vpack.c.b16 %v265, %v264
      %v280 = vpack.c.b16 %v267, %v266
      %v281 = vpack.c.b16 %v269, %v268
      %v282 = vpack.c.b16 %v271, %v270
      %v283 = vpack.c.b16 %v273, %v272
      %v284 = vpack.c.b16 %v275, %v274
      %v285 = vpack.c.b16 %v277, %v276
      %294 = vmatprep.subr.bf16.mxu0 0
      %295 = vmatpush1.bf16.msra.mxu0 %v285
      %296 = vmatprep.subr.bf16.mxu0 0
      %297 = vmatpush1.bf16.msra.mxu0 %v284
      %298 = vmatprep.subr.bf16.mxu0 0
      %299 = vmatpush1.bf16.msra.mxu0 %v283
      %300 = vmatprep.subr.bf16.mxu0 0
      %301 = vmatpush1.bf16.msra.mxu0 %v282
      %302 = vmatprep.subr.bf16.mxu0 0
      %303 = vmatpush1.bf16.msra.mxu0 %v281
      %304 = vmatprep.subr.bf16.mxu0 0
      %305 = vmatpush1.bf16.msra.mxu0 %v280
      %306 = vmatprep.subr.bf16.mxu0 0
      %307 = vmatpush1.bf16.msra.mxu0 %v279
      %308 = vmatprep.subr.bf16.mxu0 0
      %309 = vmatpush1.bf16.msra.mxu0 %v278
      %310 = vmatprep.subr.bf16.mxu0 0
      %311 = vmatpush2.bf16.msra.mxu0 0
      %312 = vmatprep.subr.bf16.mxu0 0
      %313 = vmatpush2.bf16.msra.mxu0 0
      %314 = vmatprep.subr.bf16.mxu0 0
      %315 = vmatpush2.bf16.msra.mxu0 0
      %316 = vmatprep.subr.bf16.mxu0 0
      %317 = vmatpush2.bf16.msra.mxu0 0
      %318 = vmatprep.subr.bf16.mxu0 0
      %319 = vmatpush2.bf16.msra.mxu0 0
      %320 = vmatprep.subr.bf16.mxu0 0
      %321 = vmatpush2.bf16.msra.mxu0 0
      %322 = vmatprep.subr.bf16.mxu0 0
      %323 = vmatpush2.bf16.msra.mxu0 0
      %324 = vmatprep.subr.bf16.mxu0 0
      %325 = vmatpush2.bf16.msra.mxu0 0
      %326 = vmatprep.mubr.bf16.mxu0 0
      %327 = vmatmul.mubr.bf16.gmra.mxu0 %v207
      %v328 = vpop.f32.mrf.mxu0
      %v329 = vadd.f32 %v244, %v328
      %v330 = vpop.f32.mrf.mxu0
      %v331 = vpop.f32.mrf.mxu0
      %v332 = vadd.f32 %v244, %v331
      %v333 = vpop.f32.mrf.mxu0
      %334 = vmatprep.mubr.bf16.mxu0 0
      %335 = vmatmul.mubr.bf16.gmra.mxu0 %v208
      %v336 = vpop.f32.mrf.mxu0
      %v337 = vadd.f32 %v244, %v336
      %v338 = vpop.f32.mrf.mxu0
      %v339 = vpop.f32.mrf.mxu0
      %v340 = vadd.f32 %v244, %v339
      %v341 = vpop.f32.mrf.mxu0
      %342 = vmatprep.mubr.bf16.mxu0 0
      %343 = vmatmul.mubr.bf16.gmra.mxu0 %v209
      %v344 = vpop.f32.mrf.mxu0
      %v345 = vadd.f32 %v244, %v344
      %v346 = vpop.f32.mrf.mxu0
      %v347 = vpop.f32.mrf.mxu0
      %v348 = vadd.f32 %v244, %v347
      %v349 = vpop.f32.mrf.mxu0
      %350 = vmatprep.mubr.bf16.mxu0 0
      %351 = vmatmul.mubr.bf16.gmra.mxu0 %v210
      %v352 = vpop.f32.mrf.mxu0
      %v353 = vadd.f32 %v244, %v352
      %v354 = vpop.f32.mrf.mxu0
      %v355 = vpop.f32.mrf.mxu0
      %v356 = vadd.f32 %v244, %v355
      %v357 = vpop.f32.mrf.mxu0
      %358 = vmatprep.mubr.bf16.mxu0 0
      %359 = vmatmul.mubr.bf16.gmra.mxu0 %v211
      %v360 = vpop.f32.mrf.mxu0
      %v361 = vadd.f32 %v244, %v360
      %v362 = vpop.f32.mrf.mxu0
      %v363 = vpop.f32.mrf.mxu0
      %v364 = vadd.f32 %v244, %v363
      %v365 = vpop.f32.mrf.mxu0
      %366 = vmatprep.mubr.bf16.mxu0 0
      %367 = vmatmul.mubr.bf16.gmra.mxu0 %v212
      %v368 = vpop.f32.mrf.mxu0
      %v369 = vadd.f32 %v244, %v368
      %v370 = vpop.f32.mrf.mxu0
      %v371 = vpop.f32.mrf.mxu0
      %v372 = vadd.f32 %v244, %v371
      %v373 = vpop.f32.mrf.mxu0
      %374 = vmatprep.mubr.bf16.mxu0 0
      %375 = vmatmul.mubr.bf16.gmra.mxu0 %v213
      %v376 = vpop.f32.mrf.mxu0
      %v377 = vadd.f32 %v244, %v376
      %v378 = vpop.f32.mrf.mxu0
      %v379 = vpop.f32.mrf.mxu0
      %v380 = vadd.f32 %v244, %v379
      %v381 = vpop.f32.mrf.mxu0
      %382 = vmatprep.mubr.bf16.mxu0 0
      %383 = vmatmul.mubr.bf16.gmra.mxu0 %v214
      %v384 = vpop.f32.mrf.mxu0
      %v385 = vadd.f32 %v244, %v384
      %v386 = vpop.f32.mrf.mxu0
      %v387 = vpop.f32.mrf.mxu0
      %v388 = vadd.f32 %v244, %v387
      %v389 = vpop.f32.mrf.mxu0
      %390 = vmatprep.mubr.bf16.mxu0 0
      %391 = vmatmul.mubr.bf16.gmra.mxu0 %v215
      %v392 = vpop.f32.mrf.mxu0
      %v393 = vadd.f32 %v244, %v392
      %v394 = vpop.f32.mrf.mxu0
      %v395 = vpop.f32.mrf.mxu0
      %v396 = vadd.f32 %v244, %v395
      %v397 = vpop.f32.mrf.mxu0
      %398 = vmatprep.mubr.bf16.mxu0 0
      %399 = vmatmul.mubr.bf16.gmra.mxu0 %v216
      %v400 = vpop.f32.mrf.mxu0
      %v401 = vadd.f32 %v244, %v400
      %v402 = vpop.f32.mrf.mxu0
      %v403 = vpop.f32.mrf.mxu0
      %v404 = vadd.f32 %v244, %v403
      %v405 = vpop.f32.mrf.mxu0
      %406 = vmatprep.mubr.bf16.mxu0 0
      %407 = vmatmul.mubr.bf16.gmra.mxu0 %v217
      %v408 = vpop.f32.mrf.mxu0
      %v409 = vadd.f32 %v244, %v408
      %v410 = vpop.f32.mrf.mxu0
      %v411 = vpop.f32.mrf.mxu0
      %v412 = vadd.f32 %v244, %v411
      %v413 = vpop.f32.mrf.mxu0
      %414 = vmatprep.mubr.bf16.mxu0 0
      %415 = vmatmul.mubr.bf16.gmra.mxu0 %v218
      %v416 = vpop.f32.mrf.mxu0
      %v417 = vadd.f32 %v244, %v416
      %v418 = vpop.f32.mrf.mxu0
      %v419 = vpop.f32.mrf.mxu0
      %v420 = vadd.f32 %v244, %v419
      %v421 = vpop.f32.mrf.mxu0
      %422 = vmatprep.mubr.bf16.mxu0 0
      %423 = vmatmul.mubr.bf16.gmra.mxu0 %v219
      %v424 = vpop.f32.mrf.mxu0
      %v425 = vadd.f32 %v244, %v424
      %v426 = vpop.f32.mrf.mxu0
      %v427 = vpop.f32.mrf.mxu0
      %v428 = vadd.f32 %v244, %v427
      %v429 = vpop.f32.mrf.mxu0
      %430 = vmatprep.mubr.bf16.mxu0 0
      %431 = vmatmul.mubr.bf16.gmra.mxu0 %v220
      %v432 = vpop.f32.mrf.mxu0
      %v433 = vadd.f32 %v244, %v432
      %v434 = vpop.f32.mrf.mxu0
      %v435 = vpop.f32.mrf.mxu0
      %v436 = vadd.f32 %v244, %v435
      %v437 = vpop.f32.mrf.mxu0
      %438 = vmatprep.mubr.bf16.mxu0 0
      %439 = vmatmul.mubr.bf16.gmra.mxu0 %v221
      %v440 = vpop.f32.mrf.mxu0
      %v441 = vadd.f32 %v244, %v440
      %v442 = vpop.f32.mrf.mxu0
      %v443 = vpop.f32.mrf.mxu0
      %v444 = vadd.f32 %v244, %v443
      %v445 = vpop.f32.mrf.mxu0
      %446 = vmatprep.mubr.bf16.mxu0 0
      %447 = vmatmul.mubr.bf16.gmra.mxu0 %v222
      %v448 = vpop.f32.mrf.mxu0
      %v449 = vadd.f32 %v244, %v448
      %v450 = vpop.f32.mrf.mxu0
      %v451 = vpop.f32.mrf.mxu0
      %v452 = vadd.f32 %v244, %v451
      %v453 = vpop.f32.mrf.mxu0
      %454 = vdwg.mxu0
      %v455 = vmax.f32 %v329, 0.0
      %v456 = vmax.f32 %v332, 0.0
      %v457 = vmax.f32 %v337, 0.0
      %v458 = vmax.f32 %v340, 0.0
      %v459 = vmax.f32 %v345, 0.0
      %v460 = vmax.f32 %v348, 0.0
      %v461 = vmax.f32 %v353, 0.0
      %v462 = vmax.f32 %v356, 0.0
      %v463 = vmax.f32 %v361, 0.0
      %v464 = vmax.f32 %v364, 0.0
      %v465 = vmax.f32 %v369, 0.0
      %v466 = vmax.f32 %v372, 0.0
      %v467 = vmax.f32 %v377, 0.0
      %v468 = vmax.f32 %v380, 0.0
      %v469 = vmax.f32 %v385, 0.0
      %v470 = vmax.f32 %v388, 0.0
      %v471 = vmax.f32 %v393, 0.0
      %v472 = vmax.f32 %v396, 0.0
      %v473 = vmax.f32 %v401, 0.0
      %v474 = vmax.f32 %v404, 0.0
      %v475 = vmax.f32 %v409, 0.0
      %v476 = vmax.f32 %v412, 0.0
      %v477 = vmax.f32 %v417, 0.0
      %v478 = vmax.f32 %v420, 0.0
      %v479 = vmax.f32 %v425, 0.0
      %v480 = vmax.f32 %v428, 0.0
      %v481 = vmax.f32 %v433, 0.0
      %v482 = vmax.f32 %v436, 0.0
      %v483 = vmax.f32 %v441, 0.0
      %v484 = vmax.f32 %v444, 0.0
      %v485 = vmax.f32 %v449, 0.0
      %v486 = vmax.f32 %v452, 0.0
      %v487 = vpack.c.bf16 %v456, %v455
      %v488 = vpack.c.bf16 %v458, %v457
      %v489 = vpack.c.bf16 %v460, %v459
      %v490 = vpack.c.bf16 %v462, %v461
      %v491 = vpack.c.bf16 %v464, %v463
      %v492 = vpack.c.bf16 %v466, %v465
      %v493 = vpack.c.bf16 %v468, %v467
      %v494 = vpack.c.bf16 %v470, %v469
      %v495 = vpack.c.bf16 %v472, %v471
      %v496 = vpack.c.bf16 %v474, %v473
      %v497 = vpack.c.bf16 %v476, %v475
      %v498 = vpack.c.bf16 %v478, %v477
      %v499 = vpack.c.bf16 %v480, %v479
      %v500 = vpack.c.bf16 %v482, %v481
      %v501 = vpack.c.bf16 %v484, %v483
      %v502 = vpack.c.bf16 %v486, %v485
      %v519 = vunpack.c.l.b16 %v487
      %v520 = vunpack.c.h.b16 %v487
      %v521 = vunpack.c.l.b16 %v488
      %v522 = vunpack.c.h.b16 %v488
      %v523 = vunpack.c.l.b16 %v489
      %v524 = vunpack.c.h.b16 %v489
      %v525 = vunpack.c.l.b16 %v490
      %v526 = vunpack.c.h.b16 %v490
      %v527 = vunpack.c.l.b16 %v491
      %v528 = vunpack.c.h.b16 %v491
      %v529 = vunpack.c.l.b16 %v492
      %v530 = vunpack.c.h.b16 %v492
      %v531 = vunpack.c.l.b16 %v493
      %v532 = vunpack.c.h.b16 %v493
      %v533 = vunpack.c.l.b16 %v494
      %v534 = vunpack.c.h.b16 %v494
      %v535 = vunpack.c.l.b16 %v495
      %v536 = vunpack.c.h.b16 %v495
      %v537 = vunpack.c.l.b16 %v496
      %v538 = vunpack.c.h.b16 %v496
      %v539 = vunpack.c.l.b16 %v497
      %v540 = vunpack.c.h.b16 %v497
      %v541 = vunpack.c.l.b16 %v498
      %v542 = vunpack.c.h.b16 %v498
      %v543 = vunpack.c.l.b16 %v499
      %v544 = vunpack.c.h.b16 %v499
      %v545 = vunpack.c.l.b16 %v500
      %v546 = vunpack.c.h.b16 %v500
      %v547 = vunpack.c.l.b16 %v501
      %v548 = vunpack.c.h.b16 %v501
      %v549 = vunpack.c.l.b16 %v502
      %v550 = vunpack.c.h.b16 %v502
      %v551 = vpack.c.b16 %v519, %v519
      %v552 = vpack.c.b16 %v520, %v520
      %v553 = vpack.c.b16 %v521, %v521
      %v554 = vpack.c.b16 %v522, %v522
      %v555 = vpack.c.b16 %v523, %v523
      %v556 = vpack.c.b16 %v524, %v524
      %v557 = vpack.c.b16 %v525, %v525
      %v558 = vpack.c.b16 %v526, %v526
      %v559 = vpack.c.b16 %v527, %v527
      %v560 = vpack.c.b16 %v528, %v528
      %v561 = vpack.c.b16 %v529, %v529
      %v562 = vpack.c.b16 %v530, %v530
      %v563 = vpack.c.b16 %v531, %v531
      %v564 = vpack.c.b16 %v532, %v532
      %v565 = vpack.c.b16 %v533, %v533
      %v566 = vpack.c.b16 %v534, %v534
      %v567 = vpack.c.b16 %v535, %v535
      %v568 = vpack.c.b16 %v536, %v536
      %v569 = vpack.c.b16 %v537, %v537
      %v570 = vpack.c.b16 %v538, %v538
      %v571 = vpack.c.b16 %v539, %v539
      %v572 = vpack.c.b16 %v540, %v540
      %v573 = vpack.c.b16 %v541, %v541
      %v574 = vpack.c.b16 %v542, %v542
      %v575 = vpack.c.b16 %v543, %v543
      %v576 = vpack.c.b16 %v544, %v544
      %v577 = vpack.c.b16 %v545, %v545
      %v578 = vpack.c.b16 %v546, %v546
      %v579 = vpack.c.b16 %v547, %v547
      %v580 = vpack.c.b16 %v548, %v548
      %v581 = vpack.c.b16 %v549, %v549
      %v582 = vpack.c.b16 %v550, %v550
      %615 = vst [vmem:[%s172] sm:$0xf] %v551
      %616 = vst [vmem:[%s172 + $0x4] sm:$0xf] %v552
      %617 = vst [vmem:[%s172 + $0x8] sm:$0xf] %v553
      %618 = vst [vmem:[%s172 + $0xc] sm:$0xf] %v554
      %619 = vst [vmem:[%s172 + $0x10] sm:$0xf] %v555
      %620 = vst [vmem:[%s172 + $0x14] sm:$0xf] %v556
      %621 = vst [vmem:[%s172 + $0x18] sm:$0xf] %v557
      %622 = vst [vmem:[%s172 + $0x1c] sm:$0xf] %v558
      %623 = vst [vmem:[%s172 + $0x20] sm:$0xf] %v559
      %624 = vst [vmem:[%s172 + $0x24] sm:$0xf] %v560
      %625 = vst [vmem:[%s172 + $0x28] sm:$0xf] %v561
      %626 = vst [vmem:[%s172 + $0x2c] sm:$0xf] %v562
      %627 = vst [vmem:[%s172 + $0x30] sm:$0xf] %v563
      %628 = vst [vmem:[%s172 + $0x34] sm:$0xf] %v564
      %629 = vst [vmem:[%s172 + $0x38] sm:$0xf] %v565
      %630 = vst [vmem:[%s172 + $0x3c] sm:$0xf] %v566
      %631 = vst [vmem:[%s172 + $0x40] sm:$0xf] %v567
      %632 = vst [vmem:[%s172 + $0x44] sm:$0xf] %v568
      %633 = vst [vmem:[%s172 + $0x48] sm:$0xf] %v569
      %634 = vst [vmem:[%s172 + $0x4c] sm:$0xf] %v570
      %635 = vst [vmem:[%s172 + $0x50] sm:$0xf] %v571
      %636 = vst [vmem:[%s172 + $0x54] sm:$0xf] %v572
      %637 = vst [vmem:[%s172 + $0x58] sm:$0xf] %v573
      %638 = vst [vmem:[%s172 + $0x5c] sm:$0xf] %v574
      %639 = vst [vmem:[%s172 + $0x60] sm:$0xf] %v575
      %640 = vst [vmem:[%s172 + $0x64] sm:$0xf] %v576
      %641 = vst [vmem:[%s172 + $0x68] sm:$0xf] %v577
      %642 = vst [vmem:[%s172 + $0x6c] sm:$0xf] %v578
      %643 = vst [vmem:[%s172 + $0x70] sm:$0xf] %v579
      %644 = vst [vmem:[%s172 + $0x74] sm:$0xf] %v580
      %645 = vst [vmem:[%s172 + $0x78] sm:$0xf] %v581
      %646 = vst [vmem:[%s172 + $0x7c] sm:$0xf] %v582
      %s647 = smul.u32 32, %s14
      %p648 = scmp.lt.s32.totalorder %s647, 63
      %s649 = scalar_select %p648, %s647, 63
      %s650 = smul.addr %s649, 4
      %s651 = scalar_lea.vmem %s3, %s650
      // Predicated region
      $region33: #{residual_block.4} parent=31 // pred_check
        %p652 = pneg %p100
      $region34: #{residual_block.4} parent=31 // pred_check_branch
        %654 = sbr.rel (%p652) target = $region36
      $region35: #{residual_block.4} parent=31 // pred_region
        %s655 = smul.u32 32, %s14
      $region36: #{residual_block.4} parent=31 // pred_fallthru
        _
    $region32: #{residual_block.4} parent=5 // pred_fallthru
      _
    %p656 = scmp.le.s32.totalorder 2, %s9
    // Predicated region
    $region37: #{residual_block.4} parent=5 // pred_check
      %p657 = pneg %p656
    $region38: #{residual_block.4} parent=5 // pred_check_branch
      %659 = sbr.rel (%p657) target = $region40
    $region39: #{residual_block.4} parent=5 // pred_region
      %s660 = ssub.s32 %s9, 2
      // Predicated region
      $region41: #{residual_block.4} parent=39 // pred_check
        %p661 = pneg %p106
      $region42: #{residual_block.4} parent=39 // pred_check_branch
        %663 = sbr.rel (%p661) target = $region44
      $region43: #{residual_block.4} parent=39 // pred_region
        %s664 = smul.u32 32, %s15
        %p665 = scmp.lt.s32.totalorder %s664, 63
        %s666 = scalar_select %p665, %s664, 63
        %s667 = smul.addr %s666, 4
        %s668 = scalar_lea.vmem %s3, %s667
      $region44: #{residual_block.4} parent=39 // pred_fallthru
        _
    $region40: #{residual_block.4} parent=5 // pred_fallthru
      _
  $region6: #{residual_block.4} parent=0 // loop_footer
    %s13 = sadd.s32 1, %s9
  $region7: #{residual_block.4} parent=0 // loop_footer_branch
    %8 = sbr.rel target = $region3
  $region8: #{residual_block.4} parent=0 // loop_exit
    _

// kernel: residual_block.7
$region0: #{residual_block.7}
  #allocation0 [shape = 'u32[]', space=smem, size = 0x4, offset = 0x4, fixed_abs, tag = 'smem constant byte address 0x4 - core index']
  #allocation1 [shape = 'u32[144,128]{1,0:T(1,128)}', space=vmem, size = 0x12000, scoped, tag = 'internal scratch']
  %s0 = inlined_call_operand.vmem [shape: bf16[128,128], index: 0, kind: input, shape index: {}]
  %s1 = inlined_call_operand.vmem [shape: bf16[128,128], index: 1, kind: input, shape index: {}]
  %s2 = inlined_call_operand.vmem [shape: f32[1,128], index: 2, kind: input, shape index: {}]
  %s3 = inlined_call_operand.vmem [shape: bf16[128,128], index: 3, kind: input, shape index: {}]
  %s4 = inlined_call_operand.vmem [shape: f32[128,128], index: 4, kind: output, shape index: {}]
  %s5 = sld [smem:[#allocation0]]
  $region49: #{residual_block.7} parent=0
    _
  %s7 = ssub.s32 1, %s5
  %s8 = scalar_select 0, %s7, %s5
  loop: start=0, step=1, limit=4
  $region2: #{residual_block.7} parent=0 // loop_pre_header
    _
  $region3: #{residual_block.7} parent=0 // loop_header
    %s10 = sphi 0, %s14
    %p11 = scmp.ge.s32.totalorder %s10, 4
    %s20 = sphi 0, %s22
    %s23 = sphi 0, %s20
    %s24 = sphi 0, %s23
    %s40 = sphi 0, %s24
    %s44 = sphi 0, %s44
    %s46 = sphi 0, %s44
    %s47 = sphi 0, %s46
    %s61 = sphi 0, %s47
    %s65 = sphi 0, %s65
    %s67 = sphi 0, %s65
    %s68 = sphi 0, %s67
    %s82 = sphi 0, %s68
    %s88 = sphi 0, %s90
    %s91 = sphi 0, %s88
    %s92 = sphi 0, %s91
    %s108 = sphi 0, %s92
    %s114 = sphi 0, %s116
    %s117 = sphi 0, %s114
    %s118 = sphi 0, %s117
    %s134 = sphi 0, %s118
  $region4: #{residual_block.7} parent=0 // loop_header_branch
    %13 = sbr.rel (%p11) target = $region8
  $region5: #{residual_block.7} parent=0 // loop_body
    %s15 = ssub.s32 %s10, 1
    %s16 = ssub.s32 %s10, 2
    %s17 = sadd.s32 %s10, 1
    %s18 = ssub.s32 %s10, %s17
    %p19 = scmp.eq.s32.totalorder %s18, 0
    %s21 = sadd.s32 %s20, 1
    %s22 = scalar_select %p19, %s20, %s21
    %p25 = pneg %p19
    %p26 = scmp.eq.s32.totalorder %s10, 1
    %p27 = por %p25, %p26
    %p28 = scmp.ne.s32.totalorder %s20, %s23
    %p29 = scmp.eq.s32.totalorder %s10, 0
    %p30 = por %p28, %p29
    %p31 = scmp.ne.s32.totalorder %s20, %s23
    %p32 = scmp.eq.s32.totalorder %s15, 1
    %p33 = por %p31, %p32
    %p34 = scmp.ne.s32.totalorder %s23, %s24
    %p35 = scmp.eq.s32.totalorder %s15, 0
    %p36 = por %p34, %p35
    %p37 = scmp.ne.s32.totalorder %s23, %s24
    %p38 = scmp.eq.s32.totalorder %s16, 1
    %p39 = por %p37, %p38
    %p41 = scmp.ne.s32.totalorder %s24, %s40
    %p42 = scmp.eq.s32.totalorder %s16, 0
    %p43 = por %p41, %p42
    %s45 = sadd.s32 %s44, 1
    %p48 = scmp.eq.s32.totalorder %s10, 1
    %p49 = scmp.ne.s32.totalorder %s44, %s46
    %p50 = scmp.eq.s32.totalorder %s10, 0
    %p51 = por %p49, %p50
    %p52 = scmp.ne.s32.totalorder %s44, %s46
    %p53 = scmp.eq.s32.totalorder %s15, 1
    %p54 = por %p52, %p53
    %p55 = scmp.ne.s32.totalorder %s46, %s47
    %p56 = scmp.eq.s32.totalorder %s15, 0
    %p57 = por %p55, %p56
    %p58 = scmp.ne.s32.totalorder %s46, %s47
    %p59 = scmp.eq.s32.totalorder %s16, 1
    %p60 = por %p58, %p59
    %p62 = scmp.ne.s32.totalorder %s47, %s61
    %p63 = scmp.eq.s32.totalorder %s16, 0
    %p64 = por %p62, %p63
    %s66 = sadd.s32 %s65, 1
    %p69 = scmp.eq.s32.totalorder %s10, 1
    %p70 = scmp.ne.s32.totalorder %s65, %s67
    %p71 = scmp.eq.s32.totalorder %s10, 0
    %p72 = por %p70, %p71
    %p73 = scmp.ne.s32.totalorder %s65, %s67
    %p74 = scmp.eq.s32.totalorder %s15, 1
    %p75 = por %p73, %p74
    %p76 = scmp.ne.s32.totalorder %s67, %s68
    %p77 = scmp.eq.s32.totalorder %s15, 0
    %p78 = por %p76, %p77
    %p79 = scmp.ne.s32.totalorder %s67, %s68
    %p80 = scmp.eq.s32.totalorder %s16, 1
    %p81 = por %p79, %p80
    %p83 = scmp.ne.s32.totalorder %s68, %s82
    %p84 = scmp.eq.s32.totalorder %s16, 0
    %p85 = por %p83, %p84
    %s86 = ssub.s32 %s10, %s17
    %p87 = scmp.eq.s32.totalorder %s86, 0
    %s89 = sadd.s32 %s88, 1
    %s90 = scalar_select %p87, %s88, %s89
    %p93 = pneg %p87
    %p94 = scmp.eq.s32.totalorder %s10, 1
    %p95 = por %p93, %p94
    %p96 = scmp.ne.s32.totalorder %s88, %s91
    %p97 = scmp.eq.s32.totalorder %s10, 0
    %p98 = por %p96, %p97
    %p99 = scmp.ne.s32.totalorder %s88, %s91
    %p100 = scmp.eq.s32.totalorder %s15, 1
    %p101 = por %p99, %p100
    %p102 = scmp.ne.s32.totalorder %s91, %s92
    %p103 = scmp.eq.s32.totalorder %s15, 0
    %p104 = por %p102, %p103
    %p105 = scmp.ne.s32.totalorder %s91, %s92
    %p106 = scmp.eq.s32.totalorder %s16, 1
    %p107 = por %p105, %p106
    %p109 = scmp.ne.s32.totalorder %s92, %s108
    %p110 = scmp.eq.s32.totalorder %s16, 0
    %p111 = por %p109, %p110
    %s112 = ssub.s32 %s10, %s17
    %p113 = scmp.eq.s32.totalorder %s112, 0
    %s115 = sadd.s32 %s114, 1
    %s116 = scalar_select %p113, %s114, %s115
    %p119 = pneg %p113
    %p120 = scmp.eq.s32.totalorder %s10, 1
    %p121 = por %p119, %p120
    %p122 = scmp.ne.s32.totalorder %s114, %s117
    %p123 = scmp.eq.s32.totalorder %s10, 0
    %p124 = por %p122, %p123
    %p125 = scmp.ne.s32.totalorder %s114, %s117
    %p126 = scmp.eq.s32.totalorder %s15, 1
    %p127 = por %p125, %p126
    %p128 = scmp.ne.s32.totalorder %s117, %s118
    %p129 = scmp.eq.s32.totalorder %s15, 0
    %p130 = por %p128, %p129
    %p131 = scmp.ne.s32.totalorder %s117, %s118
    %p132 = scmp.eq.s32.totalorder %s16, 1
    %p133 = por %p131, %p132
    %p135 = scmp.ne.s32.totalorder %s118, %s134
    %p136 = scmp.eq.s32.totalorder %s16, 0
    %p137 = por %p135, %p136
    %p138 = scmp.le.s32.totalorder 1, %s10
    %p139 = scmp.lt.s32.totalorder %s10, 3
    %p140 = pnand %p138, %p139
    %p141 = pneg %p140
    // Predicated region
    $region9: #{residual_block.7} parent=5 // pred_check
      _
    $region10: #{residual_block.7} parent=5 // pred_check_branch
      %143 = sbr.rel (%p140) target = $region12
    $region11: #{residual_block.7} parent=5 // pred_region
      %s144 = ssub.s32 %s10, 1
      // Predicated region
      $region13: #{residual_block.7} parent=11 // pred_check
        %p145 = pneg %p57
      $region14: #{residual_block.7} parent=11 // pred_check_branch
        %147 = sbr.rel (%p145) target = $region16
      $region15: #{residual_block.7} parent=11 // pred_region
        _
      $region16: #{residual_block.7} parent=11 // pred_fallthru
        _
      // Predicated region
      $region17: #{residual_block.7} parent=11 // pred_check
        %p148 = pneg %p78
      $region18: #{residual_block.7} parent=11 // pred_check_branch
        %150 = sbr.rel (%p148) target = $region20
      $region19: #{residual_block.7} parent=11 // pred_region
        _
      $region20: #{residual_block.7} parent=11 // pred_fallthru
        _
    $region12: #{residual_block.7} parent=5 // pred_fallthru
      _
    %p151 = scmp.lt.s32.totalorder %s10, 2
    // Predicated region
    $region21: #{residual_block.7} parent=5 // pred_check
      %p152 = pneg %p151
    $region22: #{residual_block.7} parent=5 // pred_check_branch
      %154 = sbr.rel (%p152) target = $region24
    $region23: #{residual_block.7} parent=5 // pred_region
      // Predicated region
      $region25: #{residual_block.7} parent=23 // pred_check
        %p155 = pneg %p30
      $region26: #{residual_block.7} parent=23 // pred_check_branch
        %157 = sbr.rel (%p155) target = $region28
      $region27: #{residual_block.7} parent=23 // pred_region
        %s158 = smul.u32 8, %s10
        %p159 = scmp.lt.s32.totalorder %s158, 15
        %s160 = scalar_select %p159, %s158, 15
        %s161 = smul.addr %s160, 4
        %s162 = scalar_lea.vmem %s0, %s161
        %s163 = smul.u32 8, %s10
      $region28: #{residual_block.7} parent=23 // pred_fallthru
        _
      // Predicated region
      $region29: #{residual_block.7} parent=23 // pred_check
        %p164 = pneg %p98
      $region30: #{residual_block.7} parent=23 // pred_check_branch
        %166 = sbr.rel (%p164) target = $region32
      $region31: #{residual_block.7} parent=23 // pred_region
        %s167 = smul.u32 8, %s10
        %p168 = scmp.lt.s32.totalorder %s167, 15
        %s169 = scalar_select %p168, %s167, 15
        %s170 = smul.addr %s169, 4
        %s171 = scalar_lea.vmem %s3, %s170
        %s172 = smul.u32 8, %s10
      $region32: #{residual_block.7} parent=23 // pred_fallthru
        _
    $region24: #{residual_block.7} parent=5 // pred_fallthru
      _
    %p173 = scmp.le.s32.totalorder 1, %s10
    %p174 = scmp.lt.s32.totalorder %s10, 3
    %p175 = pnand %p173, %p174
    %p176 = pneg %p175
    // Predicated region
    $region33: #{residual_block.7} parent=5 // pred_check
      _
    $region34: #{residual_block.7} parent=5 // pred_check_branch
      %178 = sbr.rel (%p175) target = $region36
    $region35: #{residual_block.7} parent=5 // pred_region
      %s179 = ssub.s32 %s10, 1
      %s180 = smul.u32 8, %s15
      %p181 = scmp.lt.s32.totalorder %s180, 15
      %s182 = scalar_select %p181, %s180, 15
      %s183 = smul.addr %s182, 4
      %s184 = scalar_lea.vmem %s0, %s183
      %p185 = pneg %p36
      %p186 = pneg %p33
      %p187 = pneg %p57
      %p188 = pneg %p54
      %p189 = pneg %p78
      %p190 = pneg %p75
      %s191 = smul.u32 8, %s15
      %p192 = scmp.lt.s32.totalorder %s191, 15
      %s193 = scalar_select %p192, %s191, 15
      %s194 = smul.addr %s193, 4
      %s195 = scalar_lea.vmem %s3, %s194
      %p196 = pneg %p104
      %p197 = pneg %p101
      %p198 = pneg %p130
      %p199 = pneg %p127
      %s200 = smul.u32 8, %s15
      %p201 = scmp.lt.s32.totalorder %s200, 15
      %s202 = scalar_select %p201, %s200, 15
      %s203 = smul.addr %s202, 8
      %s204 = scalar_lea.vmem %s4, %s203
      %s205 = smul.u32 8, %s15
      %p206 = scmp.lt.s32.totalorder %s205, 15
      %s207 = scalar_select %p206, %s205, 15
      %s208 = smul.addr %s207, 4
      %s209 = scalar_lea.vmem %s0, %s208
      %s210 = smul.u32 8, %s15
      %s211 = smul.u32 8, %s15
      %p212 = scmp.lt.s32.totalorder %s211, 15
      %s213 = scalar_select %p212, %s211, 15
      %s214 = smul.addr %s213, 4
      %s215 = scalar_lea.vmem %s3, %s214
      %s216 = smul.u32 8, %s15
      %s217 = smul.u32 8, %s15
      %p218 = scmp.lt.s32.totalorder %s217, 15
      %s219 = scalar_select %p218, %s217, 15
      %s220 = smul.addr %s219, 8
      %s221 = scalar_lea.vmem %s4, %s220
      %s222 = smul.u32 8, %s15
      %v224 = vld [vmem:[%s209] sm:$0xf]
      %v225 = vld [vmem:[%s209 + $0x4] sm:$0xf]
      %v226 = vld [vmem:[%s209 + $0x8] sm:$0xf]
      %v227 = vld [vmem:[%s209 + $0xc] sm:$0xf]
      %v228 = vld [vmem:[%s209 + $0x10] sm:$0xf]
      %v229 = vld [vmem:[%s209 + $0x14] sm:$0xf]
      %v230 = vld [vmem:[%s209 + $0x18] sm:$0xf]
      %v231 = vld [vmem:[%s209 + $0x1c] sm:$0xf]
      %v232 = vld [vmem:[%s1] sm:$0xf]
      %v233 = vld [vmem:[%s1 + $0x4] sm:$0xf]
      %v234 = vld [vmem:[%s1 + $0x8] sm:$0xf]
      %v235 = vld [vmem:[%s1 + $0xc] sm:$0xf]
      %v236 = vld [vmem:[%s1 + $0x10] sm:$0xf]
      %v237 = vld [vmem:[%s1 + $0x14] sm:$0xf]
      %v238 = vld [vmem:[%s1 + $0x18] sm:$0xf]
      %v239 = vld [vmem:[%s1 + $0x1c] sm:$0xf]
      %v240 = vld [vmem:[%s1 + $0x20] sm:$0xf]
      %v241 = vld [vmem:[%s1 + $0x24] sm:$0xf]
      %v242 = vld [vmem:[%s1 + $0x28] sm:$0xf]
      %v243 = vld [vmem:[%s1 + $0x2c] sm:$0xf]
      %v244 = vld [vmem:[%s1 + $0x30] sm:$0xf]
      %v245 = vld [vmem:[%s1 + $0x34] sm:$0xf]
      %v246 = vld [vmem:[%s1 + $0x38] sm:$0xf]
      %v247 = vld [vmem:[%s1 + $0x3c] sm:$0xf]
      %v248 = vld [vmem:[%s2] sm:$0x1]
      %v250 = vlaneseq
      %v251 = vshrl.u32 %v250, 7
      %v252 = vsub.s32 0, %v251
      %v253 = vrot.slane %v248, %v252
      %v263 = vunpack.c.l.b16 %v224
      %v264 = vunpack.c.l.b16 %v225
      %v265 = vunpack.c.l.b16 %v226
      %v266 = vunpack.c.l.b16 %v227
      %v267 = vunpack.c.l.b16 %v228
      %v268 = vunpack.c.l.b16 %v229
      %v269 = vunpack.c.l.b16 %v230
      %v270 = vunpack.c.l.b16 %v231
      %v271 = vpack.c.b16 %v264, %v263
      %v272 = vpack.c.b16 %v266, %v265
      %v273 = vpack.c.b16 %v268, %v267
      %v274 = vpack.c.b16 %v270, %v269
      %v295 = vunpack.c.l.b16 %v232
      %v296 = vunpack.c.l.b16 %v233
      %v297 = vunpack.c.l.b16 %v234
      %v298 = vunpack.c.l.b16 %v235
      %v299 = vunpack.c.l.b16 %v236
      %v300 = vunpack.c.l.b16 %v237
      %v301 = vunpack.c.l.b16 %v238
      %v302 = vunpack.c.l.b16 %v239
      %v303 = vunpack.c.l.b16 %v240
      %v304 = vunpack.c.l.b16 %v241
      %v305 = vunpack.c.l.b16 %v242
      %v306 = vunpack.c.l.b16 %v243
      %v307 = vunpack.c.l.b16 %v244
      %v308 = vunpack.c.l.b16 %v245
      %v309 = vunpack.c.l.b16 %v246
      %v310 = vunpack.c.l.b16 %v247
      %v311 = vpack.c.b16 %v296, %v295
      %v312 = vpack.c.b16 %v298, %v297
      %v313 = vpack.c.b16 %v300, %v299
      %v314 = vpack.c.b16 %v302, %v301
      %v315 = vpack.c.b16 %v304, %v303
      %v316 = vpack.c.b16 %v306, %v305
      %v317 = vpack.c.b16 %v308, %v307
      %v318 = vpack.c.b16 %v310, %v309
      %327 = vmatprep.subr.bf16.mxu0 0
      %328 = vmatpush1.bf16.msra.mxu0 %v318
      %329 = vmatprep.subr.bf16.mxu0 0
      %330 = vmatpush1.bf16.msra.mxu0 %v317
      %331 = vmatprep.subr.bf16.mxu0 0
      %332 = vmatpush1.bf16.msra.mxu0 %v316
      %333 = vmatprep.subr.bf16.mxu0 0
      %334 = vmatpush1.bf16.msra.mxu0 %v315
      %335 = vmatprep.subr.bf16.mxu0 0
      %336 = vmatpush1.bf16.msra.mxu0 %v314
      %337 = vmatprep.subr.bf16.mxu0 0
      %338 = vmatpush1.bf16.msra.mxu0 %v313
      %339 = vmatprep.subr.bf16.mxu0 0
      %340 = vmatpush1.bf16.msra.mxu0 %v312
      %341 = vmatprep.subr.bf16.mxu0 0
      %342 = vmatpush1.bf16.msra.mxu0 %v311
      %343 = vmatprep.subr.bf16.mxu0 0
      %344 = vmatpush2.bf16.msra.mxu0 0
      %345 = vmatprep.subr.bf16.mxu0 0
      %346 = vmatpush2.bf16.msra.mxu0 0
      %347 = vmatprep.subr.bf16.mxu0 0
      %348 = vmatpush2.bf16.msra.mxu0 0
      %349 = vmatprep.subr.bf16.mxu0 0
      %350 = vmatpush2.bf16.msra.mxu0 0
      %351 = vmatprep.subr.bf16.mxu0 0
      %352 = vmatpush2.bf16.msra.mxu0 0
      %353 = vmatprep.subr.bf16.mxu0 0
      %354 = vmatpush2.bf16.msra.mxu0 0
      %355 = vmatprep.subr.bf16.mxu0 0
      %356 = vmatpush2.bf16.msra.mxu0 0
      %357 = vmatprep.subr.bf16.mxu0 0
      %358 = vmatpush2.bf16.msra.mxu0 0
      %359 = vmatprep.mubr.bf16.mxu0 0
      %360 = vmatmul.mubr.bf16.gmra.mxu0 %v271
      %v361 = vpop.f32.mrf.mxu0
      %v362 = vadd.f32 %v253, %v361
      %v363 = vpop.f32.mrf.mxu0
      %v364 = vpop.f32.mrf.mxu0
      %v365 = vadd.f32 %v253, %v364
      %v366 = vpop.f32.mrf.mxu0
      %367 = vmatprep.mubr.bf16.mxu0 0
      %368 = vmatmul.mubr.bf16.gmra.mxu0 %v272
      %v369 = vpop.f32.mrf.mxu0
      %v370 = vadd.f32 %v253, %v369
      %v371 = vpop.f32.mrf.mxu0
      %v372 = vpop.f32.mrf.mxu0
      %v373 = vadd.f32 %v253, %v372
      %v374 = vpop.f32.mrf.mxu0
      %375 = vmatprep.mubr.bf16.mxu0 0
      %376 = vmatmul.mubr.bf16.gmra.mxu0 %v273
      %v377 = vpop.f32.mrf.mxu0
      %v378 = vadd.f32 %v253, %v377
      %v379 = vpop.f32.mrf.mxu0
      %v380 = vpop.f32.mrf.mxu0
      %v381 = vadd.f32 %v253, %v380
      %v382 = vpop.f32.mrf.mxu0
      %383 = vmatprep.mubr.bf16.mxu0 0
      %384 = vmatmul.mubr.bf16.gmra.mxu0 %v274
      %v385 = vpop.f32.mrf.mxu0
      %v386 = vadd.f32 %v253, %v385
      %v387 = vpop.f32.mrf.mxu0
      %v388 = vpop.f32.mrf.mxu0
      %v389 = vadd.f32 %v253, %v388
      %v390 = vpop.f32.mrf.mxu0
      %391 = vdwg.mxu0
      %v392 = vld [vmem:[%s215] sm:$0xf]
      %v393 = vld [vmem:[%s215 + $0x4] sm:$0xf]
      %v394 = vld [vmem:[%s215 + $0x8] sm:$0xf]
      %v395 = vld [vmem:[%s215 + $0xc] sm:$0xf]
      %v396 = vld [vmem:[%s215 + $0x10] sm:$0xf]
      %v397 = vld [vmem:[%s215 + $0x14] sm:$0xf]
      %v398 = vld [vmem:[%s215 + $0x18] sm:$0xf]
      %v399 = vld [vmem:[%s215 + $0x1c] sm:$0xf]
      %v400 = vunpack.c.l.bf16 %v392
      %v401 = vunpack.c.l.bf16 %v393
      %v402 = vunpack.c.l.bf16 %v394
      %v403 = vunpack.c.l.bf16 %v395
      %v404 = vunpack.c.l.bf16 %v396
      %v405 = vunpack.c.l.bf16 %v397
      %v406 = vunpack.c.l.bf16 %v398
      %v407 = vunpack.c.l.bf16 %v399
      %v408 = vadd.f32 %v362, %v400
      %v409 = vadd.f32 %v365, %v401
      %v410 = vadd.f32 %v370, %v402
      %v411 = vadd.f32 %v373, %v403
      %v412 = vadd.f32 %v378, %v404
      %v413 = vadd.f32 %v381, %v405
      %v414 = vadd.f32 %v386, %v406
      %v415 = vadd.f32 %v389, %v407
      %v416 = vmax.f32 %v408, 0.0
      %v417 = vmax.f32 %v409, 0.0
      %v418 = vmax.f32 %v410, 0.0
      %v419 = vmax.f32 %v411, 0.0
      %v420 = vmax.f32 %v412, 0.0
      %v421 = vmax.f32 %v413, 0.0
      %v422 = vmax.f32 %v414, 0.0
      %v423 = vmax.f32 %v415, 0.0
      %424 = vst [vmem:[%s221] sm:$0xff] %v416
      %425 = vst [vmem:[%s221 + $0x8] sm:$0xff] %v417
      %426 = vst [vmem:[%s221 + $0x10] sm:$0xff] %v418
      %427 = vst [vmem:[%s221 + $0x18] sm:$0xff] %v419
      %428 = vst [vmem:[%s221 + $0x20] sm:$0xff] %v420
      %429 = vst [vmem:[%s221 + $0x28] sm:$0xff] %v421
      %430 = vst [vmem:[%s221 + $0x30] sm:$0xff] %v422
      %431 = vst [vmem:[%s221 + $0x38] sm:$0xff] %v423
      %s432 = smul.u32 8, %s15
      %p433 = scmp.lt.s32.totalorder %s432, 15
      %s434 = scalar_select %p433, %s432, 15
      %s435 = smul.addr %s434, 8
      %s436 = scalar_lea.vmem %s4, %s435
      // Predicated region
      $region37: #{residual_block.7} parent=35 // pred_check
        %p437 = pneg %p127
      $region38: #{residual_block.7} parent=35 // pred_check_branch
        %439 = sbr.rel (%p437) target = $region40
      $region39: #{residual_block.7} parent=35 // pred_region
        %s440 = smul.u32 8, %s15
      $region40: #{residual_block.7} parent=35 // pred_fallthru
        _
    $region36: #{residual_block.7} parent=5 // pred_fallthru
      _
    %p441 = scmp.le.s32.totalorder 2, %s10
    // Predicated region
    $region41: #{residual_block.7} parent=5 // pred_check
      %p442 = pneg %p441
    $region42: #{residual_block.7} parent=5 // pred_check_branch
      %444 = sbr.rel (%p442) target = $region44
    $region43: #{residual_block.7} parent=5 // pred_region
      %s445 = ssub.s32 %s10, 2
      // Predicated region
      $region45: #{residual_block.7} parent=43 // pred_check
        %p446 = pneg %p133
      $region46: #{residual_block.7} parent=43 // pred_check_branch
        %448 = sbr.rel (%p446) target = $region48
      $region47: #{residual_block.7} parent=43 // pred_region
        %s449 = smul.u32 8, %s16
        %p450 = scmp.lt.s32.totalorder %s449, 15
        %s451 = scalar_select %p450, %s449, 15
        %s452 = smul.addr %s451, 8
        %s453 = scalar_lea.vmem %s4, %s452
      $region48: #{residual_block.7} parent=43 // pred_fallthru
        _
    $region44: #{residual_block.7} parent=5 // pred_fallthru
      _
  $region6: #{residual_block.7} parent=0 // loop_footer
    %s14 = sadd.s32 1, %s10
  $region7: #{residual_block.7} parent=0 // loop_footer_branch
    %9 = sbr.rel target = $region3
  $region8: #{residual_block.7} parent=0 // loop_exit
    _

// kernel: residual_block.5
$region0: #{residual_block.5}
  #allocation0 [shape = 'u32[]', space=smem, size = 0x4, offset = 0x4, fixed_abs, tag = 'smem constant byte address 0x4 - core index']
  #allocation1 [shape = 'u32[144,128]{1,0:T(1,128)}', space=vmem, size = 0x12000, scoped, tag = 'internal scratch']
  #allocation2 [shape = 'f32[18,18,128]{2,1,0:T(8,128)}', space=vmem, size = 0x36000, scoped, tag = 'scratch operand']
  %s0 = inlined_call_operand.vmem [shape: bf16[2,16,16,128], index: 0, kind: input, shape index: {}]
  %s1 = inlined_call_operand.vmem [shape: bf16[9,128,128], index: 1, kind: input, shape index: {}]
  %s2 = inlined_call_operand.vmem [shape: f32[1,128], index: 2, kind: input, shape index: {}]
  %s3 = inlined_call_operand.vmem [shape: bf16[2,8,8,128], index: 3, kind: output, shape index: {}]
  %s4 = sld [smem:[#allocation0]]
  $region45: #{residual_block.5} parent=0
    _
  %s6 = ssub.s32 1, %s4
  %s7 = scalar_select 0, %s6, %s4
  loop: start=0, step=1, limit=4
  $region2: #{residual_block.5} parent=0 // loop_pre_header
    _
  $region3: #{residual_block.5} parent=0 // loop_header
    %s9 = sphi 0, %s13
    %p10 = scmp.ge.s32.totalorder %s9, 4
    %s19 = sphi 0, %s21
    %s22 = sphi 0, %s19
    %s23 = sphi 0, %s22
    %s39 = sphi 0, %s23
    %s43 = sphi 0, %s43
    %s45 = sphi 0, %s43
    %s46 = sphi 0, %s45
    %s60 = sphi 0, %s46
    %s64 = sphi 0, %s64
    %s66 = sphi 0, %s64
    %s67 = sphi 0, %s66
    %s81 = sphi 0, %s67
    %s87 = sphi 0, %s89
    %s90 = sphi 0, %s87
    %s91 = sphi 0, %s90
    %s107 = sphi 0, %s91
  $region4: #{residual_block.5} parent=0 // loop_header_branch
    %12 = sbr.rel (%p10) target = $region8
  $region5: #{residual_block.5} parent=0 // loop_body
    %s14 = ssub.s32 %s9, 1
    %s15 = ssub.s32 %s9, 2
    %s16 = sadd.s32 %s9, 1
    %s17 = ssub.s32 %s9, %s16
    %p18 = scmp.eq.s32.totalorder %s17, 0
    %s20 = sadd.s32 %s19, 1
    %s21 = scalar_select %p18, %s19, %s20
    %p24 = pneg %p18
    %p25 = scmp.eq.s32.totalorder %s9, 1
    %p26 = por %p24, %p25
    %p27 = scmp.ne.s32.totalorder %s19, %s22
    %p28 = scmp.eq.s32.totalorder %s9, 0
    %p29 = por %p27, %p28
    %p30 = scmp.ne.s32.totalorder %s19, %s22
    %p31 = scmp.eq.s32.totalorder %s14, 1
    %p32 = por %p30, %p31
    %p33 = scmp.ne.s32.totalorder %s22, %s23
    %p34 = scmp.eq.s32.totalorder %s14, 0
    %p35 = por %p33, %p34
    %p36 = scmp.ne.s32.totalorder %s22, %s23
    %p37 = scmp.eq.s32.totalorder %s15, 1
    %p38 = por %p36, %p37
    %p40 = scmp.ne.s32.totalorder %s23, %s39
    %p41 = scmp.eq.s32.totalorder %s15, 0
    %p42 = por %p40, %p41
    %s44 = sadd.s32 %s43, 1
    %p47 = scmp.eq.s32.totalorder %s9, 1
    %p48 = scmp.ne.s32.totalorder %s43, %s45
    %p49 = scmp.eq.s32.totalorder %s9, 0
    %p50 = por %p48, %p49
    %p51 = scmp.ne.s32.totalorder %s43, %s45
    %p52 = scmp.eq.s32.totalorder %s14, 1
    %p53 = por %p51, %p52
    %p54 = scmp.ne.s32.totalorder %s45, %s46
    %p55 = scmp.eq.s32.totalorder %s14, 0
    %p56 = por %p54, %p55
    %p57 = scmp.ne.s32.totalorder %s45, %s46
    %p58 = scmp.eq.s32.totalorder %s15, 1
    %p59 = por %p57, %p58
    %p61 = scmp.ne.s32.totalorder %s46, %s60
    %p62 = scmp.eq.s32.totalorder %s15, 0
    %p63 = por %p61, %p62
    %s65 = sadd.s32 %s64, 1
    %p68 = scmp.eq.s32.totalorder %s9, 1
    %p69 = scmp.ne.s32.totalorder %s64, %s66
    %p70 = scmp.eq.s32.totalorder %s9, 0
    %p71 = por %p69, %p70
    %p72 = scmp.ne.s32.totalorder %s64, %s66
    %p73 = scmp.eq.s32.totalorder %s14, 1
    %p74 = por %p72, %p73
    %p75 = scmp.ne.s32.totalorder %s66, %s67
    %p76 = scmp.eq.s32.totalorder %s14, 0
    %p77 = por %p75, %p76
    %p78 = scmp.ne.s32.totalorder %s66, %s67
    %p79 = scmp.eq.s32.totalorder %s15, 1
    %p80 = por %p78, %p79
    %p82 = scmp.ne.s32.totalorder %s67, %s81
    %p83 = scmp.eq.s32.totalorder %s15, 0
    %p84 = por %p82, %p83
    %s85 = ssub.s32 %s9, %s16
    %p86 = scmp.eq.s32.totalorder %s85, 0
    %s88 = sadd.s32 %s87, 1
    %s89 = scalar_select %p86, %s87, %s88
    %p92 = pneg %p86
    %p93 = scmp.eq.s32.totalorder %s9, 1
    %p94 = por %p92, %p93
    %p95 = scmp.ne.s32.totalorder %s87, %s90
    %p96 = scmp.eq.s32.totalorder %s9, 0
    %p97 = por %p95, %p96
    %p98 = scmp.ne.s32.totalorder %s87, %s90
    %p99 = scmp.eq.s32.totalorder %s14, 1
    %p100 = por %p98, %p99
    %p101 = scmp.ne.s32.totalorder %s90, %s91
    %p102 = scmp.eq.s32.totalorder %s14, 0
    %p103 = por %p101, %p102
    %p104 = scmp.ne.s32.totalorder %s90, %s91
    %p105 = scmp.eq.s32.totalorder %s15, 1
    %p106 = por %p104, %p105
    %p108 = scmp.ne.s32.totalorder %s91, %s107
    %p109 = scmp.eq.s32.totalorder %s15, 0
    %p110 = por %p108, %p109
    %p111 = scmp.le.s32.totalorder 1, %s9
    %p112 = scmp.lt.s32.totalorder %s9, 3
    %p113 = pnand %p111, %p112
    %p114 = pneg %p113
    // Predicated region
    $region9: #{residual_block.5} parent=5 // pred_check
      _
    $region10: #{residual_block.5} parent=5 // pred_check_branch
      %116 = sbr.rel (%p113) target = $region12
    $region11: #{residual_block.5} parent=5 // pred_region
      %s117 = ssub.s32 %s9, 1
      // Predicated region
      $region13: #{residual_block.5} parent=11 // pred_check
        %p118 = pneg %p56
      $region14: #{residual_block.5} parent=11 // pred_check_branch
        %120 = sbr.rel (%p118) target = $region16
      $region15: #{residual_block.5} parent=11 // pred_region
        _
      $region16: #{residual_block.5} parent=11 // pred_fallthru
        _
      // Predicated region
      $region17: #{residual_block.5} parent=11 // pred_check
        %p121 = pneg %p77
      $region18: #{residual_block.5} parent=11 // pred_check_branch
        %123 = sbr.rel (%p121) target = $region20
      $region19: #{residual_block.5} parent=11 // pred_region
        _
      $region20: #{residual_block.5} parent=11 // pred_fallthru
        _
    $region12: #{residual_block.5} parent=5 // pred_fallthru
      _
    %p124 = scmp.lt.s32.totalorder %s9, 2
    // Predicated region
    $region21: #{residual_block.5} parent=5 // pred_check
      %p125 = pneg %p124
    $region22: #{residual_block.5} parent=5 // pred_check_branch
      %127 = sbr.rel (%p125) target = $region24
    $region23: #{residual_block.5} parent=5 // pred_region
      // Predicated region
      $region25: #{residual_block.5} parent=23 // pred_check
        %p128 = pneg %p29
      $region26: #{residual_block.5} parent=23 // pred_check_branch
        %130 = sbr.rel (%p128) target = $region28
      $region27: #{residual_block.5} parent=23 // pred_region
        %p131 = scmp.lt.s32.totalorder %s9, 1
        %s132 = scalar_select %p131, %s9, 1
        %s133 = smul.addr %s132, 32
        %s134 = smul.addr %s133, 4
        %s135 = scalar_lea.vmem %s0, %s134
      $region28: #{residual_block.5} parent=23 // pred_fallthru
        _
    $region24: #{residual_block.5} parent=5 // pred_fallthru
      _
    %p136 = scmp.le.s32.totalorder 1, %s9
    %p137 = scmp.lt.s32.totalorder %s9, 3
    %p138 = pnand %p136, %p137
    %p139 = pneg %p138
    // Predicated region
    $region29: #{residual_block.5} parent=5 // pred_check
      _
    $region30: #{residual_block.5} parent=5 // pred_check_branch
      %141 = sbr.rel (%p138) target = $region32
    $region31: #{residual_block.5} parent=5 // pred_region
      %s142 = ssub.s32 %s9, 1
      %p143 = scmp.lt.s32.totalorder %s14, 1
      %s144 = scalar_select %p143, %s14, 1
      %s145 = smul.addr %s144, 32
      %s146 = smul.addr %s145, 4
      %s147 = scalar_lea.vmem %s0, %s146
      %p148 = pneg %p35
      %p149 = pneg %p32
      %p150 = pneg %p56
      %p151 = pneg %p53
      %p152 = pneg %p77
      %p153 = pneg %p74
      %p154 = pneg %p103
      %p155 = pneg %p100
      %p156 = scmp.lt.s32.totalorder %s14, 1
      %s157 = scalar_select %p156, %s14, 1
      %s158 = smul.addr %s157, 8
      %s159 = smul.addr %s158, 4
      %s160 = scalar_lea.vmem %s3, %s159
      %p161 = scmp.lt.s32.totalorder %s14, 1
      %s162 = scalar_select %p161, %s14, 1
      %s163 = smul.addr %s162, 32
      %s164 = smul.addr %s163, 4
      %s165 = scalar_lea.vmem %s0, %s164
      %p166 = scmp.lt.s32.totalorder %s14, 1
      %s167 = scalar_select %p166, %s14, 1
      %s168 = smul.addr %s167, 8
      %s169 = smul.addr %s168, 4
      %s170 = scalar_lea.vmem %s3, %s169
      %172 = vst [vmem:[#allocation2] sm:$0xff] 0.0
      %173 = vst [vmem:[#allocation2 + $0x8] sm:$0xff] 0.0
      %174 = vst [vmem:[#allocation2 + $0x10] sm:$0x3] 0.0
      %175 = vst [vmem:[#allocation2 + $0x18] sm:$0xff] 0.0
      %176 = vst [vmem:[#allocation2 + $0x20] sm:$0xff] 0.0
      %177 = vst [vmem:[#allocation2 + $0x28] sm:$0x3] 0.0
      %178 = vst [vmem:[#allocation2 + $0x30] sm:$0xff] 0.0
      %179 = vst [vmem:[#allocation2 + $0x38] sm:$0xff] 0.0
      %180 = vst [vmem:[#allocation2 + $0x40] sm:$0x3] 0.0
      %181 = vst [vmem:[#allocation2 + $0x48] sm:$0xff] 0.0
      %182 = vst [vmem:[#allocation2 + $0x50] sm:$0xff] 0.0
      %183 = vst [vmem:[#allocation2 + $0x58] sm:$0x3] 0.0
      %184 = vst [vmem:[#allocation2 + $0x60] sm:$0xff] 0.0
      %185 = vst [vmem:[#allocation2 + $0x68] sm:$0xff] 0.0
      %186 = vst [vmem:[#allocation2 + $0x70] sm:$0x3] 0.0
      %187 = vst [vmem:[#allocation2 + $0x78] sm:$0xff] 0.0
      %188 = vst [vmem:[#allocation2 + $0x80] sm:$0xff] 0.0
      %189 = vst [vmem:[#allocation2 + $0x88] sm:$0x3] 0.0
      %190 = vst [vmem:[#allocation2 + $0x90] sm:$0xff] 0.0
      %191 = vst [vmem:[#allocation2 + $0x98] sm:$0xff] 0.0
      %192 = vst [vmem:[#allocation2 + $0xa0] sm:$0x3] 0.0
      %193 = vst [vmem:[#allocation2 + $0xa8] sm:$0xff] 0.0
      %194 = vst [vmem:[#allocation2 + $0xb0] sm:$0xff] 0.0
      %195 = vst [vmem:[#allocation2 + $0xb8] sm:$0x3] 0.0
      %196 = vst [vmem:[#allocation2 + $0xc0] sm:$0xff] 0.0
      %197 = vst [vmem:[#allocation2 + $0xc8] sm:$0xff] 0.0
      %198 = vst [vmem:[#allocation2 + $0xd0] sm:$0x3] 0.0
      %199 = vst [vmem:[#allocation2 + $0xd8] sm:$0xff] 0.0
      %200 = vst [vmem:[#allocation2 + $0xe0] sm:$0xff] 0.0
      %201 = vst [vmem:[#allocation2 + $0xe8] sm:$0x3] 0.0
      %202 = vst [vmem:[#allocation2 + $0xf0] sm:$0xff] 0.0
      %203 = vst [vmem:[#allocation2 + $0xf8] sm:$0xff] 0.0
      %204 = vst [vmem:[#allocation2 + $0x100] sm:$0x3] 0.0
      %205 = vst [vmem:[#allocation2 + $0x108] sm:$0xff] 0.0
      %206 = vst [vmem:[#allocation2 + $0x110] sm:$0xff] 0.0
      %207 = vst [vmem:[#allocation2 + $0x118] sm:$0x3] 0.0
      %208 = vst [vmem:[#allocation2 + $0x120] sm:$0xff] 0.0
      %209 = vst [vmem:[#allocation2 + $0x128] sm:$0xff] 0.0
      %210 = vst [vmem:[#allocation2 + $0x130] sm:$0x3] 0.0
      %211 = vst [vmem:[#allocation2 + $0x138] sm:$0xff] 0.0
      %212 = vst [vmem:[#allocation2 + $0x140] sm:$0xff] 0.0
      %213 = vst [vmem:[#allocation2 + $0x148] sm:$0x3] 0.0
      %214 = vst [vmem:[#allocation2 + $0x150] sm:$0xff] 0.0
      %215 = vst [vmem:[#allocation2 + $0x158] sm:$0xff] 0.0
      %216 = vst [vmem:[#allocation2 + $0x160] sm:$0x3] 0.0
      %217 = vst [vmem:[#allocation2 + $0x168] sm:$0xff] 0.0
      %218 = vst [vmem:[#allocation2 + $0x170] sm:$0xff] 0.0
      %219 = vst [vmem:[#allocation2 + $0x178] sm:$0x3] 0.0
      %220 = vst [vmem:[#allocation2 + $0x180] sm:$0xff] 0.0
      %221 = vst [vmem:[#allocation2 + $0x188] sm:$0xff] 0.0
      %222 = vst [vmem:[#allocation2 + $0x190] sm:$0x3] 0.0
      %223 = vst [vmem:[#allocation2 + $0x198] sm:$0xff] 0.0
      %224 = vst [vmem:[#allocation2 + $0x1a0] sm:$0xff] 0.0
      %225 = vst [vmem:[#allocation2 + $0x1a8] sm:$0x3] 0.0
      %v226 = vld [vmem:[%s165] sm:$0xf]
      %v227 = vld [vmem:[%s165 + $0x4] sm:$0xf]
      %v228 = vld [vmem:[%s165 + $0x8] sm:$0xf]
      %v229 = vld [vmem:[%s165 + $0xc] sm:$0xf]
      %v230 = vld [vmem:[%s165 + $0x10] sm:$0xf]
      %v231 = vld [vmem:[%s165 + $0x14] sm:$0xf]
      %v232 = vld [vmem:[%s165 + $0x18] sm:$0xf]
      %v233 = vld [vmem:[%s165 + $0x1c] sm:$0xf]
      %v234 = vld [vmem:[%s165 + $0x20] sm:$0xf]
      %v235 = vld [vmem:[%s165 + $0x24] sm:$0xf]
      %v236 = vld [vmem:[%s165 + $0x28] sm:$0xf]
      %v237 = vld [vmem:[%s165 + $0x2c] sm:$0xf]
      %v238 = vld [vmem:[%s165 + $0x30] sm:$0xf]
      %v239 = vld [vmem:[%s165 + $0x34] sm:$0xf]
      %v240 = vld [vmem:[%s165 + $0x38] sm:$0xf]
      %v241 = vld [vmem:[%s165 + $0x3c] sm:$0xf]
      %v242 = vld [vmem:[%s165 + $0x40] sm:$0xf]
      %v243 = vld [vmem:[%s165 + $0x44] sm:$0xf]
      %v244 = vld [vmem:[%s165 + $0x48] sm:$0xf]
      %v245 = vld [vmem:[%s165 + $0x4c] sm:$0xf]
      %v246 = vld [vmem:[%s165 + $0x50] sm:$0xf]
      %v247 = vld [vmem:[%s165 + $0x54] sm:$0xf]
      %v248 = vld [vmem:[%s165 + $0x58] sm:$0xf]
      %v249 = vld [vmem:[%s165 + $0x5c] sm:$0xf]
      %v250 = vld [vmem:[%s165 + $0x60] sm:$0xf]
      %v251 = vld [vmem:[%s165 + $0x64] sm:$0xf]
      %v252 = vld [vmem:[%s165 + $0x68] sm:$0xf]
      %v253 = vld [vmem:[%s165 + $0x6c] sm:$0xf]
      %v254 = vld [vmem:[%s165 + $0x70] sm:$0xf]
      %v255 = vld [vmem:[%s165 + $0x74] sm:$0xf]
      %v256 = vld [vmem:[%s165 + $0x78] sm:$0xf]
      %v257 = vld [vmem:[%s165 + $0x7c] sm:$0xf]
      %v258 = vunpack.c.l.bf16 %v226
      %v259 = vunpack.c.l.bf16 %v227
      %v260 = vunpack.c.l.bf16 %v228
      %v261 = vunpack.c.l.bf16 %v229
      %v262 = vunpack.c.l.bf16 %v230
      %v263 = vunpack.c.l.bf16 %v231
      %v264 = vunpack.c.l.bf16 %v232
      %v265 = vunpack.c.l.bf16 %v233
      %v266 = vunpack.c.l.bf16 %v234
      %v267 = vunpack.c.l.bf16 %v235
      %v268 = vunpack.c.l.bf16 %v236
      %v269 = vunpack.c.l.bf16 %v237
      %v270 = vunpack.c.l.bf16 %v238
      %v271 = vunpack.c.l.bf16 %v239
      %v272 = vunpack.c.l.bf16 %v240
      %v273 = vunpack.c.l.bf16 %v241
      %v274 = vunpack.c.l.bf16 %v242
      %v275 = vunpack.c.l.bf16 %v243
      %v276 = vunpack.c.l.bf16 %v244
      %v277 = vunpack.c.l.bf16 %v245
      %v278 = vunpack.c.l.bf16 %v246
      %v279 = vunpack.c.l.bf16 %v247
      %v280 = vunpack.c.l.bf16 %v248
      %v281 = vunpack.c.l.bf16 %v249
      %v282 = vunpack.c.l.bf16 %v250
      %v283 = vunpack.c.l.bf16 %v251
      %v284 = vunpack.c.l.bf16 %v252
      %v285 = vunpack.c.l.bf16 %v253
      %v286 = vunpack.c.l.bf16 %v254
      %v287 = vunpack.c.l.bf16 %v255
      %v288 = vunpack.c.l.bf16 %v256
      %v289 = vunpack.c.l.bf16 %v257
      %s290 = scalar_lea.vmem [#allocation2], 24
      %291 = vst [vmem:[%s290 + $0x1] sm:$0xff] %v258
      %292 = vst [vmem:[%s290 + $0x9] sm:$0xff] %v259
      %293 = vst [vmem:[%s290 + $0x19] sm:$0xff] %v260
      %294 = vst [vmem:[%s290 + $0x21] sm:$0xff] %v261
      %295 = vst [vmem:[%s290 + $0x31] sm:$0xff] %v262
      %296 = vst [vmem:[%s290 + $0x39] sm:$0xff] %v263
      %297 = vst [vmem:[%s290 + $0x49] sm:$0xff] %v264
      %298 = vst [vmem:[%s290 + $0x51] sm:$0xff] %v265
      %299 = vst [vmem:[%s290 + $0x61] sm:$0xff] %v266
      %300 = vst [vmem:[%s290 + $0x69] sm:$0xff] %v267
      %301 = vst [vmem:[%s290 + $0x79] sm:$0xff] %v268
      %302 = vst [vmem:[%s290 + $0x81] sm:$0xff] %v269
      %303 = vst [vmem:[%s290 + $0x91] sm:$0xff] %v270
      %304 = vst [vmem:[%s290 + $0x99] sm:$0xff] %v271
      %305 = vst [vmem:[%s290 + $0xa9] sm:$0xff] %v272
      %306 = vst [vmem:[%s290 + $0xb1] sm:$0xff] %v273
      %307 = vst [vmem:[%s290 + $0xc1] sm:$0xff] %v274
      %308 = vst [vmem:[%s290 + $0xc9] sm:$0xff] %v275
      %309 = vst [vmem:[%s290 + $0xd9] sm:$0xff] %v276
      %310 = vst [vmem:[%s290 + $0xe1] sm:$0xff] %v277
      %311 = vst [vmem:[%s290 + $0xf1] sm:$0xff] %v278
      %312 = vst [vmem:[%s290 + $0xf9] sm:$0xff] %v279
      %313 = vst [vmem:[%s290 + $0x109] sm:$0xff] %v280
      %314 = vst [vmem:[%s290 + $0x111] sm:$0xff] %v281
      %315 = vst [vmem:[%s290 + $0x121] sm:$0xff] %v282
      %316 = vst [vmem:[%s290 + $0x129] sm:$0xff] %v283
      %317 = vst [vmem:[%s290 + $0x139] sm:$0xff] %v284
      %318 = vst [vmem:[%s290 + $0x141] sm:$0xff] %v285
      %319 = vst [vmem:[%s290 + $0x151] sm:$0xff] %v286
      %320 = vst [vmem:[%s290 + $0x159] sm:$0xff] %v287
      %321 = vst [vmem:[%s290 + $0x169] sm:$0xff] %v288
      %322 = vst [vmem:[%s290 + $0x171] sm:$0xff] %v289
      %v323 = vld [vmem:[#allocation2] ss:$2 sm:$0xff]
      %s324 = scalar_lea.vmem [#allocation2], 48
      %v325 = vld [vmem:[%s324] ss:$2 sm:$0xff]
      %s326 = scalar_lea.vmem [#allocation2], 96
      %v327 = vld [vmem:[%s326] ss:$2 sm:$0xff]
      %s328 = scalar_lea.vmem [#allocation2], 144
      %v329 = vld [vmem:[%s328] ss:$2 sm:$0xff]
      %s330 = scalar_lea.vmem [#allocation2], 192
      %v331 = vld [vmem:[%s330] ss:$2 sm:$0xff]
      %s332 = scalar_lea.vmem [#allocation2], 240
      %v333 = vld [vmem:[%s332] ss:$2 sm:$0xff]
      %s334 = scalar_lea.vmem [#allocation2], 288
      %v335 = vld [vmem:[%s334] ss:$2 sm:$0xff]
      %s336 = scalar_lea.vmem [#allocation2], 336
      %v337 = vld [vmem:[%s336] ss:$2 sm:$0xff]
      %v338 = vpack.c.bf16 %v325, %v323
      %v339 = vpack.c.bf16 %v329, %v327
      %v340 = vpack.c.bf16 %v333, %v331
      %v341 = vpack.c.bf16 %v337, %v335
      %v342 = vld [vmem:[%s1] sm:$0xf]
      %v343 = vld [vmem:[%s1 + $0x4] sm:$0xf]
      %v344 = vld [vmem:[%s1 + $0x8] sm:$0xf]
      %v345 = vld [vmem:[%s1 + $0xc] sm:$0xf]
      %v346 = vld [vmem:[%s1 + $0x10] sm:$0xf]
      %v347 = vld [vmem:[%s1 + $0x14] sm:$0xf]
      %v348 = vld [vmem:[%s1 + $0x18] sm:$0xf]
      %v349 = vld [vmem:[%s1 + $0x1c] sm:$0xf]
      %v350 = vld [vmem:[%s1 + $0x20] sm:$0xf]
      %v351 = vld [vmem:[%s1 + $0x24] sm:$0xf]
      %v352 = vld [vmem:[%s1 + $0x28] sm:$0xf]
      %v353 = vld [vmem:[%s1 + $0x2c] sm:$0xf]
      %v354 = vld [vmem:[%s1 + $0x30] sm:$0xf]
      %v355 = vld [vmem:[%s1 + $0x34] sm:$0xf]
      %v356 = vld [vmem:[%s1 + $0x38] sm:$0xf]
      %v357 = vld [vmem:[%s1 + $0x3c] sm:$0xf]
      %s358 = scalar_lea.vmem [#allocation2], 1
      %v359 = vld [vmem:[%s358] ss:$2 sm:$0xff]
      %s360 = scalar_lea.vmem [#allocation2], 49
      %v361 = vld [vmem:[%s360] ss:$2 sm:$0xff]
      %s362 = scalar_lea.vmem [#allocation2], 97
      %v363 = vld [vmem:[%s362] ss:$2 sm:$0xff]
      %s364 = scalar_lea.vmem [#allocation2], 145
      %v365 = vld [vmem:[%s364] ss:$2 sm:$0xff]
      %s366 = scalar_lea.vmem [#allocation2], 193
      %v367 = vld [vmem:[%s366] ss:$2 sm:$0xff]
      %s368 = scalar_lea.vmem [#allocation2], 241
      %v369 = vld [vmem:[%s368] ss:$2 sm:$0xff]
      %s370 = scalar_lea.vmem [#allocation2], 289
      %v371 = vld [vmem:[%s370] ss:$2 sm:$0xff]
      %s372 = scalar_lea.vmem [#allocation2], 337
      %v373 = vld [vmem:[%s372] ss:$2 sm:$0xff]
      %v374 = vpack.c.bf16 %v361, %v359
      %v375 = vpack.c.bf16 %v365, %v363
      %v376 = vpack.c.bf16 %v369, %v367
      %v377 = vpack.c.bf16 %v373, %v371
      %s378 = scalar_lea.vmem %s1, 64
      %v379 = vld [vmem:[%s378] sm:$0xf]
      %v380 = vld [vmem:[%s378 + $0x4] sm:$0xf]
      %v381 = vld [vmem:[%s378 + $0x8] sm:$0xf]
      %v382 = vld [vmem:[%s378 + $0xc] sm:$0xf]
      %v383 = vld [vmem:[%s378 + $0x10] sm:$0xf]
      %v384 = vld [vmem:[%s378 + $0x14] sm:$0xf]
      %v385 = vld [vmem:[%s378 + $0x18] sm:$0xf]
      %v386 = vld [vmem:[%s378 + $0x1c] sm:$0xf]
      %v387 = vld [vmem:[%s378 + $0x20] sm:$0xf]
      %v388 = vld [vmem:[%s378 + $0x24] sm:$0xf]
      %v389 = vld [vmem:[%s378 + $0x28] sm:$0xf]
      %v390 = vld [vmem:[%s378 + $0x2c] sm:$0xf]
      %v391 = vld [vmem:[%s378 + $0x30] sm:$0xf]
      %v392 = vld [vmem:[%s378 + $0x34] sm:$0xf]
      %v393 = vld [vmem:[%s378 + $0x38] sm:$0xf]
      %v394 = vld [vmem:[%s378 + $0x3c] sm:$0xf]
      %v411 = vunpack.c.l.b16 %v379
      %v412 = vunpack.c.l.b16 %v380
      %v413 = vunpack.c.l.b16 %v381
      %v414 = vunpack.c.l.b16 %v382
      %v415 = vunpack.c.l.b16 %v383
      %v416 = vunpack.c.l.b16 %v384
      %v417 = vunpack.c.l.b16 %v385
      %v418 = vunpack.c.l.b16 %v386
      %v419 = vunpack.c.l.b16 %v387
      %v420 = vunpack.c.l.b16 %v388
      %v421 = vunpack.c.l.b16 %v389
      %v422 = vunpack.c.l.b16 %v390
      %v423 = vunpack.c.l.b16 %v391
      %v424 = vunpack.c.l.b16 %v392
      %v425 = vunpack.c.l.b16 %v393
      %v426 = vunpack.c.l.b16 %v394
      %v427 = vpack.c.b16 %v412, %v411
      %v428 = vpack.c.b16 %v414, %v413
      %v429 = vpack.c.b16 %v416, %v415
      %v430 = vpack.c.b16 %v418, %v417
      %v431 = vpack.c.b16 %v420, %v419
      %v432 = vpack.c.b16 %v422, %v421
      %v433 = vpack.c.b16 %v424, %v423
      %v434 = vpack.c.b16 %v426, %v425
      %443 = vmatprep.subr.bf16.mxu0 0
      %444 = vmatpush1.bf16.msra.mxu0 %v434
      %445 = vmatprep.subr.bf16.mxu0 0
      %446 = vmatpush1.bf16.msra.mxu0 %v433
      %447 = vmatprep.subr.bf16.mxu0 0
      %448 = vmatpush1.bf16.msra.mxu0 %v432
      %449 = vmatprep.subr.bf16.mxu0 0
      %450 = vmatpush1.bf16.msra.mxu0 %v431
      %451 = vmatprep.subr.bf16.mxu0 0
      %452 = vmatpush1.bf16.msra.mxu0 %v430
      %453 = vmatprep.subr.bf16.mxu0 0
      %454 = vmatpush1.bf16.msra.mxu0 %v429
      %455 = vmatprep.subr.bf16.mxu0 0
      %456 = vmatpush1.bf16.msra.mxu0 %v428
      %457 = vmatprep.subr.bf16.mxu0 0
      %458 = vmatpush1.bf16.msra.mxu0 %v427
      %459 = vmatprep.subr.bf16.mxu0 0
      %460 = vmatpush2.bf16.msra.mxu0 0
      %461 = vmatprep.subr.bf16.mxu0 0
      %462 = vmatpush2.bf16.msra.mxu0 0
      %463 = vmatprep.subr.bf16.mxu0 0
      %464 = vmatpush2.bf16.msra.mxu0 0
      %465 = vmatprep.subr.bf16.mxu0 0
      %466 = vmatpush2.bf16.msra.mxu0 0
      %467 = vmatprep.subr.bf16.mxu0 0
      %468 = vmatpush2.bf16.msra.mxu0 0
      %469 = vmatprep.subr.bf16.mxu0 0
      %470 = vmatpush2.bf16.msra.mxu0 0
      %471 = vmatprep.subr.bf16.mxu0 0
      %472 = vmatpush2.bf16.msra.mxu0 0
      %473 = vmatprep.subr.bf16.mxu0 0
      %474 = vmatpush2.bf16.msra.mxu0 0
      %475 = vmatprep.mubr.bf16.mxu0 0
      %476 = vmatmul.mubr.bf16.gmra.mxu0 %v374
      %v477 = vpop.f32.mrf.mxu0
      %v478 = vadd.f32 0.0, %v477
      %v479 = vpop.f32.mrf.mxu0
      %v480 = vpop.f32.mrf.mxu0
      %v481 = vadd.f32 0.0, %v480
      %v482 = vpop.f32.mrf.mxu0
      %483 = vmatprep.mubr.bf16.mxu0 0
      %484 = vmatmul.mubr.bf16.gmra.mxu0 %v375
      %v485 = vpop.f32.mrf.mxu0
      %v486 = vadd.f32 0.0, %v485
      %v487 = vpop.f32.mrf.mxu0
      %v488 = vpop.f32.mrf.mxu0
      %v489 = vadd.f32 0.0, %v488
      %v490 = vpop.f32.mrf.mxu0
      %491 = vmatprep.mubr.bf16.mxu0 0
      %492 = vmatmul.mubr.bf16.gmra.mxu0 %v376
      %v493 = vpop.f32.mrf.mxu0
      %v494 = vadd.f32 0.0, %v493
      %v495 = vpop.f32.mrf.mxu0
      %v496 = vpop.f32.mrf.mxu0
      %v497 = vadd.f32 0.0, %v496
      %v498 = vpop.f32.mrf.mxu0
      %499 = vmatprep.mubr.bf16.mxu0 0
      %500 = vmatmul.mubr.bf16.gmra.mxu0 %v377
      %v501 = vpop.f32.mrf.mxu0
      %v502 = vadd.f32 0.0, %v501
      %v503 = vpop.f32.mrf.mxu0
      %v504 = vpop.f32.mrf.mxu0
      %v505 = vadd.f32 0.0, %v504
      %v506 = vpop.f32.mrf.mxu0
      %507 = vdwg.mxu0
      %v524 = vunpack.c.l.b16 %v342
      %v525 = vunpack.c.l.b16 %v343
      %v526 = vunpack.c.l.b16 %v344
      %v527 = vunpack.c.l.b16 %v345
      %v528 = vunpack.c.l.b16 %v346
      %v529 = vunpack.c.l.b16 %v347
      %v530 = vunpack.c.l.b16 %v348
      %v531 = vunpack.c.l.b16 %v349
      %v532 = vunpack.c.l.b16 %v350
      %v533 = vunpack.c.l.b16 %v351
      %v534 = vunpack.c.l.b16 %v352
      %v535 = vunpack.c.l.b16 %v353
      %v536 = vunpack.c.l.b16 %v354
      %v537 = vunpack.c.l.b16 %v355
      %v538 = vunpack.c.l.b16 %v356
      %v539 = vunpack.c.l.b16 %v357
      %v540 = vpack.c.b16 %v525, %v524
      %v541 = vpack.c.b16 %v527, %v526
      %v542 = vpack.c.b16 %v529, %v528
      %v543 = vpack.c.b16 %v531, %v530
      %v544 = vpack.c.b16 %v533, %v532
      %v545 = vpack.c.b16 %v535, %v534
      %v546 = vpack.c.b16 %v537, %v536
      %v547 = vpack.c.b16 %v539, %v538
      %556 = vmatprep.subr.bf16.mxu0 0
      %557 = vmatpush1.bf16.msra.mxu0 %v547
      %558 = vmatprep.subr.bf16.mxu0 0
      %559 = vmatpush1.bf16.msra.mxu0 %v546
      %560 = vmatprep.subr.bf16.mxu0 0
      %561 = vmatpush1.bf16.msra.mxu0 %v545
      %562 = vmatprep.subr.bf16.mxu0 0
      %563 = vmatpush1.bf16.msra.mxu0 %v544
      %564 = vmatprep.subr.bf16.mxu0 0
      %565 = vmatpush1.bf16.msra.mxu0 %v543
      %566 = vmatprep.subr.bf16.mxu0 0
      %567 = vmatpush1.bf16.msra.mxu0 %v542
      %568 = vmatprep.subr.bf16.mxu0 0
      %569 = vmatpush1.bf16.msra.mxu0 %v541
      %570 = vmatprep.subr.bf16.mxu0 0
      %571 = vmatpush1.bf16.msra.mxu0 %v540
      %572 = vmatprep.subr.bf16.mxu0 0
      %573 = vmatpush2.bf16.msra.mxu0 0
      %574 = vmatprep.subr.bf16.mxu0 0
      %575 = vmatpush2.bf16.msra.mxu0 0
      %576 = vmatprep.subr.bf16.mxu0 0
      %577 = vmatpush2.bf16.msra.mxu0 0
      %578 = vmatprep.subr.bf16.mxu0 0
      %579 = vmatpush2.bf16.msra.mxu0 0
      %580 = vmatprep.subr.bf16.mxu0 0
      %581 = vmatpush2.bf16.msra.mxu0 0
      %582 = vmatprep.subr.bf16.mxu0 0
      %583 = vmatpush2.bf16.msra.mxu0 0
      %584 = vmatprep.subr.bf16.mxu0 0
      %585 = vmatpush2.bf16.msra.mxu0 0
      %586 = vmatprep.subr.bf16.mxu0 0
      %587 = vmatpush2.bf16.msra.mxu0 0
      %588 = vmatprep.mubr.bf16.mxu0 0
      %589 = vmatmul.mubr.bf16.gmra.mxu0 %v338
      %v590 = vpop.f32.mrf.mxu0
      %v591 = vadd.f32 %v478, %v590
      %v592 = vpop.f32.mrf.mxu0
      %v593 = vpop.f32.mrf.mxu0
      %v594 = vadd.f32 %v481, %v593
      %v595 = vpop.f32.mrf.mxu0
      %596 = vmatprep.mubr.bf16.mxu0 0
      %597 = vmatmul.mubr.bf16.gmra.mxu0 %v339
      %v598 = vpop.f32.mrf.mxu0
      %v599 = vadd.f32 %v486, %v598
      %v600 = vpop.f32.mrf.mxu0
      %v601 = vpop.f32.mrf.mxu0
      %v602 = vadd.f32 %v489, %v601
      %v603 = vpop.f32.mrf.mxu0
      %604 = vmatprep.mubr.bf16.mxu0 0
      %605 = vmatmul.mubr.bf16.gmra.mxu0 %v340
      %v606 = vpop.f32.mrf.mxu0
      %v607 = vadd.f32 %v494, %v606
      %v608 = vpop.f32.mrf.mxu0
      %v609 = vpop.f32.mrf.mxu0
      %v610 = vadd.f32 %v497, %v609
      %v611 = vpop.f32.mrf.mxu0
      %612 = vmatprep.mubr.bf16.mxu0 0
      %613 = vmatmul.mubr.bf16.gmra.mxu0 %v341
      %v614 = vpop.f32.mrf.mxu0
      %v615 = vadd.f32 %v502, %v614
      %v616 = vpop.f32.mrf.mxu0
      %v617 = vpop.f32.mrf.mxu0
      %v618 = vadd.f32 %v505, %v617
      %v619 = vpop.f32.mrf.mxu0
      %620 = vdwg.mxu0
      %s621 = scalar_lea.vmem [#allocation2], 2
      %v622 = vld [vmem:[%s621] ss:$2 sm:$0xff]
      %s623 = scalar_lea.vmem [#allocation2], 50
      %v624 = vld [vmem:[%s623] ss:$2 sm:$0xff]
      %s625 = scalar_lea.vmem [#allocation2], 98
      %v626 = vld [vmem:[%s625] ss:$2 sm:$0xff]
      %s627 = scalar_lea.vmem [#allocation2], 146
      %v628 = vld [vmem:[%s627] ss:$2 sm:$0xff]
      %s629 = scalar_lea.vmem [#allocation2], 194
      %v630 = vld [vmem:[%s629] ss:$2 sm:$0xff]
      %s631 = scalar_lea.vmem [#allocation2], 242
      %v632 = vld [vmem:[%s631] ss:$2 sm:$0xff]
      %s633 = scalar_lea.vmem [#allocation2], 290
      %v634 = vld [vmem:[%s633] ss:$2 sm:$0xff]
      %s635 = scalar_lea.vmem [#allocation2], 338
      %v636 = vld [vmem:[%s635] ss:$2 sm:$0xff]
      %v637 = vpack.c.bf16 %v624, %v622
      %v638 = vpack.c.bf16 %v628, %v626
      %v639 = vpack.c.bf16 %v632, %v630
      %v640 = vpack.c.bf16 %v636, %v634
      %s641 = scalar_lea.vmem %s1, 128
      %v642 = vld [vmem:[%s641] sm:$0xf]
      %v643 = vld [vmem:[%s641 + $0x4] sm:$0xf]
      %v644 = vld [vmem:[%s641 + $0x8] sm:$0xf]
      %v645 = vld [vmem:[%s641 + $0xc] sm:$0xf]
      %v646 = vld [vmem:[%s641 + $0x10] sm:$0xf]
      %v647 = vld [vmem:[%s641 + $0x14] sm:$0xf]
      %v648 = vld [vmem:[%s641 + $0x18] sm:$0xf]
      %v649 = vld [vmem:[%s641 + $0x1c] sm:$0xf]
      %v650 = vld [vmem:[%s641 + $0x20] sm:$0xf]
      %v651 = vld [vmem:[%s641 + $0x24] sm:$0xf]
      %v652 = vld [vmem:[%s641 + $0x28] sm:$0xf]
      %v653 = vld [vmem:[%s641 + $0x2c] sm:$0xf]
      %v654 = vld [vmem:[%s641 + $0x30] sm:$0xf]
      %v655 = vld [vmem:[%s641 + $0x34] sm:$0xf]
      %v656 = vld [vmem:[%s641 + $0x38] sm:$0xf]
      %v657 = vld [vmem:[%s641 + $0x3c] sm:$0xf]
      %v674 = vunpack.c.l.b16 %v642
      %v675 = vunpack.c.l.b16 %v643
      %v676 = vunpack.c.l.b16 %v644
      %v677 = vunpack.c.l.b16 %v645
      %v678 = vunpack.c.l.b16 %v646
      %v679 = vunpack.c.l.b16 %v647
      %v680 = vunpack.c.l.b16 %v648
      %v681 = vunpack.c.l.b16 %v649
      %v682 = vunpack.c.l.b16 %v650
      %v683 = vunpack.c.l.b16 %v651
      %v684 = vunpack.c.l.b16 %v652
      %v685 = vunpack.c.l.b16 %v653
      %v686 = vunpack.c.l.b16 %v654
      %v687 = vunpack.c.l.b16 %v655
      %v688 = vunpack.c.l.b16 %v656
      %v689 = vunpack.c.l.b16 %v657
      %v690 = vpack.c.b16 %v675, %v674
      %v691 = vpack.c.b16 %v677, %v676
      %v692 = vpack.c.b16 %v679, %v678
      %v693 = vpack.c.b16 %v681, %v680
      %v694 = vpack.c.b16 %v683, %v682
      %v695 = vpack.c.b16 %v685, %v684
      %v696 = vpack.c.b16 %v687, %v686
      %v697 = vpack.c.b16 %v689, %v688
      %706 = vmatprep.subr.bf16.mxu0 0
      %707 = vmatpush1.bf16.msra.mxu0 %v697
      %708 = vmatprep.subr.bf16.mxu0 0
      %709 = vmatpush1.bf16.msra.mxu0 %v696
      %710 = vmatprep.subr.bf16.mxu0 0
      %711 = vmatpush1.bf16.msra.mxu0 %v695
      %712 = vmatprep.subr.bf16.mxu0 0
      %713 = vmatpush1.bf16.msra.mxu0 %v694
      %714 = vmatprep.subr.bf16.mxu0 0
      %715 = vmatpush1.bf16.msra.mxu0 %v693
      %716 = vmatprep.subr.bf16.mxu0 0
      %717 = vmatpush1.bf16.msra.mxu0 %v692
      %718 = vmatprep.subr.bf16.mxu0 0
      %719 = vmatpush1.bf16.msra.mxu0 %v691
      %720 = vmatprep.subr.bf16.mxu0 0
      %721 = vmatpush1.bf16.msra.mxu0 %v690
      %722 = vmatprep.subr.bf16.mxu0 0
      %723 = vmatpush2.bf16.msra.mxu0 0
      %724 = vmatprep.subr.bf16.mxu0 0
      %725 = vmatpush2.bf16.msra.mxu0 0
      %726 = vmatprep.subr.bf16.mxu0 0
      %727 = vmatpush2.bf16.msra.mxu0 0
      %728 = vmatprep.subr.bf16.mxu0 0
      %729 = vmatpush2.bf16.msra.mxu0 0
      %730 = vmatprep.subr.bf16.mxu0 0
      %731 = vmatpush2.bf16.msra.mxu0 0
      %732 = vmatprep.subr.bf16.mxu0 0
      %733 = vmatpush2.bf16.msra.mxu0 0
      %734 = vmatprep.subr.bf16.mxu0 0
      %735 = vmatpush2.bf16.msra.mxu0 0
      %736 = vmatprep.subr.bf16.mxu0 0
      %737 = vmatpush2.bf16.msra.mxu0 0
      %738 = vmatprep.mubr.bf16.mxu0 0
      %739 = vmatmul.mubr.bf16.gmra.mxu0 %v637
      %v740 = vpop.f32.mrf.mxu0
      %v741 = vadd.f32 0.0, %v740
      %v742 = vpop.f32.mrf.mxu0
      %v743 = vpop.f32.mrf.mxu0
      %v744 = vadd.f32 0.0, %v743
      %v745 = vpop.f32.mrf.mxu0
      %746 = vmatprep.mubr.bf16.mxu0 0
      %747 = vmatmul.mubr.bf16.gmra.mxu0 %v638
      %v748 = vpop.f32.mrf.mxu0
      %v749 = vadd.f32 0.0, %v748
      %v750 = vpop.f32.mrf.mxu0
      %v751 = vpop.f32.mrf.mxu0
      %v752 = vadd.f32 0.0, %v751
      %v753 = vpop.f32.mrf.mxu0
      %754 = vmatprep.mubr.bf16.mxu0 0
      %755 = vmatmul.mubr.bf16.gmra.mxu0 %v639
      %v756 = vpop.f32.mrf.mxu0
      %v757 = vadd.f32 0.0, %v756
      %v758 = vpop.f32.mrf.mxu0
      %v759 = vpop.f32.mrf.mxu0
      %v760 = vadd.f32 0.0, %v759
      %v761 = vpop.f32.mrf.mxu0
      %762 = vmatprep.mubr.bf16.mxu0 0
      %763 = vmatmul.mubr.bf16.gmra.mxu0 %v640
      %v764 = vpop.f32.mrf.mxu0
      %v765 = vadd.f32 0.0, %v764
      %v766 = vpop.f32.mrf.mxu0
      %v767 = vpop.f32.mrf.mxu0
      %v768 = vadd.f32 0.0, %v767
      %v769 = vpop.f32.mrf.mxu0
      %770 = vdwg.mxu0
      %v771 = vadd.f32 %v591, %v741
      %v772 = vadd.f32 %v594, %v744
      %v773 = vadd.f32 %v599, %v749
      %v774 = vadd.f32 %v602, %v752
      %v775 = vadd.f32 %v607, %v757
      %v776 = vadd.f32 %v610, %v760
      %v777 = vadd.f32 %v615, %v765
      %v778 = vadd.f32 %v618, %v768
      %v779 = vld [vmem:[%s290] ss:$2 sm:$0xff]
      %s780 = scalar_lea.vmem %s290, 48 [#allocation2]
      %v781 = vld [vmem:[%s780] ss:$2 sm:$0xff]
      %s782 = scalar_lea.vmem %s290, 96 [#allocation2]
      %v783 = vld [vmem:[%s782] ss:$2 sm:$0xff]
      %s784 = scalar_lea.vmem %s290, 144 [#allocation2]
      %v785 = vld [vmem:[%s784] ss:$2 sm:$0xff]
      %s786 = scalar_lea.vmem %s290, 192 [#allocation2]
      %v787 = vld [vmem:[%s786] ss:$2 sm:$0xff]
      %s788 = scalar_lea.vmem %s290, 240 [#allocation2]
      %v789 = vld [vmem:[%s788] ss:$2 sm:$0xff]
      %s790 = scalar_lea.vmem %s290, 288 [#allocation2]
      %v791 = vld [vmem:[%s790] ss:$2 sm:$0xff]
      %s792 = scalar_lea.vmem %s290, 336 [#allocation2]
      %v793 = vld [vmem:[%s792] ss:$2 sm:$0xff]
      %v794 = vpack.c.bf16 %v781, %v779
      %v795 = vpack.c.bf16 %v785, %v783
      %v796 = vpack.c.bf16 %v789, %v787
      %v797 = vpack.c.bf16 %v793, %v791
      %s798 = scalar_lea.vmem %s1, 192
      %v799 = vld [vmem:[%s798] sm:$0xf]
      %v800 = vld [vmem:[%s798 + $0x4] sm:$0xf]
      %v801 = vld [vmem:[%s798 + $0x8] sm:$0xf]
      %v802 = vld [vmem:[%s798 + $0xc] sm:$0xf]
      %v803 = vld [vmem:[%s798 + $0x10] sm:$0xf]
      %v804 = vld [vmem:[%s798 + $0x14] sm:$0xf]
      %v805 = vld [vmem:[%s798 + $0x18] sm:$0xf]
      %v806 = vld [vmem:[%s798 + $0x1c] sm:$0xf]
      %v807 = vld [vmem:[%s798 + $0x20] sm:$0xf]
      %v808 = vld [vmem:[%s798 + $0x24] sm:$0xf]
      %v809 = vld [vmem:[%s798 + $0x28] sm:$0xf]
      %v810 = vld [vmem:[%s798 + $0x2c] sm:$0xf]
      %v811 = vld [vmem:[%s798 + $0x30] sm:$0xf]
      %v812 = vld [vmem:[%s798 + $0x34] sm:$0xf]
      %v813 = vld [vmem:[%s798 + $0x38] sm:$0xf]
      %v814 = vld [vmem:[%s798 + $0x3c] sm:$0xf]
      %v831 = vunpack.c.l.b16 %v799
      %v832 = vunpack.c.l.b16 %v800
      %v833 = vunpack.c.l.b16 %v801
      %v834 = vunpack.c.l.b16 %v802
      %v835 = vunpack.c.l.b16 %v803
      %v836 = vunpack.c.l.b16 %v804
      %v837 = vunpack.c.l.b16 %v805
      %v838 = vunpack.c.l.b16 %v806
      %v839 = vunpack.c.l.b16 %v807
      %v840 = vunpack.c.l.b16 %v808
      %v841 = vunpack.c.l.b16 %v809
      %v842 = vunpack.c.l.b16 %v810
      %v843 = vunpack.c.l.b16 %v811
      %v844 = vunpack.c.l.b16 %v812
      %v845 = vunpack.c.l.b16 %v813
      %v846 = vunpack.c.l.b16 %v814
      %v847 = vpack.c.b16 %v832, %v831
      %v848 = vpack.c.b16 %v834, %v833
      %v849 = vpack.c.b16 %v836, %v835
      %v850 = vpack.c.b16 %v838, %v837
      %v851 = vpack.c.b16 %v840, %v839
      %v852 = vpack.c.b16 %v842, %v841
      %v853 = vpack.c.b16 %v844, %v843
      %v854 = vpack.c.b16 %v846, %v845
      %863 = vmatprep.subr.bf16.mxu0 0
      %864 = vmatpush1.bf16.msra.mxu0 %v854
      %865 = vmatprep.subr.bf16.mxu0 0
      %866 = vmatpush1.bf16.msra.mxu0 %v853
      %867 = vmatprep.subr.bf16.mxu0 0
      %868 = vmatpush1.bf16.msra.mxu0 %v852
      %869 = vmatprep.subr.bf16.mxu0 0
      %870 = vmatpush1.bf16.msra.mxu0 %v851
      %871 = vmatprep.subr.bf16.mxu0 0
      %872 = vmatpush1.bf16.msra.mxu0 %v850
      %873 = vmatprep.subr.bf16.mxu0 0
      %874 = vmatpush1.bf16.msra.mxu0 %v849
      %875 = vmatprep.subr.bf16.mxu0 0
      %876 = vmatpush1.bf16.msra.mxu0 %v848
      %877 = vmatprep.subr.bf16.mxu0 0
      %878 = vmatpush1.bf16.msra.mxu0 %v847
      %879 = vmatprep.subr.bf16.mxu0 0
      %880 = vmatpush2.bf16.msra.mxu0 0
      %881 = vmatprep.subr.bf16.mxu0 0
      %882 = vmatpush2.bf16.msra.mxu0 0
      %883 = vmatprep.subr.bf16.mxu0 0
      %884 = vmatpush2.bf16.msra.mxu0 0
      %885 = vmatprep.subr.bf16.mxu0 0
      %886 = vmatpush2.bf16.msra.mxu0 0
      %887 = vmatprep.subr.bf16.mxu0 0
      %888 = vmatpush2.bf16.msra.mxu0 0
      %889 = vmatprep.subr.bf16.mxu0 0
      %890 = vmatpush2.bf16.msra.mxu0 0
      %891 = vmatprep.subr.bf16.mxu0 0
      %892 = vmatpush2.bf16.msra.mxu0 0
      %893 = vmatprep.subr.bf16.mxu0 0
      %894 = vmatpush2.bf16.msra.mxu0 0
      %895 = vmatprep.mubr.bf16.mxu0 0
      %896 = vmatmul.mubr.bf16.gmra.mxu0 %v794
      %v897 = vpop.f32.mrf.mxu0
      %v898 = vadd.f32 0.0, %v897
      %v899 = vpop.f32.mrf.mxu0
      %v900 = vpop.f32.mrf.mxu0
      %v901 = vadd.f32 0.0, %v900
      %v902 = vpop.f32.mrf.mxu0
      %903 = vmatprep.mubr.bf16.mxu0 0
      %904 = vmatmul.mubr.bf16.gmra.mxu0 %v795
      %v905 = vpop.f32.mrf.mxu0
      %v906 = vadd.f32 0.0, %v905
      %v907 = vpop.f32.mrf.mxu0
      %v908 = vpop.f32.mrf.mxu0
      %v909 = vadd.f32 0.0, %v908
      %v910 = vpop.f32.mrf.mxu0
      %911 = vmatprep.mubr.bf16.mxu0 0
      %912 = vmatmul.mubr.bf16.gmra.mxu0 %v796
      %v913 = vpop.f32.mrf.mxu0
      %v914 = vadd.f32 0.0, %v913
      %v915 = vpop.f32.mrf.mxu0
      %v916 = vpop.f32.mrf.mxu0
      %v917 = vadd.f32 0.0, %v916
      %v918 = vpop.f32.mrf.mxu0
      %919 = vmatprep.mubr.bf16.mxu0 0
      %920 = vmatmul.mubr.bf16.gmra.mxu0 %v797
      %v921 = vpop.f32.mrf.mxu0
      %v922 = vadd.f32 0.0, %v921
      %v923 = vpop.f32.mrf.mxu0
      %v924 = vpop.f32.mrf.mxu0
      %v925 = vadd.f32 0.0, %v924
      %v926 = vpop.f32.mrf.mxu0
      %927 = vdwg.mxu0
      %v928 = vadd.f32 %v771, %v898
      %v929 = vadd.f32 %v772, %v901
      %v930 = vadd.f32 %v773, %v906
      %v931 = vadd.f32 %v774, %v909
      %v932 = vadd.f32 %v775, %v914
      %v933 = vadd.f32 %v776, %v917
      %v934 = vadd.f32 %v777, %v922
      %v935 = vadd.f32 %v778, %v925
      %s936 = scalar_lea.vmem %s290, 1 [#allocation2]
      %v937 = vld [vmem:[%s936] ss:$2 sm:$0xff]
      %s938 = scalar_lea.vmem %s290, 49 [#allocation2]
      %v939 = vld [vmem:[%s938] ss:$2 sm:$0xff]
      %s940 = scalar_lea.vmem %s290, 97 [#allocation2]
      %v941 = vld [vmem:[%s940] ss:$2 sm:$0xff]
      %s942 = scalar_lea.vmem %s290, 145 [#allocation2]
      %v943 = vld [vmem:[%s942] ss:$2 sm:$0xff]
      %s944 = scalar_lea.vmem %s290, 193 [#allocation2]
      %v945 = vld [vmem:[%s944] ss:$2 sm:$0xff]
      %s946 = scalar_lea.vmem %s290, 241 [#allocation2]
      %v947 = vld [vmem:[%s946] ss:$2 sm:$0xff]
      %s948 = scalar_lea.vmem %s290, 289 [#allocation2]
      %v949 = vld [vmem:[%s948] ss:$2 sm:$0xff]
      %s950 = scalar_lea.vmem %s290, 337 [#allocation2]
      %v951 = vld [vmem:[%s950] ss:$2 sm:$0xff]
      %v952 = vpack.c.bf16 %v939, %v937
      %v953 = vpack.c.bf16 %v943, %v941
      %v954 = vpack.c.bf16 %v947, %v945
      %v955 = vpack.c.bf16 %v951, %v949
      %s956 = scalar_lea.vmem %s1, 256
      %v957 = vld [vmem:[%s956] sm:$0xf]
      %v958 = vld [vmem:[%s956 + $0x4] sm:$0xf]
      %v959 = vld [vmem:[%s956 + $0x8] sm:$0xf]
      %v960 = vld [vmem:[%s956 + $0xc] sm:$0xf]
      %v961 = vld [vmem:[%s956 + $0x10] sm:$0xf]
      %v962 = vld [vmem:[%s956 + $0x14] sm:$0xf]
      %v963 = vld [vmem:[%s956 + $0x18] sm:$0xf]
      %v964 = vld [vmem:[%s956 + $0x1c] sm:$0xf]
      %v965 = vld [vmem:[%s956 + $0x20] sm:$0xf]
      %v966 = vld [vmem:[%s956 + $0x24] sm:$0xf]
      %v967 = vld [vmem:[%s956 + $0x28] sm:$0xf]
      %v968 = vld [vmem:[%s956 + $0x2c] sm:$0xf]
      %v969 = vld [vmem:[%s956 + $0x30] sm:$0xf]
      %v970 = vld [vmem:[%s956 + $0x34] sm:$0xf]
      %v971 = vld [vmem:[%s956 + $0x38] sm:$0xf]
      %v972 = vld [vmem:[%s956 + $0x3c] sm:$0xf]
      %v989 = vunpack.c.l.b16 %v957
      %v990 = vunpack.c.l.b16 %v958
      %v991 = vunpack.c.l.b16 %v959
      %v992 = vunpack.c.l.b16 %v960
      %v993 = vunpack.c.l.b16 %v961
      %v994 = vunpack.c.l.b16 %v962
      %v995 = vunpack.c.l.b16 %v963
      %v996 = vunpack.c.l.b16 %v964
      %v997 = vunpack.c.l.b16 %v965
      %v998 = vunpack.c.l.b16 %v966
      %v999 = vunpack.c.l.b16 %v967
      %v1000 = vunpack.c.l.b16 %v968
      %v1001 = vunpack.c.l.b16 %v969
      %v1002 = vunpack.c.l.b16 %v970
      %v1003 = vunpack.c.l.b16 %v971
      %v1004 = vunpack.c.l.b16 %v972
      %v1005 = vpack.c.b16 %v990, %v989
      %v1006 = vpack.c.b16 %v992, %v991
      %v1007 = vpack.c.b16 %v994, %v993
      %v1008 = vpack.c.b16 %v996, %v995
      %v1009 = vpack.c.b16 %v998, %v997
      %v1010 = vpack.c.b16 %v1000, %v999
      %v1011 = vpack.c.b16 %v1002, %v1001
      %v1012 = vpack.c.b16 %v1004, %v1003
      %1021 = vmatprep.subr.bf16.mxu0 0
      %1022 = vmatpush1.bf16.msra.mxu0 %v1012
      %1023 = vmatprep.subr.bf16.mxu0 0
      %1024 = vmatpush1.bf16.msra.mxu0 %v1011
      %1025 = vmatprep.subr.bf16.mxu0 0
      %1026 = vmatpush1.bf16.msra.mxu0 %v1010
      %1027 = vmatprep.subr.bf16.mxu0 0
      %1028 = vmatpush1.bf16.msra.mxu0 %v1009
      %1029 = vmatprep.subr.bf16.mxu0 0
      %1030 = vmatpush1.bf16.msra.mxu0 %v1008
      %1031 = vmatprep.subr.bf16.mxu0 0
      %1032 = vmatpush1.bf16.msra.mxu0 %v1007
      %1033 = vmatprep.subr.bf16.mxu0 0
      %1034 = vmatpush1.bf16.msra.mxu0 %v1006
      %1035 = vmatprep.subr.bf16.mxu0 0
      %1036 = vmatpush1.bf16.msra.mxu0 %v1005
      %1037 = vmatprep.subr.bf16.mxu0 0
      %1038 = vmatpush2.bf16.msra.mxu0 0
      %1039 = vmatprep.subr.bf16.mxu0 0
      %1040 = vmatpush2.bf16.msra.mxu0 0
      %1041 = vmatprep.subr.bf16.mxu0 0
      %1042 = vmatpush2.bf16.msra.mxu0 0
      %1043 = vmatprep.subr.bf16.mxu0 0
      %1044 = vmatpush2.bf16.msra.mxu0 0
      %1045 = vmatprep.subr.bf16.mxu0 0
      %1046 = vmatpush2.bf16.msra.mxu0 0
      %1047 = vmatprep.subr.bf16.mxu0 0
      %1048 = vmatpush2.bf16.msra.mxu0 0
      %1049 = vmatprep.subr.bf16.mxu0 0
      %1050 = vmatpush2.bf16.msra.mxu0 0
      %1051 = vmatprep.subr.bf16.mxu0 0
      %1052 = vmatpush2.bf16.msra.mxu0 0
      %1053 = vmatprep.mubr.bf16.mxu0 0
      %1054 = vmatmul.mubr.bf16.gmra.mxu0 %v952
      %v1055 = vpop.f32.mrf.mxu0
      %v1056 = vadd.f32 0.0, %v1055
      %v1057 = vpop.f32.mrf.mxu0
      %v1058 = vpop.f32.mrf.mxu0
      %v1059 = vadd.f32 0.0, %v1058
      %v1060 = vpop.f32.mrf.mxu0
      %1061 = vmatprep.mubr.bf16.mxu0 0
      %1062 = vmatmul.mubr.bf16.gmra.mxu0 %v953
      %v1063 = vpop.f32.mrf.mxu0
      %v1064 = vadd.f32 0.0, %v1063
      %v1065 = vpop.f32.mrf.mxu0
      %v1066 = vpop.f32.mrf.mxu0
      %v1067 = vadd.f32 0.0, %v1066
      %v1068 = vpop.f32.mrf.mxu0
      %1069 = vmatprep.mubr.bf16.mxu0 0
      %1070 = vmatmul.mubr.bf16.gmra.mxu0 %v954
      %v1071 = vpop.f32.mrf.mxu0
      %v1072 = vadd.f32 0.0, %v1071
      %v1073 = vpop.f32.mrf.mxu0
      %v1074 = vpop.f32.mrf.mxu0
      %v1075 = vadd.f32 0.0, %v1074
      %v1076 = vpop.f32.mrf.mxu0
      %1077 = vmatprep.mubr.bf16.mxu0 0
      %1078 = vmatmul.mubr.bf16.gmra.mxu0 %v955
      %v1079 = vpop.f32.mrf.mxu0
      %v1080 = vadd.f32 0.0, %v1079
      %v1081 = vpop.f32.mrf.mxu0
      %v1082 = vpop.f32.mrf.mxu0
      %v1083 = vadd.f32 0.0, %v1082
      %v1084 = vpop.f32.mrf.mxu0
      %1085 = vdwg.mxu0
      %v1086 = vadd.f32 %v928, %v1056
      %v1087 = vadd.f32 %v929, %v1059
      %v1088 = vadd.f32 %v930, %v1064
      %v1089 = vadd.f32 %v931, %v1067
      %v1090 = vadd.f32 %v932, %v1072
      %v1091 = vadd.f32 %v933, %v1075
      %v1092 = vadd.f32 %v934, %v1080
      %v1093 = vadd.f32 %v935, %v1083
      %s1094 = scalar_lea.vmem %s290, 2 [#allocation2]
      %v1095 = vld [vmem:[%s1094] ss:$2 sm:$0xff]
      %s1096 = scalar_lea.vmem %s290, 50 [#allocation2]
      %v1097 = vld [vmem:[%s1096] ss:$2 sm:$0xff]
      %s1098 = scalar_lea.vmem %s290, 98 [#allocation2]
      %v1099 = vld [vmem:[%s1098] ss:$2 sm:$0xff]
      %s1100 = scalar_lea.vmem %s290, 146 [#allocation2]
      %v1101 = vld [vmem:[%s1100] ss:$2 sm:$0xff]
      %s1102 = scalar_lea.vmem %s290, 194 [#allocation2]
      %v1103 = vld [vmem:[%s1102] ss:$2 sm:$0xff]
      %s1104 = scalar_lea.vmem %s290, 242 [#allocation2]
      %v1105 = vld [vmem:[%s1104] ss:$2 sm:$0xff]
      %s1106 = scalar_lea.vmem %s290, 290 [#allocation2]
      %v1107 = vld [vmem:[%s1106] ss:$2 sm:$0xff]
      %s1108 = scalar_lea.vmem %s290, 338 [#allocation2]
      %v1109 = vld [vmem:[%s1108] ss:$2 sm:$0xff]
      %v1110 = vpack.c.bf16 %v1097, %v1095
      %v1111 = vpack.c.bf16 %v1101, %v1099
      %v1112 = vpack.c.bf16 %v1105, %v1103
      %v1113 = vpack.c.bf16 %v1109, %v1107
      %s1114 = scalar_lea.vmem %s1, 320
      %v1115 = vld [vmem:[%s1114] sm:$0xf]
      %v1116 = vld [vmem:[%s1114 + $0x4] sm:$0xf]
      %v1117 = vld [vmem:[%s1114 + $0x8] sm:$0xf]
      %v1118 = vld [vmem:[%s1114 + $0xc] sm:$0xf]
      %v1119 = vld [vmem:[%s1114 + $0x10] sm:$0xf]
      %v1120 = vld [vmem:[%s1114 + $0x14] sm:$0xf]
      %v1121 = vld [vmem:[%s1114 + $0x18] sm:$0xf]
      %v1122 = vld [vmem:[%s1114 + $0x1c] sm:$0xf]
      %v1123 = vld [vmem:[%s1114 + $0x20] sm:$0xf]
      %v1124 = vld [vmem:[%s1114 + $0x24] sm:$0xf]
      %v1125 = vld [vmem:[%s1114 + $0x28] sm:$0xf]
      %v1126 = vld [vmem:[%s1114 + $0x2c] sm:$0xf]
      %v1127 = vld [vmem:[%s1114 + $0x30] sm:$0xf]
      %v1128 = vld [vmem:[%s1114 + $0x34] sm:$0xf]
      %v1129 = vld [vmem:[%s1114 + $0x38] sm:$0xf]
      %v1130 = vld [vmem:[%s1114 + $0x3c] sm:$0xf]
      %v1147 = vunpack.c.l.b16 %v1115
      %v1148 = vunpack.c.l.b16 %v1116
      %v1149 = vunpack.c.l.b16 %v1117
      %v1150 = vunpack.c.l.b16 %v1118
      %v1151 = vunpack.c.l.b16 %v1119
      %v1152 = vunpack.c.l.b16 %v1120
      %v1153 = vunpack.c.l.b16 %v1121
      %v1154 = vunpack.c.l.b16 %v1122
      %v1155 = vunpack.c.l.b16 %v1123
      %v1156 = vunpack.c.l.b16 %v1124
      %v1157 = vunpack.c.l.b16 %v1125
      %v1158 = vunpack.c.l.b16 %v1126
      %v1159 = vunpack.c.l.b16 %v1127
      %v1160 = vunpack.c.l.b16 %v1128
      %v1161 = vunpack.c.l.b16 %v1129
      %v1162 = vunpack.c.l.b16 %v1130
      %v1163 = vpack.c.b16 %v1148, %v1147
      %v1164 = vpack.c.b16 %v1150, %v1149
      %v1165 = vpack.c.b16 %v1152, %v1151
      %v1166 = vpack.c.b16 %v1154, %v1153
      %v1167 = vpack.c.b16 %v1156, %v1155
      %v1168 = vpack.c.b16 %v1158, %v1157
      %v1169 = vpack.c.b16 %v1160, %v1159
      %v1170 = vpack.c.b16 %v1162, %v1161
      %1179 = vmatprep.subr.bf16.mxu0 0
      %1180 = vmatpush1.bf16.msra.mxu0 %v1170
      %1181 = vmatprep.subr.bf16.mxu0 0
      %1182 = vmatpush1.bf16.msra.mxu0 %v1169
      %1183 = vmatprep.subr.bf16.mxu0 0
      %1184 = vmatpush1.bf16.msra.mxu0 %v1168
      %1185 = vmatprep.subr.bf16.mxu0 0
      %1186 = vmatpush1.bf16.msra.mxu0 %v1167
      %1187 = vmatprep.subr.bf16.mxu0 0
      %1188 = vmatpush1.bf16.msra.mxu0 %v1166
      %1189 = vmatprep.subr.bf16.mxu0 0
      %1190 = vmatpush1.bf16.msra.mxu0 %v1165
      %1191 = vmatprep.subr.bf16.mxu0 0
      %1192 = vmatpush1.bf16.msra.mxu0 %v1164
      %1193 = vmatprep.subr.bf16.mxu0 0
      %1194 = vmatpush1.bf16.msra.mxu0 %v1163
      %1195 = vmatprep.subr.bf16.mxu0 0
      %1196 = vmatpush2.bf16.msra.mxu0 0
      %1197 = vmatprep.subr.bf16.mxu0 0
      %1198 = vmatpush2.bf16.msra.mxu0 0
      %1199 = vmatprep.subr.bf16.mxu0 0
      %1200 = vmatpush2.bf16.msra.mxu0 0
      %1201 = vmatprep.subr.bf16.mxu0 0
      %1202 = vmatpush2.bf16.msra.mxu0 0
      %1203 = vmatprep.subr.bf16.mxu0 0
      %1204 = vmatpush2.bf16.msra.mxu0 0
      %1205 = vmatprep.subr.bf16.mxu0 0
      %1206 = vmatpush2.bf16.msra.mxu0 0
      %1207 = vmatprep.subr.bf16.mxu0 0
      %1208 = vmatpush2.bf16.msra.mxu0 0
      %1209 = vmatprep.subr.bf16.mxu0 0
      %1210 = vmatpush2.bf16.msra.mxu0 0
      %1211 = vmatprep.mubr.bf16.mxu0 0
      %1212 = vmatmul.mubr.bf16.gmra.mxu0 %v1110
      %v1213 = vpop.f32.mrf.mxu0
      %v1214 = vadd.f32 0.0, %v1213
      %v1215 = vpop.f32.mrf.mxu0
      %v1216 = vpop.f32.mrf.mxu0
      %v1217 = vadd.f32 0.0, %v1216
      %v1218 = vpop.f32.mrf.mxu0
      %1219 = vmatprep.mubr.bf16.mxu0 0
      %1220 = vmatmul.mubr.bf16.gmra.mxu0 %v1111
      %v1221 = vpop.f32.mrf.mxu0
      %v1222 = vadd.f32 0.0, %v1221
      %v1223 = vpop.f32.mrf.mxu0
      %v1224 = vpop.f32.mrf.mxu0
      %v1225 = vadd.f32 0.0, %v1224
      %v1226 = vpop.f32.mrf.mxu0
      %1227 = vmatprep.mubr.bf16.mxu0 0
      %1228 = vmatmul.mubr.bf16.gmra.mxu0 %v1112
      %v1229 = vpop.f32.mrf.mxu0
      %v1230 = vadd.f32 0.0, %v1229
      %v1231 = vpop.f32.mrf.mxu0
      %v1232 = vpop.f32.mrf.mxu0
      %v1233 = vadd.f32 0.0, %v1232
      %v1234 = vpop.f32.mrf.mxu0
      %1235 = vmatprep.mubr.bf16.mxu0 0
      %1236 = vmatmul.mubr.bf16.gmra.mxu0 %v1113
      %v1237 = vpop.f32.mrf.mxu0
      %v1238 = vadd.f32 0.0, %v1237
      %v1239 = vpop.f32.mrf.mxu0
      %v1240 = vpop.f32.mrf.mxu0
      %v1241 = vadd.f32 0.0, %v1240
      %v1242 = vpop.f32.mrf.mxu0
      %1243 = vdwg.mxu0
      %v1244 = vadd.f32 %v1086, %v1214
      %v1245 = vadd.f32 %v1087, %v1217
      %v1246 = vadd.f32 %v1088, %v1222
      %v1247 = vadd.f32 %v1089, %v1225
      %v1248 = vadd.f32 %v1090, %v1230
      %v1249 = vadd.f32 %v1091, %v1233
      %v1250 = vadd.f32 %v1092, %v1238
      %v1251 = vadd.f32 %v1093, %v1241
      %s1252 = scalar_lea.vmem [#allocation2], 48
      %v1253 = vld [vmem:[%s1252] ss:$2 sm:$0xff]
      %s1254 = scalar_lea.vmem %s1252, 48 [#allocation2]
      %v1255 = vld [vmem:[%s1254] ss:$2 sm:$0xff]
      %s1256 = scalar_lea.vmem %s1252, 96 [#allocation2]
      %v1257 = vld [vmem:[%s1256] ss:$2 sm:$0xff]
      %s1258 = scalar_lea.vmem %s1252, 144 [#allocation2]
      %v1259 = vld [vmem:[%s1258] ss:$2 sm:$0xff]
      %s1260 = scalar_lea.vmem %s1252, 192 [#allocation2]
      %v1261 = vld [vmem:[%s1260] ss:$2 sm:$0xff]
      %s1262 = scalar_lea.vmem %s1252, 240 [#allocation2]
      %v1263 = vld [vmem:[%s1262] ss:$2 sm:$0xff]
      %s1264 = scalar_lea.vmem %s1252, 288 [#allocation2]
      %v1265 = vld [vmem:[%s1264] ss:$2 sm:$0xff]
      %s1266 = scalar_lea.vmem %s1252, 336 [#allocation2]
      %v1267 = vld [vmem:[%s1266] ss:$2 sm:$0xff]
      %v1268 = vpack.c.bf16 %v1255, %v1253
      %v1269 = vpack.c.bf16 %v1259, %v1257
      %v1270 = vpack.c.bf16 %v1263, %v1261
      %v1271 = vpack.c.bf16 %v1267, %v1265
      %s1272 = scalar_lea.vmem %s1, 384
      %v1273 = vld [vmem:[%s1272] sm:$0xf]
      %v1274 = vld [vmem:[%s1272 + $0x4] sm:$0xf]
      %v1275 = vld [vmem:[%s1272 + $0x8] sm:$0xf]
      %v1276 = vld [vmem:[%s1272 + $0xc] sm:$0xf]
      %v1277 = vld [vmem:[%s1272 + $0x10] sm:$0xf]
      %v1278 = vld [vmem:[%s1272 + $0x14] sm:$0xf]
      %v1279 = vld [vmem:[%s1272 + $0x18] sm:$0xf]
      %v1280 = vld [vmem:[%s1272 + $0x1c] sm:$0xf]
      %v1281 = vld [vmem:[%s1272 + $0x20] sm:$0xf]
      %v1282 = vld [vmem:[%s1272 + $0x24] sm:$0xf]
      %v1283 = vld [vmem:[%s1272 + $0x28] sm:$0xf]
      %v1284 = vld [vmem:[%s1272 + $0x2c] sm:$0xf]
      %v1285 = vld [vmem:[%s1272 + $0x30] sm:$0xf]
      %v1286 = vld [vmem:[%s1272 + $0x34] sm:$0xf]
      %v1287 = vld [vmem:[%s1272 + $0x38] sm:$0xf]
      %v1288 = vld [vmem:[%s1272 + $0x3c] sm:$0xf]
      %v1305 = vunpack.c.l.b16 %v1273
      %v1306 = vunpack.c.l.b16 %v1274
      %v1307 = vunpack.c.l.b16 %v1275
      %v1308 = vunpack.c.l.b16 %v1276
      %v1309 = vunpack.c.l.b16 %v1277
      %v1310 = vunpack.c.l.b16 %v1278
      %v1311 = vunpack.c.l.b16 %v1279
      %v1312 = vunpack.c.l.b16 %v1280
      %v1313 = vunpack.c.l.b16 %v1281
      %v1314 = vunpack.c.l.b16 %v1282
      %v1315 = vunpack.c.l.b16 %v1283
      %v1316 = vunpack.c.l.b16 %v1284
      %v1317 = vunpack.c.l.b16 %v1285
      %v1318 = vunpack.c.l.b16 %v1286
      %v1319 = vunpack.c.l.b16 %v1287
      %v1320 = vunpack.c.l.b16 %v1288
      %v1321 = vpack.c.b16 %v1306, %v1305
      %v1322 = vpack.c.b16 %v1308, %v1307
      %v1323 = vpack.c.b16 %v1310, %v1309
      %v1324 = vpack.c.b16 %v1312, %v1311
      %v1325 = vpack.c.b16 %v1314, %v1313
      %v1326 = vpack.c.b16 %v1316, %v1315
      %v1327 = vpack.c.b16 %v1318, %v1317
      %v1328 = vpack.c.b16 %v1320, %v1319
      %1337 = vmatprep.subr.bf16.mxu0 0
      %1338 = vmatpush1.bf16.msra.mxu0 %v1328
      %1339 = vmatprep.subr.bf16.mxu0 0
      %1340 = vmatpush1.bf16.msra.mxu0 %v1327
      %1341 = vmatprep.subr.bf16.mxu0 0
      %1342 = vmatpush1.bf16.msra.mxu0 %v1326
      %1343 = vmatprep.subr.bf16.mxu0 0
      %1344 = vmatpush1.bf16.msra.mxu0 %v1325
      %1345 = vmatprep.subr.bf16.mxu0 0
      %1346 = vmatpush1.bf16.msra.mxu0 %v1324
      %1347 = vmatprep.subr.bf16.mxu0 0
      %1348 = vmatpush1.bf16.msra.mxu0 %v1323
      %1349 = vmatprep.subr.bf16.mxu0 0
      %1350 = vmatpush1.bf16.msra.mxu0 %v1322
      %1351 = vmatprep.subr.bf16.mxu0 0
      %1352 = vmatpush1.bf16.msra.mxu0 %v1321
      %1353 = vmatprep.subr.bf16.mxu0 0
      %1354 = vmatpush2.bf16.msra.mxu0 0
      %1355 = vmatprep.subr.bf16.mxu0 0
      %1356 = vmatpush2.bf16.msra.mxu0 0
      %1357 = vmatprep.subr.bf16.mxu0 0
      %1358 = vmatpush2.bf16.msra.mxu0 0
      %1359 = vmatprep.subr.bf16.mxu0 0
      %1360 = vmatpush2.bf16.msra.mxu0 0
      %1361 = vmatprep.subr.bf16.mxu0 0
      %1362 = vmatpush2.bf16.msra.mxu0 0
      %1363 = vmatprep.subr.bf16.mxu0 0
      %1364 = vmatpush2.bf16.msra.mxu0 0
      %1365 = vmatprep.subr.bf16.mxu0 0
      %1366 = vmatpush2.bf16.msra.mxu0 0
      %1367 = vmatprep.subr.bf16.mxu0 0
      %1368 = vmatpush2.bf16.msra.mxu0 0
      %1369 = vmatprep.mubr.bf16.mxu0 0
      %1370 = vmatmul.mubr.bf16.gmra.mxu0 %v1268
      %v1371 = vpop.f32.mrf.mxu0
      %v1372 = vadd.f32 0.0, %v1371
      %v1373 = vpop.f32.mrf.mxu0
      %v1374 = vpop.f32.mrf.mxu0
      %v1375 = vadd.f32 0.0, %v1374
      %v1376 = vpop.f32.mrf.mxu0
      %1377 = vmatprep.mubr.bf16.mxu0 0
      %1378 = vmatmul.mubr.bf16.gmra.mxu0 %v1269
      %v1379 = vpop.f32.mrf.mxu0
      %v1380 = vadd.f32 0.0, %v1379
      %v1381 = vpop.f32.mrf.mxu0
      %v1382 = vpop.f32.mrf.mxu0
      %v1383 = vadd.f32 0.0, %v1382
      %v1384 = vpop.f32.mrf.mxu0
      %1385 = vmatprep.mubr.bf16.mxu0 0
      %1386 = vmatmul.mubr.bf16.gmra.mxu0 %v1270
      %v1387 = vpop.f32.mrf.mxu0
      %v1388 = vadd.f32 0.0, %v1387
      %v1389 = vpop.f32.mrf.mxu0
      %v1390 = vpop.f32.mrf.mxu0
      %v1391 = vadd.f32 0.0, %v1390
      %v1392 = vpop.f32.mrf.mxu0
      %1393 = vmatprep.mubr.bf16.mxu0 0
      %1394 = vmatmul.mubr.bf16.gmra.mxu0 %v1271
      %v1395 = vpop.f32.mrf.mxu0
      %v1396 = vadd.f32 0.0, %v1395
      %v1397 = vpop.f32.mrf.mxu0
      %v1398 = vpop.f32.mrf.mxu0
      %v1399 = vadd.f32 0.0, %v1398
      %v1400 = vpop.f32.mrf.mxu0
      %1401 = vdwg.mxu0
      %v1402 = vadd.f32 %v1244, %v1372
      %v1403 = vadd.f32 %v1245, %v1375
      %v1404 = vadd.f32 %v1246, %v1380
      %v1405 = vadd.f32 %v1247, %v1383
      %v1406 = vadd.f32 %v1248, %v1388
      %v1407 = vadd.f32 %v1249, %v1391
      %v1408 = vadd.f32 %v1250, %v1396
      %v1409 = vadd.f32 %v1251, %v1399
      %s1410 = scalar_lea.vmem %s1252, 1 [#allocation2]
      %v1411 = vld [vmem:[%s1410] ss:$2 sm:$0xff]
      %s1412 = scalar_lea.vmem %s1252, 49 [#allocation2]
      %v1413 = vld [vmem:[%s1412] ss:$2 sm:$0xff]
      %s1414 = scalar_lea.vmem %s1252, 97 [#allocation2]
      %v1415 = vld [vmem:[%s1414] ss:$2 sm:$0xff]
      %s1416 = scalar_lea.vmem %s1252, 145 [#allocation2]
      %v1417 = vld [vmem:[%s1416] ss:$2 sm:$0xff]
      %s1418 = scalar_lea.vmem %s1252, 193 [#allocation2]
      %v1419 = vld [vmem:[%s1418] ss:$2 sm:$0xff]
      %s1420 = scalar_lea.vmem %s1252, 241 [#allocation2]
      %v1421 = vld [vmem:[%s1420] ss:$2 sm:$0xff]
      %s1422 = scalar_lea.vmem %s1252, 289 [#allocation2]
      %v1423 = vld [vmem:[%s1422] ss:$2 sm:$0xff]
      %s1424 = scalar_lea.vmem %s1252, 337 [#allocation2]
      %v1425 = vld [vmem:[%s1424] ss:$2 sm:$0xff]
      %v1426 = vpack.c.bf16 %v1413, %v1411
      %v1427 = vpack.c.bf16 %v1417, %v1415
      %v1428 = vpack.c.bf16 %v1421, %v1419
      %v1429 = vpack.c.bf16 %v1425, %v1423
      %s1430 = scalar_lea.vmem %s1, 448
      %v1431 = vld [vmem:[%s1430] sm:$0xf]
      %v1432 = vld [vmem:[%s1430 + $0x4] sm:$0xf]
      %v1433 = vld [vmem:[%s1430 + $0x8] sm:$0xf]
      %v1434 = vld [vmem:[%s1430 + $0xc] sm:$0xf]
      %v1435 = vld [vmem:[%s1430 + $0x10] sm:$0xf]
      %v1436 = vld [vmem:[%s1430 + $0x14] sm:$0xf]
      %v1437 = vld [vmem:[%s1430 + $0x18] sm:$0xf]
      %v1438 = vld [vmem:[%s1430 + $0x1c] sm:$0xf]
      %v1439 = vld [vmem:[%s1430 + $0x20] sm:$0xf]
      %v1440 = vld [vmem:[%s1430 + $0x24] sm:$0xf]
      %v1441 = vld [vmem:[%s1430 + $0x28] sm:$0xf]
      %v1442 = vld [vmem:[%s1430 + $0x2c] sm:$0xf]
      %v1443 = vld [vmem:[%s1430 + $0x30] sm:$0xf]
      %v1444 = vld [vmem:[%s1430 + $0x34] sm:$0xf]
      %v1445 = vld [vmem:[%s1430 + $0x38] sm:$0xf]
      %v1446 = vld [vmem:[%s1430 + $0x3c] sm:$0xf]
      %v1463 = vunpack.c.l.b16 %v1431
      %v1464 = vunpack.c.l.b16 %v1432
      %v1465 = vunpack.c.l.b16 %v1433
      %v1466 = vunpack.c.l.b16 %v1434
      %v1467 = vunpack.c.l.b16 %v1435
      %v1468 = vunpack.c.l.b16 %v1436
      %v1469 = vunpack.c.l.b16 %v1437
      %v1470 = vunpack.c.l.b16 %v1438
      %v1471 = vunpack.c.l.b16 %v1439
      %v1472 = vunpack.c.l.b16 %v1440
      %v1473 = vunpack.c.l.b16 %v1441
      %v1474 = vunpack.c.l.b16 %v1442
      %v1475 = vunpack.c.l.b16 %v1443
      %v1476 = vunpack.c.l.b16 %v1444
      %v1477 = vunpack.c.l.b16 %v1445
      %v1478 = vunpack.c.l.b16 %v1446
      %v1479 = vpack.c.b16 %v1464, %v1463
      %v1480 = vpack.c.b16 %v1466, %v1465
      %v1481 = vpack.c.b16 %v1468, %v1467
      %v1482 = vpack.c.b16 %v1470, %v1469
      %v1483 = vpack.c.b16 %v1472, %v1471
      %v1484 = vpack.c.b16 %v1474, %v1473
      %v1485 = vpack.c.b16 %v1476, %v1475
      %v1486 = vpack.c.b16 %v1478, %v1477
      %1495 = vmatprep.subr.bf16.mxu0 0
      %1496 = vmatpush1.bf16.msra.mxu0 %v1486
      %1497 = vmatprep.subr.bf16.mxu0 0
      %1498 = vmatpush1.bf16.msra.mxu0 %v1485
      %1499 = vmatprep.subr.bf16.mxu0 0
      %1500 = vmatpush1.bf16.msra.mxu0 %v1484
      %1501 = vmatprep.subr.bf16.mxu0 0
      %1502 = vmatpush1.bf16.msra.mxu0 %v1483
      %1503 = vmatprep.subr.bf16.mxu0 0
      %1504 = vmatpush1.bf16.msra.mxu0 %v1482
      %1505 = vmatprep.subr.bf16.mxu0 0
      %1506 = vmatpush1.bf16.msra.mxu0 %v1481
      %1507 = vmatprep.subr.bf16.mxu0 0
      %1508 = vmatpush1.bf16.msra.mxu0 %v1480
      %1509 = vmatprep.subr.bf16.mxu0 0
      %1510 = vmatpush1.bf16.msra.mxu0 %v1479
      %1511 = vmatprep.subr.bf16.mxu0 0
      %1512 = vmatpush2.bf16.msra.mxu0 0
      %1513 = vmatprep.subr.bf16.mxu0 0
      %1514 = vmatpush2.bf16.msra.mxu0 0
      %1515 = vmatprep.subr.bf16.mxu0 0
      %1516 = vmatpush2.bf16.msra.mxu0 0
      %1517 = vmatprep.subr.bf16.mxu0 0
      %1518 = vmatpush2.bf16.msra.mxu0 0
      %1519 = vmatprep.subr.bf16.mxu0 0
      %1520 = vmatpush2.bf16.msra.mxu0 0
      %1521 = vmatprep.subr.bf16.mxu0 0
      %1522 = vmatpush2.bf16.msra.mxu0 0
      %1523 = vmatprep.subr.bf16.mxu0 0
      %1524 = vmatpush2.bf16.msra.mxu0 0
      %1525 = vmatprep.subr.bf16.mxu0 0
      %1526 = vmatpush2.bf16.msra.mxu0 0
      %1527 = vmatprep.mubr.bf16.mxu0 0
      %1528 = vmatmul.mubr.bf16.gmra.mxu0 %v1426
      %v1529 = vpop.f32.mrf.mxu0
      %v1530 = vadd.f32 0.0, %v1529
      %v1531 = vpop.f32.mrf.mxu0
      %v1532 = vpop.f32.mrf.mxu0
      %v1533 = vadd.f32 0.0, %v1532
      %v1534 = vpop.f32.mrf.mxu0
      %1535 = vmatprep.mubr.bf16.mxu0 0
      %1536 = vmatmul.mubr.bf16.gmra.mxu0 %v1427
      %v1537 = vpop.f32.mrf.mxu0
      %v1538 = vadd.f32 0.0, %v1537
      %v1539 = vpop.f32.mrf.mxu0
      %v1540 = vpop.f32.mrf.mxu0
      %v1541 = vadd.f32 0.0, %v1540
      %v1542 = vpop.f32.mrf.mxu0
      %1543 = vmatprep.mubr.bf16.mxu0 0
      %1544 = vmatmul.mubr.bf16.gmra.mxu0 %v1428
      %v1545 = vpop.f32.mrf.mxu0
      %v1546 = vadd.f32 0.0, %v1545
      %v1547 = vpop.f32.mrf.mxu0
      %v1548 = vpop.f32.mrf.mxu0
      %v1549 = vadd.f32 0.0, %v1548
      %v1550 = vpop.f32.mrf.mxu0
      %1551 = vmatprep.mubr.bf16.mxu0 0
      %1552 = vmatmul.mubr.bf16.gmra.mxu0 %v1429
      %v1553 = vpop.f32.mrf.mxu0
      %v1554 = vadd.f32 0.0, %v1553
      %v1555 = vpop.f32.mrf.mxu0
      %v1556 = vpop.f32.mrf.mxu0
      %v1557 = vadd.f32 0.0, %v1556
      %v1558 = vpop.f32.mrf.mxu0
      %1559 = vdwg.mxu0
      %v1560 = vadd.f32 %v1402, %v1530
      %v1561 = vadd.f32 %v1403, %v1533
      %v1562 = vadd.f32 %v1404, %v1538
      %v1563 = vadd.f32 %v1405, %v1541
      %v1564 = vadd.f32 %v1406, %v1546
      %v1565 = vadd.f32 %v1407, %v1549
      %v1566 = vadd.f32 %v1408, %v1554
      %v1567 = vadd.f32 %v1409, %v1557
      %s1568 = scalar_lea.vmem %s1252, 2 [#allocation2]
      %v1569 = vld [vmem:[%s1568] ss:$2 sm:$0xff]
      %s1570 = scalar_lea.vmem %s1252, 50 [#allocation2]
      %v1571 = vld [vmem:[%s1570] ss:$2 sm:$0xff]
      %s1572 = scalar_lea.vmem %s1252, 98 [#allocation2]
      %v1573 = vld [vmem:[%s1572] ss:$2 sm:$0xff]
      %s1574 = scalar_lea.vmem %s1252, 146 [#allocation2]
      %v1575 = vld [vmem:[%s1574] ss:$2 sm:$0xff]
      %s1576 = scalar_lea.vmem %s1252, 194 [#allocation2]
      %v1577 = vld [vmem:[%s1576] ss:$2 sm:$0xff]
      %s1578 = scalar_lea.vmem %s1252, 242 [#allocation2]
      %v1579 = vld [vmem:[%s1578] ss:$2 sm:$0xff]
      %s1580 = scalar_lea.vmem %s1252, 290 [#allocation2]
      %v1581 = vld [vmem:[%s1580] ss:$2 sm:$0xff]
      %s1582 = scalar_lea.vmem %s1252, 338 [#allocation2]
      %v1583 = vld [vmem:[%s1582] ss:$2 sm:$0xff]
      %v1584 = vpack.c.bf16 %v1571, %v1569
      %v1585 = vpack.c.bf16 %v1575, %v1573
      %v1586 = vpack.c.bf16 %v1579, %v1577
      %v1587 = vpack.c.bf16 %v1583, %v1581
      %s1588 = scalar_lea.vmem %s1, 512
      %v1589 = vld [vmem:[%s1588] sm:$0xf]
      %v1590 = vld [vmem:[%s1588 + $0x4] sm:$0xf]
      %v1591 = vld [vmem:[%s1588 + $0x8] sm:$0xf]
      %v1592 = vld [vmem:[%s1588 + $0xc] sm:$0xf]
      %v1593 = vld [vmem:[%s1588 + $0x10] sm:$0xf]
      %v1594 = vld [vmem:[%s1588 + $0x14] sm:$0xf]
      %v1595 = vld [vmem:[%s1588 + $0x18] sm:$0xf]
      %v1596 = vld [vmem:[%s1588 + $0x1c] sm:$0xf]
      %v1597 = vld [vmem:[%s1588 + $0x20] sm:$0xf]
      %v1598 = vld [vmem:[%s1588 + $0x24] sm:$0xf]
      %v1599 = vld [vmem:[%s1588 + $0x28] sm:$0xf]
      %v1600 = vld [vmem:[%s1588 + $0x2c] sm:$0xf]
      %v1601 = vld [vmem:[%s1588 + $0x30] sm:$0xf]
      %v1602 = vld [vmem:[%s1588 + $0x34] sm:$0xf]
      %v1603 = vld [vmem:[%s1588 + $0x38] sm:$0xf]
      %v1604 = vld [vmem:[%s1588 + $0x3c] sm:$0xf]
      %v1621 = vunpack.c.l.b16 %v1589
      %v1622 = vunpack.c.l.b16 %v1590
      %v1623 = vunpack.c.l.b16 %v1591
      %v1624 = vunpack.c.l.b16 %v1592
      %v1625 = vunpack.c.l.b16 %v1593
      %v1626 = vunpack.c.l.b16 %v1594
      %v1627 = vunpack.c.l.b16 %v1595
      %v1628 = vunpack.c.l.b16 %v1596
      %v1629 = vunpack.c.l.b16 %v1597
      %v1630 = vunpack.c.l.b16 %v1598
      %v1631 = vunpack.c.l.b16 %v1599
      %v1632 = vunpack.c.l.b16 %v1600
      %v1633 = vunpack.c.l.b16 %v1601
      %v1634 = vunpack.c.l.b16 %v1602
      %v1635 = vunpack.c.l.b16 %v1603
      %v1636 = vunpack.c.l.b16 %v1604
      %v1637 = vpack.c.b16 %v1622, %v1621
      %v1638 = vpack.c.b16 %v1624, %v1623
      %v1639 = vpack.c.b16 %v1626, %v1625
      %v1640 = vpack.c.b16 %v1628, %v1627
      %v1641 = vpack.c.b16 %v1630, %v1629
      %v1642 = vpack.c.b16 %v1632, %v1631
      %v1643 = vpack.c.b16 %v1634, %v1633
      %v1644 = vpack.c.b16 %v1636, %v1635
      %1653 = vmatprep.subr.bf16.mxu0 0
      %1654 = vmatpush1.bf16.msra.mxu0 %v1644
      %1655 = vmatprep.subr.bf16.mxu0 0
      %1656 = vmatpush1.bf16.msra.mxu0 %v1643
      %1657 = vmatprep.subr.bf16.mxu0 0
      %1658 = vmatpush1.bf16.msra.mxu0 %v1642
      %1659 = vmatprep.subr.bf16.mxu0 0
      %1660 = vmatpush1.bf16.msra.mxu0 %v1641
      %1661 = vmatprep.subr.bf16.mxu0 0
      %1662 = vmatpush1.bf16.msra.mxu0 %v1640
      %1663 = vmatprep.subr.bf16.mxu0 0
      %1664 = vmatpush1.bf16.msra.mxu0 %v1639
      %1665 = vmatprep.subr.bf16.mxu0 0
      %1666 = vmatpush1.bf16.msra.mxu0 %v1638
      %1667 = vmatprep.subr.bf16.mxu0 0
      %1668 = vmatpush1.bf16.msra.mxu0 %v1637
      %1669 = vmatprep.subr.bf16.mxu0 0
      %1670 = vmatpush2.bf16.msra.mxu0 0
      %1671 = vmatprep.subr.bf16.mxu0 0
      %1672 = vmatpush2.bf16.msra.mxu0 0
      %1673 = vmatprep.subr.bf16.mxu0 0
      %1674 = vmatpush2.bf16.msra.mxu0 0
      %1675 = vmatprep.subr.bf16.mxu0 0
      %1676 = vmatpush2.bf16.msra.mxu0 0
      %1677 = vmatprep.subr.bf16.mxu0 0
      %1678 = vmatpush2.bf16.msra.mxu0 0
      %1679 = vmatprep.subr.bf16.mxu0 0
      %1680 = vmatpush2.bf16.msra.mxu0 0
      %1681 = vmatprep.subr.bf16.mxu0 0
      %1682 = vmatpush2.bf16.msra.mxu0 0
      %1683 = vmatprep.subr.bf16.mxu0 0
      %1684 = vmatpush2.bf16.msra.mxu0 0
      %1685 = vmatprep.mubr.bf16.mxu0 0
      %1686 = vmatmul.mubr.bf16.gmra.mxu0 %v1584
      %v1687 = vpop.f32.mrf.mxu0
      %v1688 = vadd.f32 0.0, %v1687
      %v1689 = vpop.f32.mrf.mxu0
      %v1690 = vpop.f32.mrf.mxu0
      %v1691 = vadd.f32 0.0, %v1690
      %v1692 = vpop.f32.mrf.mxu0
      %1693 = vmatprep.mubr.bf16.mxu0 0
      %1694 = vmatmul.mubr.bf16.gmra.mxu0 %v1585
      %v1695 = vpop.f32.mrf.mxu0
      %v1696 = vadd.f32 0.0, %v1695
      %v1697 = vpop.f32.mrf.mxu0
      %v1698 = vpop.f32.mrf.mxu0
      %v1699 = vadd.f32 0.0, %v1698
      %v1700 = vpop.f32.mrf.mxu0
      %1701 = vmatprep.mubr.bf16.mxu0 0
      %1702 = vmatmul.mubr.bf16.gmra.mxu0 %v1586
      %v1703 = vpop.f32.mrf.mxu0
      %v1704 = vadd.f32 0.0, %v1703
      %v1705 = vpop.f32.mrf.mxu0
      %v1706 = vpop.f32.mrf.mxu0
      %v1707 = vadd.f32 0.0, %v1706
      %v1708 = vpop.f32.mrf.mxu0
      %1709 = vmatprep.mubr.bf16.mxu0 0
      %1710 = vmatmul.mubr.bf16.gmra.mxu0 %v1587
      %v1711 = vpop.f32.mrf.mxu0
      %v1712 = vadd.f32 0.0, %v1711
      %v1713 = vpop.f32.mrf.mxu0
      %v1714 = vpop.f32.mrf.mxu0
      %v1715 = vadd.f32 0.0, %v1714
      %v1716 = vpop.f32.mrf.mxu0
      %1717 = vdwg.mxu0
      %v1718 = vadd.f32 %v1560, %v1688
      %v1719 = vadd.f32 %v1561, %v1691
      %v1720 = vadd.f32 %v1562, %v1696
      %v1721 = vadd.f32 %v1563, %v1699
      %v1722 = vadd.f32 %v1564, %v1704
      %v1723 = vadd.f32 %v1565, %v1707
      %v1724 = vadd.f32 %v1566, %v1712
      %v1725 = vadd.f32 %v1567, %v1715
      %v1726 = vld [vmem:[%s2] sm:$0x1]
      %v1728 = vlaneseq
      %v1729 = vshrl.u32 %v1728, 7
      %v1730 = vsub.s32 0, %v1729
      %v1731 = vrot.slane %v1726, %v1730
      %v1733 = vadd.f32 %v1718, %v1731
      %v1734 = vadd.f32 %v1719, %v1731
      %v1735 = vadd.f32 %v1720, %v1731
      %v1736 = vadd.f32 %v1721, %v1731
      %v1737 = vadd.f32 %v1722, %v1731
      %v1738 = vadd.f32 %v1723, %v1731
      %v1739 = vadd.f32 %v1724, %v1731
      %v1740 = vadd.f32 %v1725, %v1731
      %v1741 = vmax.f32 %v1733, 0.0
      %v1742 = vmax.f32 %v1734, 0.0
      %v1743 = vmax.f32 %v1735, 0.0
      %v1744 = vmax.f32 %v1736, 0.0
      %v1745 = vmax.f32 %v1737, 0.0
      %v1746 = vmax.f32 %v1738, 0.0
      %v1747 = vmax.f32 %v1739, 0.0
      %v1748 = vmax.f32 %v1740, 0.0
      %v1749 = vpack.c.bf16 %v1741, %v1741
      %v1750 = vpack.c.bf16 %v1742, %v1742
      %v1751 = vpack.c.bf16 %v1743, %v1743
      %v1752 = vpack.c.bf16 %v1744, %v1744
      %v1753 = vpack.c.bf16 %v1745, %v1745
      %v1754 = vpack.c.bf16 %v1746, %v1746
      %v1755 = vpack.c.bf16 %v1747, %v1747
      %v1756 = vpack.c.bf16 %v1748, %v1748
      %1757 = vst [vmem:[%s170] sm:$0xf] %v1749
      %1758 = vst [vmem:[%s170 + $0x4] sm:$0xf] %v1750
      %1759 = vst [vmem:[%s170 + $0x8] sm:$0xf] %v1751
      %1760 = vst [vmem:[%s170 + $0xc] sm:$0xf] %v1752
      %1761 = vst [vmem:[%s170 + $0x10] sm:$0xf] %v1753
      %1762 = vst [vmem:[%s170 + $0x14] sm:$0xf] %v1754
      %1763 = vst [vmem:[%s170 + $0x18] sm:$0xf] %v1755
      %1764 = vst [vmem:[%s170 + $0x1c] sm:$0xf] %v1756
      %p1765 = scmp.lt.s32.totalorder %s14, 1
      %s1766 = scalar_select %p1765, %s14, 1
      %s1767 = smul.addr %s1766, 8
      %s1768 = smul.addr %s1767, 4
      %s1769 = scalar_lea.vmem %s3, %s1768
      // Predicated region
      $region33: #{residual_block.5} parent=31 // pred_check
        %p1770 = pneg %p100
      $region34: #{residual_block.5} parent=31 // pred_check_branch
        %1772 = sbr.rel (%p1770) target = $region36
      $region35: #{residual_block.5} parent=31 // pred_region
        _
      $region36: #{residual_block.5} parent=31 // pred_fallthru
        _
    $region32: #{residual_block.5} parent=5 // pred_fallthru
      _
    %p1773 = scmp.le.s32.totalorder 2, %s9
    // Predicated region
    $region37: #{residual_block.5} parent=5 // pred_check
      %p1774 = pneg %p1773
    $region38: #{residual_block.5} parent=5 // pred_check_branch
      %1776 = sbr.rel (%p1774) target = $region40
    $region39: #{residual_block.5} parent=5 // pred_region
      %s1777 = ssub.s32 %s9, 2
      // Predicated region
      $region41: #{residual_block.5} parent=39 // pred_check
        %p1778 = pneg %p106
      $region42: #{residual_block.5} parent=39 // pred_check_branch
        %1780 = sbr.rel (%p1778) target = $region44
      $region43: #{residual_block.5} parent=39 // pred_region
        %p1781 = scmp.lt.s32.totalorder %s15, 1
        %s1782 = scalar_select %p1781, %s15, 1
        %s1783 = smul.addr %s1782, 8
        %s1784 = smul.addr %s1783, 4
        %s1785 = scalar_lea.vmem %s3, %s1784
      $region44: #{residual_block.5} parent=39 // pred_fallthru
        _
    $region40: #{residual_block.5} parent=5 // pred_fallthru
      _
  $region6: #{residual_block.5} parent=0 // loop_footer
    %s13 = sadd.s32 1, %s9
  $region7: #{residual_block.5} parent=0 // loop_footer_branch
    %8 = sbr.rel target = $region3
  $region8: #{residual_block.5} parent=0 // loop_exit
    _

</llo_original>
